<compile_context>
chip_gen: v7x
topology: tpu7x:2x2x1
jax: 0.10.0
libtpu: 0.0.40
codegen_flags: <defaults>
</compile_context>

<pallas_src>
import jax
import jax.numpy as jnp
import numpy as np
from jax.experimental import pallas as pl
from jax.experimental.pallas import tpu as pltpu

# Model hyper-parameters.  input_dim=14 and seq_len=30 are forced by the module:
# nn.Linear(42, 64) requires 14 channels * (1+1+1) pooled steps = 42 flat features.
C_IN = 14
SEQ = 30
HIDDEN = 32
BATCH = 2

T1 = 15          # length after conv1 (k=3, s=2, p=1, d=1)
T1P = T1 + 2     # conv2 sees padding=1 on each side

# per-encoder second-conv hyper-parameters: (kernel_size, dilation)
ENC_CONV2 = ((3, 4), (5, 2), (7, 1))

# rows of the packed (128, B) output slab (8-aligned starts for clean stores)
ROW_F = (0, 16, 32)   # pooled encoder features, C_IN rows each
ROW_HINT = 48         # hint, 64 rows
ROW_PRED = 112        # prediction, 1 row


def _leaky(v):
    return jnp.where(v >= 0, v, 0.01 * v)


def _make_kernel(batch):
    B = batch

    def kernel(im1_ref,
               w11, b11, w12, b12,
               w21, b21, w22, b22,
               w31, b31, w32, b32,
               wa, ba, wr1, br1, wr2, br2,
               out_ref):
        im1 = im1_ref[...]                                    # (42, B*T1)

        def encoder(w1f, b1c, w2t, b2c, k, d):
            # conv1: ONE im2col matmul for the whole batch + bias + LeakyReLU.
            h = _leaky(jnp.dot(w1f[...], im1,
                               preferred_element_type=jnp.float32)
                       + b1c[...])                            # (14, B*T1)

            # zero-pad each sample's time axis by 1 on both sides (registers only).
            z = jnp.zeros((C_IN, 1), jnp.float32)
            pieces = []
            for b in range(B):
                pieces += [z, h[:, b * T1:(b + 1) * T1], z]
            hp = jnp.concatenate(pieces, axis=1)              # (14, B*T1P)

            # conv2 at full stride-1 resolution: one small dot per tap, batched
            # over the batch along lanes.
            t_full = T1P - d * (k - 1)
            acc = None
            for j in range(k):
                sl = jnp.concatenate(
                    [hp[:, b * T1P + j * d: b * T1P + j * d + t_full]
                     for b in range(B)],
                    axis=1)                                   # (14, B*t_full)
                part = jnp.dot(w2t[j], sl, preferred_element_type=jnp.float32)
                acc = part if acc is None else acc + part

            # stride-2 + MaxPool(all) fused into a masked lane-max per sample;
            # bias-add and LeakyReLU are monotone, so applying them after the
            # max is exact.
            col = jax.lax.broadcasted_iota(jnp.int32, acc.shape, 1)
            pooled = []
            for b in range(B):
                tau = col - b * t_full
                valid = (tau >= 0) & (tau < t_full) & (tau % 2 == 0)
                pooled.append(jnp.max(jnp.where(valid, acc, -jnp.inf),
                                      axis=1, keepdims=True))  # (14, 1)
            return _leaky(jnp.concatenate(pooled, axis=1) + b2c[...])   # (14, B)

        f1 = encoder(w11, b11, w12, b12, *ENC_CONV2[0])
        f2 = encoder(w21, b21, w22, b22, *ENC_CONV2[1])
        f3 = encoder(w31, b31, w32, b32, *ENC_CONV2[2])

        # adapter Linear(42, 64), decomposed per encoder column block -> (64, B).
        hint = (jnp.dot(wa[0], f1, preferred_element_type=jnp.float32)
                + jnp.dot(wa[1], f2, preferred_element_type=jnp.float32)
                + jnp.dot(wa[2], f3, preferred_element_type=jnp.float32)
                + ba[...])

        # regressor: Linear(64, hidden) + LeakyReLU + Dropout + Linear(hidden, 1)
        # TODO(synk): nn.Dropout is identity at inference time; not applied here.
        hh = _leaky(jnp.dot(wr1[...], hint,
                            preferred_element_type=jnp.float32) + br1[...])   # (32, B)
        pred = jnp.dot(wr2[...], hh,
                       preferred_element_type=jnp.float32) + br2[...]         # (1, B)

        # pack everything into one output slab (single output DMA).
        out_ref[ROW_F[0]:ROW_F[0] + C_IN, :] = f1
        out_ref[ROW_F[1]:ROW_F[1] + C_IN, :] = f2
        out_ref[ROW_F[2]:ROW_F[2] + C_IN, :] = f3
        out_ref[ROW_HINT:ROW_HINT + 64, :] = hint
        out_ref[ROW_PRED:ROW_PRED + 1, :] = pred

    return kernel


PARAM_DEFS = [
    ('w11', (C_IN, C_IN, 3)), ('b11', (C_IN,)),
    ('w12', (C_IN, C_IN, 3)), ('b12', (C_IN,)),
    ('w21', (C_IN, C_IN, 3)), ('b21', (C_IN,)),
    ('w22', (C_IN, C_IN, 5)), ('b22', (C_IN,)),
    ('w31', (C_IN, C_IN, 3)), ('b31', (C_IN,)),
    ('w32', (C_IN, C_IN, 7)), ('b32', (C_IN,)),
    ('wa', (64, 42)), ('ba', (64,)),
    ('w1', (HIDDEN, 64)), ('b1', (HIDDEN,)),
    ('w2', (1, HIDDEN)), ('b2', (1,)),
]


def make_params(key):
    keys = jax.random.split(key, len(PARAM_DEFS))
    params = {}
    for (name, shape), k in zip(PARAM_DEFS, keys):
        fan_in = int(np.prod(shape[1:])) if len(shape) > 1 else shape[0]
        scale = 1.0 / np.sqrt(max(fan_in, 1))
        params[name] = (scale * jax.random.normal(k, shape, jnp.float32)).astype(jnp.float32)
    return params


def forward_pallas(x, p):
    B, c, s = x.shape
    assert c == C_IN and s == SEQ
    x_pad = jnp.pad(x, ((0, 0), (0, 0), (1, 1)))              # (B, 14, 32)

    # conv1 im2col with the stride-2 fold done in the wrapper (layout plumbing):
    # im1[ci*3 + j, b*T1 + t] = x_pad[b, ci, 2*t + j]
    taps = jnp.stack([x_pad[:, :, j:j + 2 * T1:2] for j in range(3)], axis=2)  # (B,14,3,T1)
    im1 = jnp.transpose(taps.reshape(B, C_IN * 3, T1), (1, 0, 2)).reshape(C_IN * 3, B * T1)

    flat1 = lambda w: w.reshape(C_IN, C_IN * 3)               # conv1 weight -> (14, 42)
    tap2 = lambda w: jnp.transpose(w, (2, 0, 1))              # conv2 weight -> (K, 14, 14)
    col = lambda b: b[:, None]                                # (N,) -> (N, 1)
    wa_stack = jnp.transpose(p['wa'].reshape(64, C_IN, 3), (2, 0, 1))   # (3, 64, 14)

    inputs = (
        im1,
        flat1(p['w11']), col(p['b11']), tap2(p['w12']), col(p['b12']),
        flat1(p['w21']), col(p['b21']), tap2(p['w22']), col(p['b22']),
        flat1(p['w31']), col(p['b31']), tap2(p['w32']), col(p['b32']),
        wa_stack, col(p['ba']),
        p['w1'], col(p['b1']),
        p['w2'], col(p['b2']),
    )

    in_specs = [pl.BlockSpec(a.shape, (lambda *_, _n=a.ndim: (0,) * _n)) for a in inputs]
    out_specs = pl.BlockSpec((128, B), lambda i: (0, 0))

    out = pl.pallas_call(
        _make_kernel(B),
        grid=(1,),                                   # whole batch in ONE grid step
        in_specs=in_specs,
        out_specs=out_specs,
        out_shape=jax.ShapeDtypeStruct((128, B), jnp.float32),
        compiler_params=pltpu.CompilerParams(dimension_semantics=("arbitrary",)),
    )(*inputs)

    # unpack / reorient the packed slab on the XLA side (pure layout work).
    f_cols = jnp.stack([out[r:r + C_IN] for r in ROW_F], axis=0)        # (3, 14, B)
    features = jnp.transpose(f_cols, (2, 1, 0)).reshape(B, C_IN * 3)    # torch flatten order
    hint = out[ROW_HINT:ROW_HINT + 64].T                                # (B, 64)
    predictions = out[ROW_PRED]                                         # (B,) == .squeeze()
    return predictions, features, hint


def forward_ref(x, p):
    """Pure-JAX reference of the PyTorch forward (inference mode)."""
    def conv1d(h, w, b, stride, padding, dilation):
        out = jax.lax.conv_general_dilated(
            h, w, window_strides=(stride,), padding=[(padding, padding)],
            rhs_dilation=(dilation,), dimension_numbers=('NCH', 'OIH', 'NCH'))
        return out + b[None, :, None]

    def encoder(h, wA, bA, wB, bB, d2):
        h = _leaky(conv1d(h, wA, bA, 2, 1, 1))
        h = _leaky(conv1d(h, wB, bB, 2, 1, d2))
        return jnp.max(h, axis=2, keepdims=True)   # MaxPool covers whole length

    f1 = encoder(x, p['w11'], p['b11'], p['w12'], p['b12'], 4)
    f2 = encoder(x, p['w21'], p['b21'], p['w22'], p['b22'], 2)
    f3 = encoder(x, p['w31'], p['b31'], p['w32'], p['b32'], 1)
    feats = jnp.concatenate([f1, f2, f3], axis=2).reshape(x.shape[0], -1)
    hint = feats @ p['wa'].T + p['ba']
    h = _leaky(hint @ p['w1'].T + p['b1'])
    pred = h @ p['w2'].T + p['b2']
    return jnp.squeeze(pred), feats, hint


if __name__ == "__main__":
    key = jax.random.PRNGKey(0)
    k_x, k_p = jax.random.split(key)
    params = make_params(k_p)
    x = jax.random.normal(k_x, (BATCH, C_IN, SEQ), jnp.float32)

    pred, feats, hint = jax.block_until_ready(jax.jit(forward_pallas)(x, params))

    pred_r, feats_r, hint_r = forward_ref(x, params)
    np.testing.assert_allclose(np.asarray(feats), np.asarray(feats_r), rtol=5e-2, atol=5e-2)
    np.testing.assert_allclose(np.asarray(hint), np.asarray(hint_r), rtol=5e-2, atol=5e-2)
    np.testing.assert_allclose(np.asarray(pred), np.asarray(pred_r), rtol=5e-2, atol=5e-2)

    print("KERNEL_OK")
</pallas_src>

<mosaic_0001>
module attributes {stable_mosaic.version = 11 : i64} {
  func.func @kernel(%arg0: i32, %arg1: memref<42x30xf32, #tpu.memory_space<vmem>>, %arg2: memref<14x42xf32, #tpu.memory_space<vmem>>, %arg3: memref<14x1xf32, #tpu.memory_space<vmem>>, %arg4: memref<3x14x14xf32, #tpu.memory_space<vmem>>, %arg5: memref<14x1xf32, #tpu.memory_space<vmem>>, %arg6: memref<14x42xf32, #tpu.memory_space<vmem>>, %arg7: memref<14x1xf32, #tpu.memory_space<vmem>>, %arg8: memref<5x14x14xf32, #tpu.memory_space<vmem>>, %arg9: memref<14x1xf32, #tpu.memory_space<vmem>>, %arg10: memref<14x42xf32, #tpu.memory_space<vmem>>, %arg11: memref<14x1xf32, #tpu.memory_space<vmem>>, %arg12: memref<7x14x14xf32, #tpu.memory_space<vmem>>, %arg13: memref<14x1xf32, #tpu.memory_space<vmem>>, %arg14: memref<3x64x14xf32, #tpu.memory_space<vmem>>, %arg15: memref<64x1xf32, #tpu.memory_space<vmem>>, %arg16: memref<32x64xf32, #tpu.memory_space<vmem>>, %arg17: memref<32x1xf32, #tpu.memory_space<vmem>>, %arg18: memref<1x32xf32, #tpu.memory_space<vmem>>, %arg19: memref<1x1xf32, #tpu.memory_space<vmem>>, %arg20: memref<128x2xf32, #tpu.memory_space<vmem>>) attributes {dimension_semantics = [#tpu.dimension_semantics<arbitrary>], iteration_bounds = array<i64: 1>, scalar_prefetch = 0 : i64, scratch_operands = 0 : i64, tpu.core_type = #tpu.core_type<tc>, window_params = [{pipeline_mode = #tpu.pipeline_mode<synchronous>, transform_indices = @transform_0, window_bounds = array<i64: 42, 30>}, {pipeline_mode = #tpu.pipeline_mode<synchronous>, transform_indices = @transform_1, window_bounds = array<i64: 14, 42>}, {pipeline_mode = #tpu.pipeline_mode<synchronous>, transform_indices = @transform_2, window_bounds = array<i64: 14, 1>}, {pipeline_mode = #tpu.pipeline_mode<synchronous>, transform_indices = @transform_3, window_bounds = array<i64: 3, 14, 14>}, {pipeline_mode = #tpu.pipeline_mode<synchronous>, transform_indices = @transform_4, window_bounds = array<i64: 14, 1>}, {pipeline_mode = #tpu.pipeline_mode<synchronous>, transform_indices = @transform_5, window_bounds = array<i64: 14, 42>}, {pipeline_mode = #tpu.pipeline_mode<synchronous>, transform_indices = @transform_6, window_bounds = array<i64: 14, 1>}, {pipeline_mode = #tpu.pipeline_mode<synchronous>, transform_indices = @transform_7, window_bounds = array<i64: 5, 14, 14>}, {pipeline_mode = #tpu.pipeline_mode<synchronous>, transform_indices = @transform_8, window_bounds = array<i64: 14, 1>}, {pipeline_mode = #tpu.pipeline_mode<synchronous>, transform_indices = @transform_9, window_bounds = array<i64: 14, 42>}, {pipeline_mode = #tpu.pipeline_mode<synchronous>, transform_indices = @transform_10, window_bounds = array<i64: 14, 1>}, {pipeline_mode = #tpu.pipeline_mode<synchronous>, transform_indices = @transform_11, window_bounds = array<i64: 7, 14, 14>}, {pipeline_mode = #tpu.pipeline_mode<synchronous>, transform_indices = @transform_12, window_bounds = array<i64: 14, 1>}, {pipeline_mode = #tpu.pipeline_mode<synchronous>, transform_indices = @transform_13, window_bounds = array<i64: 3, 64, 14>}, {pipeline_mode = #tpu.pipeline_mode<synchronous>, transform_indices = @transform_14, window_bounds = array<i64: 64, 1>}, {pipeline_mode = #tpu.pipeline_mode<synchronous>, transform_indices = @transform_15, window_bounds = array<i64: 32, 64>}, {pipeline_mode = #tpu.pipeline_mode<synchronous>, transform_indices = @transform_16, window_bounds = array<i64: 32, 1>}, {pipeline_mode = #tpu.pipeline_mode<synchronous>, transform_indices = @transform_17, window_bounds = array<i64: 1, 32>}, {pipeline_mode = #tpu.pipeline_mode<synchronous>, transform_indices = @transform_18, window_bounds = array<i64: 1, 1>}, {pipeline_mode = #tpu.pipeline_mode<synchronous>, transform_indices = @transform_19, window_bounds = array<i64: 128, 2>}]} {
    %c0 = arith.constant 0 : index
    %c0_0 = arith.constant 0 : index
    %0 = vector.load %arg1[%c0, %c0_0] : memref<42x30xf32, #tpu.memory_space<vmem>>, vector<42x30xf32>
    %c0_1 = arith.constant 0 : index
    %c0_2 = arith.constant 0 : index
    %1 = vector.load %arg2[%c0_1, %c0_2] : memref<14x42xf32, #tpu.memory_space<vmem>>, vector<14x42xf32>
    %cst = arith.constant dense<0.000000e+00> : vector<14x30xf32>
    %2 = tpu.matmul %1, %0, %cst {dimension_numbers = #tpu.dot_dimension_numbers<[1], [0], [0], [1], [0, 0, 1, 1], [], []>} : vector<14x42xf32>, vector<42x30xf32>, vector<14x30xf32> -> vector<14x30xf32>
    %c0_3 = arith.constant 0 : index
    %c0_4 = arith.constant 0 : index
    %3 = vector.load %arg3[%c0_3, %c0_4] : memref<14x1xf32, #tpu.memory_space<vmem>>, vector<14x1xf32>
    %4 = vector.broadcast %3 : vector<14x1xf32> to vector<14x30xf32>
    %5 = arith.addf %2, %4 : vector<14x30xf32>
    %cst_5 = arith.constant 0.000000e+00 : f32
    %6 = vector.broadcast %cst_5 : f32 to vector<14x30xf32>
    %7 = arith.cmpf oge, %5, %6 : vector<14x30xf32>
    %cst_6 = arith.constant 0.00999999977 : f32
    %8 = vector.broadcast %cst_6 : f32 to vector<14x30xf32>
    %9 = arith.mulf %8, %5 : vector<14x30xf32>
    %10 = arith.select %7, %5, %9 : vector<14x30xi1>, vector<14x30xf32>
    %cst_7 = arith.constant 0.000000e+00 : f32
    %11 = vector.broadcast %cst_7 : f32 to vector<14x1xf32>
    %12 = vector.extract_strided_slice %10 {offsets = [0, 0], sizes = [14, 15], strides = [1, 1]} : vector<14x30xf32> to vector<14x15xf32>
    %13 = vector.extract_strided_slice %10 {offsets = [0, 15], sizes = [14, 15], strides = [1, 1]} : vector<14x30xf32> to vector<14x15xf32>
    %14 = tpu.concatenate %11, %12, %11, %11, %13, %11 in 1 : vector<14x1xf32>, vector<14x15xf32>, vector<14x1xf32>, vector<14x1xf32>, vector<14x15xf32>, vector<14x1xf32> -> vector<14x34xf32>
    %15 = vector.extract_strided_slice %14 {offsets = [0, 0], sizes = [14, 9], strides = [1, 1]} : vector<14x34xf32> to vector<14x9xf32>
    %16 = vector.extract_strided_slice %14 {offsets = [0, 17], sizes = [14, 9], strides = [1, 1]} : vector<14x34xf32> to vector<14x9xf32>
    %17 = tpu.concatenate %15, %16 in 1 : vector<14x9xf32>, vector<14x9xf32> -> vector<14x18xf32>
    %c0_8 = arith.constant 0 : index
    %c0_9 = arith.constant 0 : index
    %c0_10 = arith.constant 0 : index
    %18 = vector.load %arg4[%c0_8, %c0_9, %c0_10] : memref<3x14x14xf32, #tpu.memory_space<vmem>>, vector<1x14x14xf32>
    %19 = vector.shape_cast %18 : vector<1x14x14xf32> to vector<14x14xf32>
    %cst_11 = arith.constant dense<0.000000e+00> : vector<14x18xf32>
    %20 = tpu.matmul %19, %17, %cst_11 {dimension_numbers = #tpu.dot_dimension_numbers<[1], [0], [0], [1], [0, 0, 1, 1], [], []>} : vector<14x14xf32>, vector<14x18xf32>, vector<14x18xf32> -> vector<14x18xf32>
    %21 = vector.extract_strided_slice %14 {offsets = [0, 4], sizes = [14, 9], strides = [1, 1]} : vector<14x34xf32> to vector<14x9xf32>
    %22 = vector.extract_strided_slice %14 {offsets = [0, 21], sizes = [14, 9], strides = [1, 1]} : vector<14x34xf32> to vector<14x9xf32>
    %23 = tpu.concatenate %21, %22 in 1 : vector<14x9xf32>, vector<14x9xf32> -> vector<14x18xf32>
    %c1 = arith.constant 1 : index
    %c0_12 = arith.constant 0 : index
    %c0_13 = arith.constant 0 : index
    %24 = vector.load %arg4[%c1, %c0_12, %c0_13] : memref<3x14x14xf32, #tpu.memory_space<vmem>>, vector<1x14x14xf32>
    %25 = vector.shape_cast %24 : vector<1x14x14xf32> to vector<14x14xf32>
    %cst_14 = arith.constant dense<0.000000e+00> : vector<14x18xf32>
    %26 = tpu.matmul %25, %23, %cst_14 {dimension_numbers = #tpu.dot_dimension_numbers<[1], [0], [0], [1], [0, 0, 1, 1], [], []>} : vector<14x14xf32>, vector<14x18xf32>, vector<14x18xf32> -> vector<14x18xf32>
    %27 = arith.addf %20, %26 : vector<14x18xf32>
    %28 = vector.extract_strided_slice %14 {offsets = [0, 8], sizes = [14, 9], strides = [1, 1]} : vector<14x34xf32> to vector<14x9xf32>
    %29 = vector.extract_strided_slice %14 {offsets = [0, 25], sizes = [14, 9], strides = [1, 1]} : vector<14x34xf32> to vector<14x9xf32>
    %30 = tpu.concatenate %28, %29 in 1 : vector<14x9xf32>, vector<14x9xf32> -> vector<14x18xf32>
    %c2 = arith.constant 2 : index
    %c0_15 = arith.constant 0 : index
    %c0_16 = arith.constant 0 : index
    %31 = vector.load %arg4[%c2, %c0_15, %c0_16] : memref<3x14x14xf32, #tpu.memory_space<vmem>>, vector<1x14x14xf32>
    %32 = vector.shape_cast %31 : vector<1x14x14xf32> to vector<14x14xf32>
    %cst_17 = arith.constant dense<0.000000e+00> : vector<14x18xf32>
    %33 = tpu.matmul %32, %30, %cst_17 {dimension_numbers = #tpu.dot_dimension_numbers<[1], [0], [0], [1], [0, 0, 1, 1], [], []>} : vector<14x14xf32>, vector<14x18xf32>, vector<14x18xf32> -> vector<14x18xf32>
    %34 = arith.addf %27, %33 : vector<14x18xf32>
    %35 = tpu.iota {dimensions = array<i32: 1>} : vector<14x18xi32>
    %c0_i32 = arith.constant 0 : i32
    %36 = vector.broadcast %c0_i32 : i32 to vector<14x18xi32>
    %37 = arith.subi %35, %36 : vector<14x18xi32>
    %c0_i32_18 = arith.constant 0 : i32
    %38 = vector.broadcast %c0_i32_18 : i32 to vector<14x18xi32>
    %39 = arith.cmpi sge, %37, %38 : vector<14x18xi32>
    %c9_i32 = arith.constant 9 : i32
    %40 = vector.broadcast %c9_i32 : i32 to vector<14x18xi32>
    %41 = arith.cmpi slt, %37, %40 : vector<14x18xi32>
    %42 = arith.andi %39, %41 : vector<14x18xi1>
    %c2_i32 = arith.constant 2 : i32
    %c0_i32_19 = arith.constant 0 : i32
    %43 = arith.cmpi eq, %c2_i32, %c0_i32_19 : i32
    %c1_i32 = arith.constant 1 : i32
    %44 = arith.select %43, %c1_i32, %c2_i32 : i32
    %45 = vector.broadcast %44 : i32 to vector<14x18xi32>
    %46 = arith.remsi %37, %45 : vector<14x18xi32>
    %c0_i32_20 = arith.constant 0 : i32
    %47 = vector.broadcast %c0_i32_20 : i32 to vector<14x18xi32>
    %48 = arith.cmpi ne, %46, %47 : vector<14x18xi32>
    %c0_i32_21 = arith.constant 0 : i32
    %49 = vector.broadcast %c0_i32_21 : i32 to vector<14x18xi32>
    %50 = arith.cmpi slt, %46, %49 : vector<14x18xi32>
    %c0_i32_22 = arith.constant 0 : i32
    %51 = arith.cmpi slt, %44, %c0_i32_22 : i32
    %52 = vector.broadcast %51 : i1 to vector<14x18xi1>
    %53 = vector.broadcast %52 : vector<14x18xi1> to vector<14x18xi1>
    %54 = arith.xori %50, %53 : vector<14x18xi1>
    %55 = arith.andi %54, %48 : vector<14x18xi1>
    %56 = vector.broadcast %44 : i32 to vector<14x18xi32>
    %57 = arith.addi %46, %56 : vector<14x18xi32>
    %58 = arith.select %55, %57, %46 : vector<14x18xi1>, vector<14x18xi32>
    %c0_i32_23 = arith.constant 0 : i32
    %59 = vector.broadcast %c0_i32_23 : i32 to vector<14x18xi32>
    %60 = arith.cmpi eq, %58, %59 : vector<14x18xi32>
    %61 = arith.andi %42, %60 : vector<14x18xi1>
    %cst_24 = arith.constant 0xFF800000 : f32
    %62 = vector.broadcast %cst_24 : f32 to vector<14x18xf32>
    %63 = arith.select %61, %34, %62 : vector<14x18xi1>, vector<14x18xf32>
    %cst_25 = arith.constant dense<0xFF800000> : vector<14xf32>
    %64 = vector.multi_reduction <maximumf>, %63, %cst_25 [1] : vector<14x18xf32> to vector<14xf32>
    %65 = vector.shape_cast %64 : vector<14xf32> to vector<14x1xf32>
    %c9_i32_26 = arith.constant 9 : i32
    %66 = vector.broadcast %c9_i32_26 : i32 to vector<14x18xi32>
    %67 = arith.subi %35, %66 : vector<14x18xi32>
    %c0_i32_27 = arith.constant 0 : i32
    %68 = vector.broadcast %c0_i32_27 : i32 to vector<14x18xi32>
    %69 = arith.cmpi sge, %67, %68 : vector<14x18xi32>
    %c9_i32_28 = arith.constant 9 : i32
    %70 = vector.broadcast %c9_i32_28 : i32 to vector<14x18xi32>
    %71 = arith.cmpi slt, %67, %70 : vector<14x18xi32>
    %72 = arith.andi %69, %71 : vector<14x18xi1>
    %c2_i32_29 = arith.constant 2 : i32
    %c0_i32_30 = arith.constant 0 : i32
    %73 = arith.cmpi eq, %c2_i32_29, %c0_i32_30 : i32
    %c1_i32_31 = arith.constant 1 : i32
    %74 = arith.select %73, %c1_i32_31, %c2_i32_29 : i32
    %75 = vector.broadcast %74 : i32 to vector<14x18xi32>
    %76 = arith.remsi %67, %75 : vector<14x18xi32>
    %c0_i32_32 = arith.constant 0 : i32
    %77 = vector.broadcast %c0_i32_32 : i32 to vector<14x18xi32>
    %78 = arith.cmpi ne, %76, %77 : vector<14x18xi32>
    %c0_i32_33 = arith.constant 0 : i32
    %79 = vector.broadcast %c0_i32_33 : i32 to vector<14x18xi32>
    %80 = arith.cmpi slt, %76, %79 : vector<14x18xi32>
    %c0_i32_34 = arith.constant 0 : i32
    %81 = arith.cmpi slt, %74, %c0_i32_34 : i32
    %82 = vector.broadcast %81 : i1 to vector<14x18xi1>
    %83 = vector.broadcast %82 : vector<14x18xi1> to vector<14x18xi1>
    %84 = arith.xori %80, %83 : vector<14x18xi1>
    %85 = arith.andi %84, %78 : vector<14x18xi1>
    %86 = vector.broadcast %74 : i32 to vector<14x18xi32>
    %87 = arith.addi %76, %86 : vector<14x18xi32>
    %88 = arith.select %85, %87, %76 : vector<14x18xi1>, vector<14x18xi32>
    %c0_i32_35 = arith.constant 0 : i32
    %89 = vector.broadcast %c0_i32_35 : i32 to vector<14x18xi32>
    %90 = arith.cmpi eq, %88, %89 : vector<14x18xi32>
    %91 = arith.andi %72, %90 : vector<14x18xi1>
    %cst_36 = arith.constant 0xFF800000 : f32
    %92 = vector.broadcast %cst_36 : f32 to vector<14x18xf32>
    %93 = arith.select %91, %34, %92 : vector<14x18xi1>, vector<14x18xf32>
    %cst_37 = arith.constant dense<0xFF800000> : vector<14xf32>
    %94 = vector.multi_reduction <maximumf>, %93, %cst_37 [1] : vector<14x18xf32> to vector<14xf32>
    %95 = vector.shape_cast %94 : vector<14xf32> to vector<14x1xf32>
    %96 = tpu.concatenate %65, %95 in 1 : vector<14x1xf32>, vector<14x1xf32> -> vector<14x2xf32>
    %c0_38 = arith.constant 0 : index
    %c0_39 = arith.constant 0 : index
    %97 = vector.load %arg5[%c0_38, %c0_39] : memref<14x1xf32, #tpu.memory_space<vmem>>, vector<14x1xf32>
    %98 = vector.broadcast %97 : vector<14x1xf32> to vector<14x2xf32>
    %99 = arith.addf %96, %98 : vector<14x2xf32>
    %cst_40 = arith.constant 0.000000e+00 : f32
    %100 = vector.broadcast %cst_40 : f32 to vector<14x2xf32>
    %101 = arith.cmpf oge, %99, %100 : vector<14x2xf32>
    %cst_41 = arith.constant 0.00999999977 : f32
    %102 = vector.broadcast %cst_41 : f32 to vector<14x2xf32>
    %103 = arith.mulf %102, %99 : vector<14x2xf32>
    %104 = arith.select %101, %99, %103 : vector<14x2xi1>, vector<14x2xf32>
    %c0_42 = arith.constant 0 : index
    %c0_43 = arith.constant 0 : index
    %105 = vector.load %arg6[%c0_42, %c0_43] : memref<14x42xf32, #tpu.memory_space<vmem>>, vector<14x42xf32>
    %cst_44 = arith.constant dense<0.000000e+00> : vector<14x30xf32>
    %106 = tpu.matmul %105, %0, %cst_44 {dimension_numbers = #tpu.dot_dimension_numbers<[1], [0], [0], [1], [0, 0, 1, 1], [], []>} : vector<14x42xf32>, vector<42x30xf32>, vector<14x30xf32> -> vector<14x30xf32>
    %c0_45 = arith.constant 0 : index
    %c0_46 = arith.constant 0 : index
    %107 = vector.load %arg7[%c0_45, %c0_46] : memref<14x1xf32, #tpu.memory_space<vmem>>, vector<14x1xf32>
    %108 = vector.broadcast %107 : vector<14x1xf32> to vector<14x30xf32>
    %109 = arith.addf %106, %108 : vector<14x30xf32>
    %cst_47 = arith.constant 0.000000e+00 : f32
    %110 = vector.broadcast %cst_47 : f32 to vector<14x30xf32>
    %111 = arith.cmpf oge, %109, %110 : vector<14x30xf32>
    %cst_48 = arith.constant 0.00999999977 : f32
    %112 = vector.broadcast %cst_48 : f32 to vector<14x30xf32>
    %113 = arith.mulf %112, %109 : vector<14x30xf32>
    %114 = arith.select %111, %109, %113 : vector<14x30xi1>, vector<14x30xf32>
    %cst_49 = arith.constant 0.000000e+00 : f32
    %115 = vector.broadcast %cst_49 : f32 to vector<14x1xf32>
    %116 = vector.extract_strided_slice %114 {offsets = [0, 0], sizes = [14, 15], strides = [1, 1]} : vector<14x30xf32> to vector<14x15xf32>
    %117 = vector.extract_strided_slice %114 {offsets = [0, 15], sizes = [14, 15], strides = [1, 1]} : vector<14x30xf32> to vector<14x15xf32>
    %118 = tpu.concatenate %115, %116, %115, %115, %117, %115 in 1 : vector<14x1xf32>, vector<14x15xf32>, vector<14x1xf32>, vector<14x1xf32>, vector<14x15xf32>, vector<14x1xf32> -> vector<14x34xf32>
    %119 = vector.extract_strided_slice %118 {offsets = [0, 0], sizes = [14, 9], strides = [1, 1]} : vector<14x34xf32> to vector<14x9xf32>
    %120 = vector.extract_strided_slice %118 {offsets = [0, 17], sizes = [14, 9], strides = [1, 1]} : vector<14x34xf32> to vector<14x9xf32>
    %121 = tpu.concatenate %119, %120 in 1 : vector<14x9xf32>, vector<14x9xf32> -> vector<14x18xf32>
    %c0_50 = arith.constant 0 : index
    %c0_51 = arith.constant 0 : index
    %c0_52 = arith.constant 0 : index
    %122 = vector.load %arg8[%c0_50, %c0_51, %c0_52] : memref<5x14x14xf32, #tpu.memory_space<vmem>>, vector<1x14x14xf32>
    %123 = vector.shape_cast %122 : vector<1x14x14xf32> to vector<14x14xf32>
    %cst_53 = arith.constant dense<0.000000e+00> : vector<14x18xf32>
    %124 = tpu.matmul %123, %121, %cst_53 {dimension_numbers = #tpu.dot_dimension_numbers<[1], [0], [0], [1], [0, 0, 1, 1], [], []>} : vector<14x14xf32>, vector<14x18xf32>, vector<14x18xf32> -> vector<14x18xf32>
    %125 = vector.extract_strided_slice %118 {offsets = [0, 2], sizes = [14, 9], strides = [1, 1]} : vector<14x34xf32> to vector<14x9xf32>
    %126 = vector.extract_strided_slice %118 {offsets = [0, 19], sizes = [14, 9], strides = [1, 1]} : vector<14x34xf32> to vector<14x9xf32>
    %127 = tpu.concatenate %125, %126 in 1 : vector<14x9xf32>, vector<14x9xf32> -> vector<14x18xf32>
    %c1_54 = arith.constant 1 : index
    %c0_55 = arith.constant 0 : index
    %c0_56 = arith.constant 0 : index
    %128 = vector.load %arg8[%c1_54, %c0_55, %c0_56] : memref<5x14x14xf32, #tpu.memory_space<vmem>>, vector<1x14x14xf32>
    %129 = vector.shape_cast %128 : vector<1x14x14xf32> to vector<14x14xf32>
    %cst_57 = arith.constant dense<0.000000e+00> : vector<14x18xf32>
    %130 = tpu.matmul %129, %127, %cst_57 {dimension_numbers = #tpu.dot_dimension_numbers<[1], [0], [0], [1], [0, 0, 1, 1], [], []>} : vector<14x14xf32>, vector<14x18xf32>, vector<14x18xf32> -> vector<14x18xf32>
    %131 = arith.addf %124, %130 : vector<14x18xf32>
    %132 = vector.extract_strided_slice %118 {offsets = [0, 4], sizes = [14, 9], strides = [1, 1]} : vector<14x34xf32> to vector<14x9xf32>
    %133 = vector.extract_strided_slice %118 {offsets = [0, 21], sizes = [14, 9], strides = [1, 1]} : vector<14x34xf32> to vector<14x9xf32>
    %134 = tpu.concatenate %132, %133 in 1 : vector<14x9xf32>, vector<14x9xf32> -> vector<14x18xf32>
    %c2_58 = arith.constant 2 : index
    %c0_59 = arith.constant 0 : index
    %c0_60 = arith.constant 0 : index
    %135 = vector.load %arg8[%c2_58, %c0_59, %c0_60] : memref<5x14x14xf32, #tpu.memory_space<vmem>>, vector<1x14x14xf32>
    %136 = vector.shape_cast %135 : vector<1x14x14xf32> to vector<14x14xf32>
    %cst_61 = arith.constant dense<0.000000e+00> : vector<14x18xf32>
    %137 = tpu.matmul %136, %134, %cst_61 {dimension_numbers = #tpu.dot_dimension_numbers<[1], [0], [0], [1], [0, 0, 1, 1], [], []>} : vector<14x14xf32>, vector<14x18xf32>, vector<14x18xf32> -> vector<14x18xf32>
    %138 = arith.addf %131, %137 : vector<14x18xf32>
    %139 = vector.extract_strided_slice %118 {offsets = [0, 6], sizes = [14, 9], strides = [1, 1]} : vector<14x34xf32> to vector<14x9xf32>
    %140 = vector.extract_strided_slice %118 {offsets = [0, 23], sizes = [14, 9], strides = [1, 1]} : vector<14x34xf32> to vector<14x9xf32>
    %141 = tpu.concatenate %139, %140 in 1 : vector<14x9xf32>, vector<14x9xf32> -> vector<14x18xf32>
    %c3 = arith.constant 3 : index
    %c0_62 = arith.constant 0 : index
    %c0_63 = arith.constant 0 : index
    %142 = vector.load %arg8[%c3, %c0_62, %c0_63] : memref<5x14x14xf32, #tpu.memory_space<vmem>>, vector<1x14x14xf32>
    %143 = vector.shape_cast %142 : vector<1x14x14xf32> to vector<14x14xf32>
    %cst_64 = arith.constant dense<0.000000e+00> : vector<14x18xf32>
    %144 = tpu.matmul %143, %141, %cst_64 {dimension_numbers = #tpu.dot_dimension_numbers<[1], [0], [0], [1], [0, 0, 1, 1], [], []>} : vector<14x14xf32>, vector<14x18xf32>, vector<14x18xf32> -> vector<14x18xf32>
    %145 = arith.addf %138, %144 : vector<14x18xf32>
    %146 = vector.extract_strided_slice %118 {offsets = [0, 8], sizes = [14, 9], strides = [1, 1]} : vector<14x34xf32> to vector<14x9xf32>
    %147 = vector.extract_strided_slice %118 {offsets = [0, 25], sizes = [14, 9], strides = [1, 1]} : vector<14x34xf32> to vector<14x9xf32>
    %148 = tpu.concatenate %146, %147 in 1 : vector<14x9xf32>, vector<14x9xf32> -> vector<14x18xf32>
    %c4 = arith.constant 4 : index
    %c0_65 = arith.constant 0 : index
    %c0_66 = arith.constant 0 : index
    %149 = vector.load %arg8[%c4, %c0_65, %c0_66] : memref<5x14x14xf32, #tpu.memory_space<vmem>>, vector<1x14x14xf32>
    %150 = vector.shape_cast %149 : vector<1x14x14xf32> to vector<14x14xf32>
    %cst_67 = arith.constant dense<0.000000e+00> : vector<14x18xf32>
    %151 = tpu.matmul %150, %148, %cst_67 {dimension_numbers = #tpu.dot_dimension_numbers<[1], [0], [0], [1], [0, 0, 1, 1], [], []>} : vector<14x14xf32>, vector<14x18xf32>, vector<14x18xf32> -> vector<14x18xf32>
    %152 = arith.addf %145, %151 : vector<14x18xf32>
    %153 = tpu.iota {dimensions = array<i32: 1>} : vector<14x18xi32>
    %c0_i32_68 = arith.constant 0 : i32
    %154 = vector.broadcast %c0_i32_68 : i32 to vector<14x18xi32>
    %155 = arith.subi %153, %154 : vector<14x18xi32>
    %c0_i32_69 = arith.constant 0 : i32
    %156 = vector.broadcast %c0_i32_69 : i32 to vector<14x18xi32>
    %157 = arith.cmpi sge, %155, %156 : vector<14x18xi32>
    %c9_i32_70 = arith.constant 9 : i32
    %158 = vector.broadcast %c9_i32_70 : i32 to vector<14x18xi32>
    %159 = arith.cmpi slt, %155, %158 : vector<14x18xi32>
    %160 = arith.andi %157, %159 : vector<14x18xi1>
    %c2_i32_71 = arith.constant 2 : i32
    %c0_i32_72 = arith.constant 0 : i32
    %161 = arith.cmpi eq, %c2_i32_71, %c0_i32_72 : i32
    %c1_i32_73 = arith.constant 1 : i32
    %162 = arith.select %161, %c1_i32_73, %c2_i32_71 : i32
    %163 = vector.broadcast %162 : i32 to vector<14x18xi32>
    %164 = arith.remsi %155, %163 : vector<14x18xi32>
    %c0_i32_74 = arith.constant 0 : i32
    %165 = vector.broadcast %c0_i32_74 : i32 to vector<14x18xi32>
    %166 = arith.cmpi ne, %164, %165 : vector<14x18xi32>
    %c0_i32_75 = arith.constant 0 : i32
    %167 = vector.broadcast %c0_i32_75 : i32 to vector<14x18xi32>
    %168 = arith.cmpi slt, %164, %167 : vector<14x18xi32>
    %c0_i32_76 = arith.constant 0 : i32
    %169 = arith.cmpi slt, %162, %c0_i32_76 : i32
    %170 = vector.broadcast %169 : i1 to vector<14x18xi1>
    %171 = vector.broadcast %170 : vector<14x18xi1> to vector<14x18xi1>
    %172 = arith.xori %168, %171 : vector<14x18xi1>
    %173 = arith.andi %172, %166 : vector<14x18xi1>
    %174 = vector.broadcast %162 : i32 to vector<14x18xi32>
    %175 = arith.addi %164, %174 : vector<14x18xi32>
    %176 = arith.select %173, %175, %164 : vector<14x18xi1>, vector<14x18xi32>
    %c0_i32_77 = arith.constant 0 : i32
    %177 = vector.broadcast %c0_i32_77 : i32 to vector<14x18xi32>
    %178 = arith.cmpi eq, %176, %177 : vector<14x18xi32>
    %179 = arith.andi %160, %178 : vector<14x18xi1>
    %cst_78 = arith.constant 0xFF800000 : f32
    %180 = vector.broadcast %cst_78 : f32 to vector<14x18xf32>
    %181 = arith.select %179, %152, %180 : vector<14x18xi1>, vector<14x18xf32>
    %cst_79 = arith.constant dense<0xFF800000> : vector<14xf32>
    %182 = vector.multi_reduction <maximumf>, %181, %cst_79 [1] : vector<14x18xf32> to vector<14xf32>
    %183 = vector.shape_cast %182 : vector<14xf32> to vector<14x1xf32>
    %c9_i32_80 = arith.constant 9 : i32
    %184 = vector.broadcast %c9_i32_80 : i32 to vector<14x18xi32>
    %185 = arith.subi %153, %184 : vector<14x18xi32>
    %c0_i32_81 = arith.constant 0 : i32
    %186 = vector.broadcast %c0_i32_81 : i32 to vector<14x18xi32>
    %187 = arith.cmpi sge, %185, %186 : vector<14x18xi32>
    %c9_i32_82 = arith.constant 9 : i32
    %188 = vector.broadcast %c9_i32_82 : i32 to vector<14x18xi32>
    %189 = arith.cmpi slt, %185, %188 : vector<14x18xi32>
    %190 = arith.andi %187, %189 : vector<14x18xi1>
    %c2_i32_83 = arith.constant 2 : i32
    %c0_i32_84 = arith.constant 0 : i32
    %191 = arith.cmpi eq, %c2_i32_83, %c0_i32_84 : i32
    %c1_i32_85 = arith.constant 1 : i32
    %192 = arith.select %191, %c1_i32_85, %c2_i32_83 : i32
    %193 = vector.broadcast %192 : i32 to vector<14x18xi32>
    %194 = arith.remsi %185, %193 : vector<14x18xi32>
    %c0_i32_86 = arith.constant 0 : i32
    %195 = vector.broadcast %c0_i32_86 : i32 to vector<14x18xi32>
    %196 = arith.cmpi ne, %194, %195 : vector<14x18xi32>
    %c0_i32_87 = arith.constant 0 : i32
    %197 = vector.broadcast %c0_i32_87 : i32 to vector<14x18xi32>
    %198 = arith.cmpi slt, %194, %197 : vector<14x18xi32>
    %c0_i32_88 = arith.constant 0 : i32
    %199 = arith.cmpi slt, %192, %c0_i32_88 : i32
    %200 = vector.broadcast %199 : i1 to vector<14x18xi1>
    %201 = vector.broadcast %200 : vector<14x18xi1> to vector<14x18xi1>
    %202 = arith.xori %198, %201 : vector<14x18xi1>
    %203 = arith.andi %202, %196 : vector<14x18xi1>
    %204 = vector.broadcast %192 : i32 to vector<14x18xi32>
    %205 = arith.addi %194, %204 : vector<14x18xi32>
    %206 = arith.select %203, %205, %194 : vector<14x18xi1>, vector<14x18xi32>
    %c0_i32_89 = arith.constant 0 : i32
    %207 = vector.broadcast %c0_i32_89 : i32 to vector<14x18xi32>
    %208 = arith.cmpi eq, %206, %207 : vector<14x18xi32>
    %209 = arith.andi %190, %208 : vector<14x18xi1>
    %cst_90 = arith.constant 0xFF800000 : f32
    %210 = vector.broadcast %cst_90 : f32 to vector<14x18xf32>
    %211 = arith.select %209, %152, %210 : vector<14x18xi1>, vector<14x18xf32>
    %cst_91 = arith.constant dense<0xFF800000> : vector<14xf32>
    %212 = vector.multi_reduction <maximumf>, %211, %cst_91 [1] : vector<14x18xf32> to vector<14xf32>
    %213 = vector.shape_cast %212 : vector<14xf32> to vector<14x1xf32>
    %214 = tpu.concatenate %183, %213 in 1 : vector<14x1xf32>, vector<14x1xf32> -> vector<14x2xf32>
    %c0_92 = arith.constant 0 : index
    %c0_93 = arith.constant 0 : index
    %215 = vector.load %arg9[%c0_92, %c0_93] : memref<14x1xf32, #tpu.memory_space<vmem>>, vector<14x1xf32>
    %216 = vector.broadcast %215 : vector<14x1xf32> to vector<14x2xf32>
    %217 = arith.addf %214, %216 : vector<14x2xf32>
    %cst_94 = arith.constant 0.000000e+00 : f32
    %218 = vector.broadcast %cst_94 : f32 to vector<14x2xf32>
    %219 = arith.cmpf oge, %217, %218 : vector<14x2xf32>
    %cst_95 = arith.constant 0.00999999977 : f32
    %220 = vector.broadcast %cst_95 : f32 to vector<14x2xf32>
    %221 = arith.mulf %220, %217 : vector<14x2xf32>
    %222 = arith.select %219, %217, %221 : vector<14x2xi1>, vector<14x2xf32>
    %c0_96 = arith.constant 0 : index
    %c0_97 = arith.constant 0 : index
    %223 = vector.load %arg10[%c0_96, %c0_97] : memref<14x42xf32, #tpu.memory_space<vmem>>, vector<14x42xf32>
    %cst_98 = arith.constant dense<0.000000e+00> : vector<14x30xf32>
    %224 = tpu.matmul %223, %0, %cst_98 {dimension_numbers = #tpu.dot_dimension_numbers<[1], [0], [0], [1], [0, 0, 1, 1], [], []>} : vector<14x42xf32>, vector<42x30xf32>, vector<14x30xf32> -> vector<14x30xf32>
    %c0_99 = arith.constant 0 : index
    %c0_100 = arith.constant 0 : index
    %225 = vector.load %arg11[%c0_99, %c0_100] : memref<14x1xf32, #tpu.memory_space<vmem>>, vector<14x1xf32>
    %226 = vector.broadcast %225 : vector<14x1xf32> to vector<14x30xf32>
    %227 = arith.addf %224, %226 : vector<14x30xf32>
    %cst_101 = arith.constant 0.000000e+00 : f32
    %228 = vector.broadcast %cst_101 : f32 to vector<14x30xf32>
    %229 = arith.cmpf oge, %227, %228 : vector<14x30xf32>
    %cst_102 = arith.constant 0.00999999977 : f32
    %230 = vector.broadcast %cst_102 : f32 to vector<14x30xf32>
    %231 = arith.mulf %230, %227 : vector<14x30xf32>
    %232 = arith.select %229, %227, %231 : vector<14x30xi1>, vector<14x30xf32>
    %cst_103 = arith.constant 0.000000e+00 : f32
    %233 = vector.broadcast %cst_103 : f32 to vector<14x1xf32>
    %234 = vector.extract_strided_slice %232 {offsets = [0, 0], sizes = [14, 15], strides = [1, 1]} : vector<14x30xf32> to vector<14x15xf32>
    %235 = vector.extract_strided_slice %232 {offsets = [0, 15], sizes = [14, 15], strides = [1, 1]} : vector<14x30xf32> to vector<14x15xf32>
    %236 = tpu.concatenate %233, %234, %233, %233, %235, %233 in 1 : vector<14x1xf32>, vector<14x15xf32>, vector<14x1xf32>, vector<14x1xf32>, vector<14x15xf32>, vector<14x1xf32> -> vector<14x34xf32>
    %237 = vector.extract_strided_slice %236 {offsets = [0, 0], sizes = [14, 11], strides = [1, 1]} : vector<14x34xf32> to vector<14x11xf32>
    %238 = vector.extract_strided_slice %236 {offsets = [0, 17], sizes = [14, 11], strides = [1, 1]} : vector<14x34xf32> to vector<14x11xf32>
    %239 = tpu.concatenate %237, %238 in 1 : vector<14x11xf32>, vector<14x11xf32> -> vector<14x22xf32>
    %c0_104 = arith.constant 0 : index
    %c0_105 = arith.constant 0 : index
    %c0_106 = arith.constant 0 : index
    %240 = vector.load %arg12[%c0_104, %c0_105, %c0_106] : memref<7x14x14xf32, #tpu.memory_space<vmem>>, vector<1x14x14xf32>
    %241 = vector.shape_cast %240 : vector<1x14x14xf32> to vector<14x14xf32>
    %cst_107 = arith.constant dense<0.000000e+00> : vector<14x22xf32>
    %242 = tpu.matmul %241, %239, %cst_107 {dimension_numbers = #tpu.dot_dimension_numbers<[1], [0], [0], [1], [0, 0, 1, 1], [], []>} : vector<14x14xf32>, vector<14x22xf32>, vector<14x22xf32> -> vector<14x22xf32>
    %243 = vector.extract_strided_slice %236 {offsets = [0, 1], sizes = [14, 11], strides = [1, 1]} : vector<14x34xf32> to vector<14x11xf32>
    %244 = vector.extract_strided_slice %236 {offsets = [0, 18], sizes = [14, 11], strides = [1, 1]} : vector<14x34xf32> to vector<14x11xf32>
    %245 = tpu.concatenate %243, %244 in 1 : vector<14x11xf32>, vector<14x11xf32> -> vector<14x22xf32>
    %c1_108 = arith.constant 1 : index
    %c0_109 = arith.constant 0 : index
    %c0_110 = arith.constant 0 : index
    %246 = vector.load %arg12[%c1_108, %c0_109, %c0_110] : memref<7x14x14xf32, #tpu.memory_space<vmem>>, vector<1x14x14xf32>
    %247 = vector.shape_cast %246 : vector<1x14x14xf32> to vector<14x14xf32>
    %cst_111 = arith.constant dense<0.000000e+00> : vector<14x22xf32>
    %248 = tpu.matmul %247, %245, %cst_111 {dimension_numbers = #tpu.dot_dimension_numbers<[1], [0], [0], [1], [0, 0, 1, 1], [], []>} : vector<14x14xf32>, vector<14x22xf32>, vector<14x22xf32> -> vector<14x22xf32>
    %249 = arith.addf %242, %248 : vector<14x22xf32>
    %250 = vector.extract_strided_slice %236 {offsets = [0, 2], sizes = [14, 11], strides = [1, 1]} : vector<14x34xf32> to vector<14x11xf32>
    %251 = vector.extract_strided_slice %236 {offsets = [0, 19], sizes = [14, 11], strides = [1, 1]} : vector<14x34xf32> to vector<14x11xf32>
    %252 = tpu.concatenate %250, %251 in 1 : vector<14x11xf32>, vector<14x11xf32> -> vector<14x22xf32>
    %c2_112 = arith.constant 2 : index
    %c0_113 = arith.constant 0 : index
    %c0_114 = arith.constant 0 : index
    %253 = vector.load %arg12[%c2_112, %c0_113, %c0_114] : memref<7x14x14xf32, #tpu.memory_space<vmem>>, vector<1x14x14xf32>
    %254 = vector.shape_cast %253 : vector<1x14x14xf32> to vector<14x14xf32>
    %cst_115 = arith.constant dense<0.000000e+00> : vector<14x22xf32>
    %255 = tpu.matmul %254, %252, %cst_115 {dimension_numbers = #tpu.dot_dimension_numbers<[1], [0], [0], [1], [0, 0, 1, 1], [], []>} : vector<14x14xf32>, vector<14x22xf32>, vector<14x22xf32> -> vector<14x22xf32>
    %256 = arith.addf %249, %255 : vector<14x22xf32>
    %257 = vector.extract_strided_slice %236 {offsets = [0, 3], sizes = [14, 11], strides = [1, 1]} : vector<14x34xf32> to vector<14x11xf32>
    %258 = vector.extract_strided_slice %236 {offsets = [0, 20], sizes = [14, 11], strides = [1, 1]} : vector<14x34xf32> to vector<14x11xf32>
    %259 = tpu.concatenate %257, %258 in 1 : vector<14x11xf32>, vector<14x11xf32> -> vector<14x22xf32>
    %c3_116 = arith.constant 3 : index
    %c0_117 = arith.constant 0 : index
    %c0_118 = arith.constant 0 : index
    %260 = vector.load %arg12[%c3_116, %c0_117, %c0_118] : memref<7x14x14xf32, #tpu.memory_space<vmem>>, vector<1x14x14xf32>
    %261 = vector.shape_cast %260 : vector<1x14x14xf32> to vector<14x14xf32>
    %cst_119 = arith.constant dense<0.000000e+00> : vector<14x22xf32>
    %262 = tpu.matmul %261, %259, %cst_119 {dimension_numbers = #tpu.dot_dimension_numbers<[1], [0], [0], [1], [0, 0, 1, 1], [], []>} : vector<14x14xf32>, vector<14x22xf32>, vector<14x22xf32> -> vector<14x22xf32>
    %263 = arith.addf %256, %262 : vector<14x22xf32>
    %264 = vector.extract_strided_slice %236 {offsets = [0, 4], sizes = [14, 11], strides = [1, 1]} : vector<14x34xf32> to vector<14x11xf32>
    %265 = vector.extract_strided_slice %236 {offsets = [0, 21], sizes = [14, 11], strides = [1, 1]} : vector<14x34xf32> to vector<14x11xf32>
    %266 = tpu.concatenate %264, %265 in 1 : vector<14x11xf32>, vector<14x11xf32> -> vector<14x22xf32>
    %c4_120 = arith.constant 4 : index
    %c0_121 = arith.constant 0 : index
    %c0_122 = arith.constant 0 : index
    %267 = vector.load %arg12[%c4_120, %c0_121, %c0_122] : memref<7x14x14xf32, #tpu.memory_space<vmem>>, vector<1x14x14xf32>
    %268 = vector.shape_cast %267 : vector<1x14x14xf32> to vector<14x14xf32>
    %cst_123 = arith.constant dense<0.000000e+00> : vector<14x22xf32>
    %269 = tpu.matmul %268, %266, %cst_123 {dimension_numbers = #tpu.dot_dimension_numbers<[1], [0], [0], [1], [0, 0, 1, 1], [], []>} : vector<14x14xf32>, vector<14x22xf32>, vector<14x22xf32> -> vector<14x22xf32>
    %270 = arith.addf %263, %269 : vector<14x22xf32>
    %271 = vector.extract_strided_slice %236 {offsets = [0, 5], sizes = [14, 11], strides = [1, 1]} : vector<14x34xf32> to vector<14x11xf32>
    %272 = vector.extract_strided_slice %236 {offsets = [0, 22], sizes = [14, 11], strides = [1, 1]} : vector<14x34xf32> to vector<14x11xf32>
    %273 = tpu.concatenate %271, %272 in 1 : vector<14x11xf32>, vector<14x11xf32> -> vector<14x22xf32>
    %c5 = arith.constant 5 : index
    %c0_124 = arith.constant 0 : index
    %c0_125 = arith.constant 0 : index
    %274 = vector.load %arg12[%c5, %c0_124, %c0_125] : memref<7x14x14xf32, #tpu.memory_space<vmem>>, vector<1x14x14xf32>
    %275 = vector.shape_cast %274 : vector<1x14x14xf32> to vector<14x14xf32>
    %cst_126 = arith.constant dense<0.000000e+00> : vector<14x22xf32>
    %276 = tpu.matmul %275, %273, %cst_126 {dimension_numbers = #tpu.dot_dimension_numbers<[1], [0], [0], [1], [0, 0, 1, 1], [], []>} : vector<14x14xf32>, vector<14x22xf32>, vector<14x22xf32> -> vector<14x22xf32>
    %277 = arith.addf %270, %276 : vector<14x22xf32>
    %278 = vector.extract_strided_slice %236 {offsets = [0, 6], sizes = [14, 11], strides = [1, 1]} : vector<14x34xf32> to vector<14x11xf32>
    %279 = vector.extract_strided_slice %236 {offsets = [0, 23], sizes = [14, 11], strides = [1, 1]} : vector<14x34xf32> to vector<14x11xf32>
    %280 = tpu.concatenate %278, %279 in 1 : vector<14x11xf32>, vector<14x11xf32> -> vector<14x22xf32>
    %c6 = arith.constant 6 : index
    %c0_127 = arith.constant 0 : index
    %c0_128 = arith.constant 0 : index
    %281 = vector.load %arg12[%c6, %c0_127, %c0_128] : memref<7x14x14xf32, #tpu.memory_space<vmem>>, vector<1x14x14xf32>
    %282 = vector.shape_cast %281 : vector<1x14x14xf32> to vector<14x14xf32>
    %cst_129 = arith.constant dense<0.000000e+00> : vector<14x22xf32>
    %283 = tpu.matmul %282, %280, %cst_129 {dimension_numbers = #tpu.dot_dimension_numbers<[1], [0], [0], [1], [0, 0, 1, 1], [], []>} : vector<14x14xf32>, vector<14x22xf32>, vector<14x22xf32> -> vector<14x22xf32>
    %284 = arith.addf %277, %283 : vector<14x22xf32>
    %285 = tpu.iota {dimensions = array<i32: 1>} : vector<14x22xi32>
    %c0_i32_130 = arith.constant 0 : i32
    %286 = vector.broadcast %c0_i32_130 : i32 to vector<14x22xi32>
    %287 = arith.subi %285, %286 : vector<14x22xi32>
    %c0_i32_131 = arith.constant 0 : i32
    %288 = vector.broadcast %c0_i32_131 : i32 to vector<14x22xi32>
    %289 = arith.cmpi sge, %287, %288 : vector<14x22xi32>
    %c11_i32 = arith.constant 11 : i32
    %290 = vector.broadcast %c11_i32 : i32 to vector<14x22xi32>
    %291 = arith.cmpi slt, %287, %290 : vector<14x22xi32>
    %292 = arith.andi %289, %291 : vector<14x22xi1>
    %c2_i32_132 = arith.constant 2 : i32
    %c0_i32_133 = arith.constant 0 : i32
    %293 = arith.cmpi eq, %c2_i32_132, %c0_i32_133 : i32
    %c1_i32_134 = arith.constant 1 : i32
    %294 = arith.select %293, %c1_i32_134, %c2_i32_132 : i32
    %295 = vector.broadcast %294 : i32 to vector<14x22xi32>
    %296 = arith.remsi %287, %295 : vector<14x22xi32>
    %c0_i32_135 = arith.constant 0 : i32
    %297 = vector.broadcast %c0_i32_135 : i32 to vector<14x22xi32>
    %298 = arith.cmpi ne, %296, %297 : vector<14x22xi32>
    %c0_i32_136 = arith.constant 0 : i32
    %299 = vector.broadcast %c0_i32_136 : i32 to vector<14x22xi32>
    %300 = arith.cmpi slt, %296, %299 : vector<14x22xi32>
    %c0_i32_137 = arith.constant 0 : i32
    %301 = arith.cmpi slt, %294, %c0_i32_137 : i32
    %302 = vector.broadcast %301 : i1 to vector<14x22xi1>
    %303 = vector.broadcast %302 : vector<14x22xi1> to vector<14x22xi1>
    %304 = arith.xori %300, %303 : vector<14x22xi1>
    %305 = arith.andi %304, %298 : vector<14x22xi1>
    %306 = vector.broadcast %294 : i32 to vector<14x22xi32>
    %307 = arith.addi %296, %306 : vector<14x22xi32>
    %308 = arith.select %305, %307, %296 : vector<14x22xi1>, vector<14x22xi32>
    %c0_i32_138 = arith.constant 0 : i32
    %309 = vector.broadcast %c0_i32_138 : i32 to vector<14x22xi32>
    %310 = arith.cmpi eq, %308, %309 : vector<14x22xi32>
    %311 = arith.andi %292, %310 : vector<14x22xi1>
    %cst_139 = arith.constant 0xFF800000 : f32
    %312 = vector.broadcast %cst_139 : f32 to vector<14x22xf32>
    %313 = arith.select %311, %284, %312 : vector<14x22xi1>, vector<14x22xf32>
    %cst_140 = arith.constant dense<0xFF800000> : vector<14xf32>
    %314 = vector.multi_reduction <maximumf>, %313, %cst_140 [1] : vector<14x22xf32> to vector<14xf32>
    %315 = vector.shape_cast %314 : vector<14xf32> to vector<14x1xf32>
    %c11_i32_141 = arith.constant 11 : i32
    %316 = vector.broadcast %c11_i32_141 : i32 to vector<14x22xi32>
    %317 = arith.subi %285, %316 : vector<14x22xi32>
    %c0_i32_142 = arith.constant 0 : i32
    %318 = vector.broadcast %c0_i32_142 : i32 to vector<14x22xi32>
    %319 = arith.cmpi sge, %317, %318 : vector<14x22xi32>
    %c11_i32_143 = arith.constant 11 : i32
    %320 = vector.broadcast %c11_i32_143 : i32 to vector<14x22xi32>
    %321 = arith.cmpi slt, %317, %320 : vector<14x22xi32>
    %322 = arith.andi %319, %321 : vector<14x22xi1>
    %c2_i32_144 = arith.constant 2 : i32
    %c0_i32_145 = arith.constant 0 : i32
    %323 = arith.cmpi eq, %c2_i32_144, %c0_i32_145 : i32
    %c1_i32_146 = arith.constant 1 : i32
    %324 = arith.select %323, %c1_i32_146, %c2_i32_144 : i32
    %325 = vector.broadcast %324 : i32 to vector<14x22xi32>
    %326 = arith.remsi %317, %325 : vector<14x22xi32>
    %c0_i32_147 = arith.constant 0 : i32
    %327 = vector.broadcast %c0_i32_147 : i32 to vector<14x22xi32>
    %328 = arith.cmpi ne, %326, %327 : vector<14x22xi32>
    %c0_i32_148 = arith.constant 0 : i32
    %329 = vector.broadcast %c0_i32_148 : i32 to vector<14x22xi32>
    %330 = arith.cmpi slt, %326, %329 : vector<14x22xi32>
    %c0_i32_149 = arith.constant 0 : i32
    %331 = arith.cmpi slt, %324, %c0_i32_149 : i32
    %332 = vector.broadcast %331 : i1 to vector<14x22xi1>
    %333 = vector.broadcast %332 : vector<14x22xi1> to vector<14x22xi1>
    %334 = arith.xori %330, %333 : vector<14x22xi1>
    %335 = arith.andi %334, %328 : vector<14x22xi1>
    %336 = vector.broadcast %324 : i32 to vector<14x22xi32>
    %337 = arith.addi %326, %336 : vector<14x22xi32>
    %338 = arith.select %335, %337, %326 : vector<14x22xi1>, vector<14x22xi32>
    %c0_i32_150 = arith.constant 0 : i32
    %339 = vector.broadcast %c0_i32_150 : i32 to vector<14x22xi32>
    %340 = arith.cmpi eq, %338, %339 : vector<14x22xi32>
    %341 = arith.andi %322, %340 : vector<14x22xi1>
    %cst_151 = arith.constant 0xFF800000 : f32
    %342 = vector.broadcast %cst_151 : f32 to vector<14x22xf32>
    %343 = arith.select %341, %284, %342 : vector<14x22xi1>, vector<14x22xf32>
    %cst_152 = arith.constant dense<0xFF800000> : vector<14xf32>
    %344 = vector.multi_reduction <maximumf>, %343, %cst_152 [1] : vector<14x22xf32> to vector<14xf32>
    %345 = vector.shape_cast %344 : vector<14xf32> to vector<14x1xf32>
    %346 = tpu.concatenate %315, %345 in 1 : vector<14x1xf32>, vector<14x1xf32> -> vector<14x2xf32>
    %c0_153 = arith.constant 0 : index
    %c0_154 = arith.constant 0 : index
    %347 = vector.load %arg13[%c0_153, %c0_154] : memref<14x1xf32, #tpu.memory_space<vmem>>, vector<14x1xf32>
    %348 = vector.broadcast %347 : vector<14x1xf32> to vector<14x2xf32>
    %349 = arith.addf %346, %348 : vector<14x2xf32>
    %cst_155 = arith.constant 0.000000e+00 : f32
    %350 = vector.broadcast %cst_155 : f32 to vector<14x2xf32>
    %351 = arith.cmpf oge, %349, %350 : vector<14x2xf32>
    %cst_156 = arith.constant 0.00999999977 : f32
    %352 = vector.broadcast %cst_156 : f32 to vector<14x2xf32>
    %353 = arith.mulf %352, %349 : vector<14x2xf32>
    %354 = arith.select %351, %349, %353 : vector<14x2xi1>, vector<14x2xf32>
    %c0_157 = arith.constant 0 : index
    %c0_158 = arith.constant 0 : index
    %c0_159 = arith.constant 0 : index
    %355 = vector.load %arg14[%c0_157, %c0_158, %c0_159] : memref<3x64x14xf32, #tpu.memory_space<vmem>>, vector<1x64x14xf32>
    %356 = vector.shape_cast %355 : vector<1x64x14xf32> to vector<64x14xf32>
    %cst_160 = arith.constant dense<0.000000e+00> : vector<64x2xf32>
    %357 = tpu.matmul %356, %104, %cst_160 {dimension_numbers = #tpu.dot_dimension_numbers<[1], [0], [0], [1], [0, 0, 1, 1], [], []>} : vector<64x14xf32>, vector<14x2xf32>, vector<64x2xf32> -> vector<64x2xf32>
    %c1_161 = arith.constant 1 : index
    %c0_162 = arith.constant 0 : index
    %c0_163 = arith.constant 0 : index
    %358 = vector.load %arg14[%c1_161, %c0_162, %c0_163] : memref<3x64x14xf32, #tpu.memory_space<vmem>>, vector<1x64x14xf32>
    %359 = vector.shape_cast %358 : vector<1x64x14xf32> to vector<64x14xf32>
    %cst_164 = arith.constant dense<0.000000e+00> : vector<64x2xf32>
    %360 = tpu.matmul %359, %222, %cst_164 {dimension_numbers = #tpu.dot_dimension_numbers<[1], [0], [0], [1], [0, 0, 1, 1], [], []>} : vector<64x14xf32>, vector<14x2xf32>, vector<64x2xf32> -> vector<64x2xf32>
    %361 = arith.addf %357, %360 : vector<64x2xf32>
    %c2_165 = arith.constant 2 : index
    %c0_166 = arith.constant 0 : index
    %c0_167 = arith.constant 0 : index
    %362 = vector.load %arg14[%c2_165, %c0_166, %c0_167] : memref<3x64x14xf32, #tpu.memory_space<vmem>>, vector<1x64x14xf32>
    %363 = vector.shape_cast %362 : vector<1x64x14xf32> to vector<64x14xf32>
    %cst_168 = arith.constant dense<0.000000e+00> : vector<64x2xf32>
    %364 = tpu.matmul %363, %354, %cst_168 {dimension_numbers = #tpu.dot_dimension_numbers<[1], [0], [0], [1], [0, 0, 1, 1], [], []>} : vector<64x14xf32>, vector<14x2xf32>, vector<64x2xf32> -> vector<64x2xf32>
    %365 = arith.addf %361, %364 : vector<64x2xf32>
    %c0_169 = arith.constant 0 : index
    %c0_170 = arith.constant 0 : index
    %366 = vector.load %arg15[%c0_169, %c0_170] : memref<64x1xf32, #tpu.memory_space<vmem>>, vector<64x1xf32>
    %367 = vector.broadcast %366 : vector<64x1xf32> to vector<64x2xf32>
    %368 = arith.addf %365, %367 : vector<64x2xf32>
    %c0_171 = arith.constant 0 : index
    %c0_172 = arith.constant 0 : index
    %369 = vector.load %arg16[%c0_171, %c0_172] : memref<32x64xf32, #tpu.memory_space<vmem>>, vector<32x64xf32>
    %cst_173 = arith.constant dense<0.000000e+00> : vector<32x2xf32>
    %370 = tpu.matmul %369, %368, %cst_173 {dimension_numbers = #tpu.dot_dimension_numbers<[1], [0], [0], [1], [0, 0, 1, 1], [], []>} : vector<32x64xf32>, vector<64x2xf32>, vector<32x2xf32> -> vector<32x2xf32>
    %c0_174 = arith.constant 0 : index
    %c0_175 = arith.constant 0 : index
    %371 = vector.load %arg17[%c0_174, %c0_175] : memref<32x1xf32, #tpu.memory_space<vmem>>, vector<32x1xf32>
    %372 = vector.broadcast %371 : vector<32x1xf32> to vector<32x2xf32>
    %373 = arith.addf %370, %372 : vector<32x2xf32>
    %cst_176 = arith.constant 0.000000e+00 : f32
    %374 = vector.broadcast %cst_176 : f32 to vector<32x2xf32>
    %375 = arith.cmpf oge, %373, %374 : vector<32x2xf32>
    %cst_177 = arith.constant 0.00999999977 : f32
    %376 = vector.broadcast %cst_177 : f32 to vector<32x2xf32>
    %377 = arith.mulf %376, %373 : vector<32x2xf32>
    %378 = arith.select %375, %373, %377 : vector<32x2xi1>, vector<32x2xf32>
    %c0_178 = arith.constant 0 : index
    %c0_179 = arith.constant 0 : index
    %379 = vector.load %arg18[%c0_178, %c0_179] : memref<1x32xf32, #tpu.memory_space<vmem>>, vector<1x32xf32>
    %cst_180 = arith.constant dense<0.000000e+00> : vector<1x2xf32>
    %380 = tpu.matmul %379, %378, %cst_180 {dimension_numbers = #tpu.dot_dimension_numbers<[1], [0], [0], [1], [0, 0, 1, 1], [], []>} : vector<1x32xf32>, vector<32x2xf32>, vector<1x2xf32> -> vector<1x2xf32>
    %c0_181 = arith.constant 0 : index
    %c0_182 = arith.constant 0 : index
    %381 = vector.load %arg19[%c0_181, %c0_182] : memref<1x1xf32, #tpu.memory_space<vmem>>, vector<1x1xf32>
    %382 = vector.broadcast %381 : vector<1x1xf32> to vector<1x2xf32>
    %383 = arith.addf %380, %382 : vector<1x2xf32>
    %c0_183 = arith.constant 0 : index
    %c0_184 = arith.constant 0 : index
    %384 = vector.load %arg20[%c0_183, %c0_184] : memref<128x2xf32, #tpu.memory_space<vmem>>, vector<14x2xf32>
    tpu.vector_store %arg20[%c0_183, %c0_184], %104 {strides = array<i32>} : memref<128x2xf32, #tpu.memory_space<vmem>>, vector<14x2xf32>,
    %c16 = arith.constant 16 : index
    %c0_185 = arith.constant 0 : index
    %385 = vector.load %arg20[%c16, %c0_185] : memref<128x2xf32, #tpu.memory_space<vmem>>, vector<14x2xf32>
    tpu.vector_store %arg20[%c16, %c0_185], %222 {strides = array<i32>} : memref<128x2xf32, #tpu.memory_space<vmem>>, vector<14x2xf32>,
    %c32 = arith.constant 32 : index
    %c0_186 = arith.constant 0 : index
    %386 = vector.load %arg20[%c32, %c0_186] : memref<128x2xf32, #tpu.memory_space<vmem>>, vector<14x2xf32>
    tpu.vector_store %arg20[%c32, %c0_186], %354 {strides = array<i32>} : memref<128x2xf32, #tpu.memory_space<vmem>>, vector<14x2xf32>,
    %c48 = arith.constant 48 : index
    %c0_187 = arith.constant 0 : index
    %387 = vector.load %arg20[%c48, %c0_187] : memref<128x2xf32, #tpu.memory_space<vmem>>, vector<64x2xf32>
    tpu.vector_store %arg20[%c48, %c0_187], %368 {strides = array<i32>} : memref<128x2xf32, #tpu.memory_space<vmem>>, vector<64x2xf32>,
    %c112 = arith.constant 112 : index
    %c0_188 = arith.constant 0 : index
    %388 = vector.load %arg20[%c112, %c0_188] : memref<128x2xf32, #tpu.memory_space<vmem>>, vector<1x2xf32>
    tpu.vector_store %arg20[%c112, %c0_188], %383 {strides = array<i32>} : memref<128x2xf32, #tpu.memory_space<vmem>>, vector<1x2xf32>,
    return
  }
  func.func @transform_0(%arg0: i32) -> (i32, i32) {
    %c0_i32 = arith.constant 0 : i32
    %c0_i32_0 = arith.constant 0 : i32
    %c0_i32_1 = arith.constant 0 : i32
    return %c0_i32, %c0_i32_0 : i32, i32
  }
  func.func @transform_1(%arg0: i32) -> (i32, i32) {
    %c0_i32 = arith.constant 0 : i32
    %c0_i32_0 = arith.constant 0 : i32
    %c0_i32_1 = arith.constant 0 : i32
    return %c0_i32, %c0_i32_0 : i32, i32
  }
  func.func @transform_2(%arg0: i32) -> (i32, i32) {
    %c0_i32 = arith.constant 0 : i32
    %c0_i32_0 = arith.constant 0 : i32
    %c0_i32_1 = arith.constant 0 : i32
    return %c0_i32, %c0_i32_0 : i32, i32
  }
  func.func @transform_3(%arg0: i32) -> (i32, i32, i32) {
    %c0_i32 = arith.constant 0 : i32
    %c0_i32_0 = arith.constant 0 : i32
    %c0_i32_1 = arith.constant 0 : i32
    %c0_i32_2 = arith.constant 0 : i32
    return %c0_i32, %c0_i32_0, %c0_i32_1 : i32, i32, i32
  }
  func.func @transform_4(%arg0: i32) -> (i32, i32) {
    %c0_i32 = arith.constant 0 : i32
    %c0_i32_0 = arith.constant 0 : i32
    %c0_i32_1 = arith.constant 0 : i32
    return %c0_i32, %c0_i32_0 : i32, i32
  }
  func.func @transform_5(%arg0: i32) -> (i32, i32) {
    %c0_i32 = arith.constant 0 : i32
    %c0_i32_0 = arith.constant 0 : i32
    %c0_i32_1 = arith.constant 0 : i32
    return %c0_i32, %c0_i32_0 : i32, i32
  }
  func.func @transform_6(%arg0: i32) -> (i32, i32) {
    %c0_i32 = arith.constant 0 : i32
    %c0_i32_0 = arith.constant 0 : i32
    %c0_i32_1 = arith.constant 0 : i32
    return %c0_i32, %c0_i32_0 : i32, i32
  }
  func.func @transform_7(%arg0: i32) -> (i32, i32, i32) {
    %c0_i32 = arith.constant 0 : i32
    %c0_i32_0 = arith.constant 0 : i32
    %c0_i32_1 = arith.constant 0 : i32
    %c0_i32_2 = arith.constant 0 : i32
    return %c0_i32, %c0_i32_0, %c0_i32_1 : i32, i32, i32
  }
  func.func @transform_8(%arg0: i32) -> (i32, i32) {
    %c0_i32 = arith.constant 0 : i32
    %c0_i32_0 = arith.constant 0 : i32
    %c0_i32_1 = arith.constant 0 : i32
    return %c0_i32, %c0_i32_0 : i32, i32
  }
  func.func @transform_9(%arg0: i32) -> (i32, i32) {
    %c0_i32 = arith.constant 0 : i32
    %c0_i32_0 = arith.constant 0 : i32
    %c0_i32_1 = arith.constant 0 : i32
    return %c0_i32, %c0_i32_0 : i32, i32
  }
  func.func @transform_10(%arg0: i32) -> (i32, i32) {
    %c0_i32 = arith.constant 0 : i32
    %c0_i32_0 = arith.constant 0 : i32
    %c0_i32_1 = arith.constant 0 : i32
    return %c0_i32, %c0_i32_0 : i32, i32
  }
  func.func @transform_11(%arg0: i32) -> (i32, i32, i32) {
    %c0_i32 = arith.constant 0 : i32
    %c0_i32_0 = arith.constant 0 : i32
    %c0_i32_1 = arith.constant 0 : i32
    %c0_i32_2 = arith.constant 0 : i32
    return %c0_i32, %c0_i32_0, %c0_i32_1 : i32, i32, i32
  }
  func.func @transform_12(%arg0: i32) -> (i32, i32) {
    %c0_i32 = arith.constant 0 : i32
    %c0_i32_0 = arith.constant 0 : i32
    %c0_i32_1 = arith.constant 0 : i32
    return %c0_i32, %c0_i32_0 : i32, i32
  }
  func.func @transform_13(%arg0: i32) -> (i32, i32, i32) {
    %c0_i32 = arith.constant 0 : i32
    %c0_i32_0 = arith.constant 0 : i32
    %c0_i32_1 = arith.constant 0 : i32
    %c0_i32_2 = arith.constant 0 : i32
    return %c0_i32, %c0_i32_0, %c0_i32_1 : i32, i32, i32
  }
  func.func @transform_14(%arg0: i32) -> (i32, i32) {
    %c0_i32 = arith.constant 0 : i32
    %c0_i32_0 = arith.constant 0 : i32
    %c0_i32_1 = arith.constant 0 : i32
    return %c0_i32, %c0_i32_0 : i32, i32
  }
  func.func @transform_15(%arg0: i32) -> (i32, i32) {
    %c0_i32 = arith.constant 0 : i32
    %c0_i32_0 = arith.constant 0 : i32
    %c0_i32_1 = arith.constant 0 : i32
    return %c0_i32, %c0_i32_0 : i32, i32
  }
  func.func @transform_16(%arg0: i32) -> (i32, i32) {
    %c0_i32 = arith.constant 0 : i32
    %c0_i32_0 = arith.constant 0 : i32
    %c0_i32_1 = arith.constant 0 : i32
    return %c0_i32, %c0_i32_0 : i32, i32
  }
  func.func @transform_17(%arg0: i32) -> (i32, i32) {
    %c0_i32 = arith.constant 0 : i32
    %c0_i32_0 = arith.constant 0 : i32
    %c0_i32_1 = arith.constant 0 : i32
    return %c0_i32, %c0_i32_0 : i32, i32
  }
  func.func @transform_18(%arg0: i32) -> (i32, i32) {
    %c0_i32 = arith.constant 0 : i32
    %c0_i32_0 = arith.constant 0 : i32
    %c0_i32_1 = arith.constant 0 : i32
    return %c0_i32, %c0_i32_0 : i32, i32
  }
  func.func @transform_19(%arg0: i32) -> (i32, i32) {
    %c0_i32 = arith.constant 0 : i32
    %c0_i32_0 = arith.constant 0 : i32
    %c0_i32_1 = arith.constant 0 : i32
    return %c0_i32, %c0_i32_0 : i32, i32
  }
}

</mosaic_0001>

<llo_original>
// kernel: forward_pallas.1
$region0: #{forward_pallas.1}
  #allocation0 [shape = 'u32[]', space=smem, size = 0x4, offset = 0x4, fixed_abs, tag = 'smem constant byte address 0x4 - core index']
  #allocation1 [shape = 'u32[144,128]{1,0:T(1,128)}', space=vmem, size = 0x12000, scoped, tag = 'internal scratch']
  #allocation2 [shape = 'f32[1,1]{1,0:T(1,128)S(1)}', space=vmem, size = 0x200, scoped, tag = 'scoped memory for forward_pallas.1']
  %s0 = inlined_call_operand.vmem [shape: f32[42,30], index: 0, kind: input, shape index: {}]
  %s1 = inlined_call_operand.vmem [shape: f32[14,42], index: 1, kind: input, shape index: {}]
  %s2 = inlined_call_operand.vmem [shape: f32[14,1], index: 2, kind: input, shape index: {}]
  %s3 = inlined_call_operand.vmem [shape: f32[3,14,14], index: 3, kind: input, shape index: {}]
  %s4 = inlined_call_operand.vmem [shape: f32[14,1], index: 4, kind: input, shape index: {}]
  %s5 = inlined_call_operand.vmem [shape: f32[14,42], index: 5, kind: input, shape index: {}]
  %s6 = inlined_call_operand.vmem [shape: f32[14,1], index: 6, kind: input, shape index: {}]
  %s7 = inlined_call_operand.vmem [shape: f32[5,14,14], index: 7, kind: input, shape index: {}]
  %s8 = inlined_call_operand.vmem [shape: f32[14,1], index: 8, kind: input, shape index: {}]
  %s9 = inlined_call_operand.vmem [shape: f32[14,42], index: 9, kind: input, shape index: {}]
  %s10 = inlined_call_operand.vmem [shape: f32[14,1], index: 10, kind: input, shape index: {}]
  %s11 = inlined_call_operand.vmem [shape: f32[7,14,14], index: 11, kind: input, shape index: {}]
  %s12 = inlined_call_operand.vmem [shape: f32[14,1], index: 12, kind: input, shape index: {}]
  %s13 = inlined_call_operand.vmem [shape: f32[3,64,14], index: 13, kind: input, shape index: {}]
  %s14 = inlined_call_operand.vmem [shape: f32[64,1], index: 14, kind: input, shape index: {}]
  %s15 = inlined_call_operand.vmem [shape: f32[32,64], index: 15, kind: input, shape index: {}]
  %s16 = inlined_call_operand.vmem [shape: f32[32,1], index: 16, kind: input, shape index: {}]
  %s17 = inlined_call_operand.vmem [shape: f32[1,32], index: 17, kind: input, shape index: {}]
  %s18 = inlined_call_operand.<no memory space> [shape: f32[1,1], index: 18, kind: input, shape index: {}]
  %s19 = inlined_call_operand.vmem [shape: f32[128,2], index: 19, kind: output, shape index: {}]
  %s20 = sld [smem:[#allocation0]]
  $region86: #{forward_pallas.1} parent=0
    _
  %s22 = ssub.s32 1, %s20
  %s23 = scalar_select 0, %s22, %s20
  %v24 = vstv %s18
  %25 = vst [vmem:[#allocation2] sm:$0x1] %v24
  // Predicated region
  $region2: #{forward_pallas.1} parent=0 // pred_check
    _
  $region3: #{forward_pallas.1} parent=0 // pred_check_branch
    %27 = sbr.rel (0) target = $region5
  $region4: #{forward_pallas.1} parent=0 // pred_region
    _
  $region5: #{forward_pallas.1} parent=0 // pred_fallthru
    _
  // Predicated region
  $region6: #{forward_pallas.1} parent=0 // pred_check
    _
  $region7: #{forward_pallas.1} parent=0 // pred_check_branch
    %29 = sbr.rel (0) target = $region9
  $region8: #{forward_pallas.1} parent=0 // pred_region
    _
  $region9: #{forward_pallas.1} parent=0 // pred_fallthru
    _
  // Predicated region
  $region10: #{forward_pallas.1} parent=0 // pred_check
    _
  $region11: #{forward_pallas.1} parent=0 // pred_check_branch
    %31 = sbr.rel (0) target = $region13
  $region12: #{forward_pallas.1} parent=0 // pred_region
    _
  $region13: #{forward_pallas.1} parent=0 // pred_fallthru
    _
  // Predicated region
  $region14: #{forward_pallas.1} parent=0 // pred_check
    _
  $region15: #{forward_pallas.1} parent=0 // pred_check_branch
    %33 = sbr.rel (0) target = $region17
  $region16: #{forward_pallas.1} parent=0 // pred_region
    _
  $region17: #{forward_pallas.1} parent=0 // pred_fallthru
    _
  // Predicated region
  $region18: #{forward_pallas.1} parent=0 // pred_check
    _
  $region19: #{forward_pallas.1} parent=0 // pred_check_branch
    %35 = sbr.rel (0) target = $region21
  $region20: #{forward_pallas.1} parent=0 // pred_region
    _
  $region21: #{forward_pallas.1} parent=0 // pred_fallthru
    _
  // Predicated region
  $region22: #{forward_pallas.1} parent=0 // pred_check
    _
  $region23: #{forward_pallas.1} parent=0 // pred_check_branch
    %37 = sbr.rel (0) target = $region25
  $region24: #{forward_pallas.1} parent=0 // pred_region
    _
  $region25: #{forward_pallas.1} parent=0 // pred_fallthru
    _
  // Predicated region
  $region26: #{forward_pallas.1} parent=0 // pred_check
    _
  $region27: #{forward_pallas.1} parent=0 // pred_check_branch
    %39 = sbr.rel (0) target = $region29
  $region28: #{forward_pallas.1} parent=0 // pred_region
    _
  $region29: #{forward_pallas.1} parent=0 // pred_fallthru
    _
  // Predicated region
  $region30: #{forward_pallas.1} parent=0 // pred_check
    _
  $region31: #{forward_pallas.1} parent=0 // pred_check_branch
    %41 = sbr.rel (0) target = $region33
  $region32: #{forward_pallas.1} parent=0 // pred_region
    _
  $region33: #{forward_pallas.1} parent=0 // pred_fallthru
    _
  // Predicated region
  $region34: #{forward_pallas.1} parent=0 // pred_check
    _
  $region35: #{forward_pallas.1} parent=0 // pred_check_branch
    %43 = sbr.rel (0) target = $region37
  $region36: #{forward_pallas.1} parent=0 // pred_region
    _
  $region37: #{forward_pallas.1} parent=0 // pred_fallthru
    _
  // Predicated region
  $region38: #{forward_pallas.1} parent=0 // pred_check
    _
  $region39: #{forward_pallas.1} parent=0 // pred_check_branch
    %45 = sbr.rel (0) target = $region41
  $region40: #{forward_pallas.1} parent=0 // pred_region
    _
  $region41: #{forward_pallas.1} parent=0 // pred_fallthru
    _
  // Predicated region
  $region42: #{forward_pallas.1} parent=0 // pred_check
    _
  $region43: #{forward_pallas.1} parent=0 // pred_check_branch
    %47 = sbr.rel (0) target = $region45
  $region44: #{forward_pallas.1} parent=0 // pred_region
    _
  $region45: #{forward_pallas.1} parent=0 // pred_fallthru
    _
  // Predicated region
  $region46: #{forward_pallas.1} parent=0 // pred_check
    _
  $region47: #{forward_pallas.1} parent=0 // pred_check_branch
    %49 = sbr.rel (0) target = $region49
  $region48: #{forward_pallas.1} parent=0 // pred_region
    _
  $region49: #{forward_pallas.1} parent=0 // pred_fallthru
    _
  // Predicated region
  $region50: #{forward_pallas.1} parent=0 // pred_check
    _
  $region51: #{forward_pallas.1} parent=0 // pred_check_branch
    %51 = sbr.rel (0) target = $region53
  $region52: #{forward_pallas.1} parent=0 // pred_region
    _
  $region53: #{forward_pallas.1} parent=0 // pred_fallthru
    _
  // Predicated region
  $region54: #{forward_pallas.1} parent=0 // pred_check
    _
  $region55: #{forward_pallas.1} parent=0 // pred_check_branch
    %53 = sbr.rel (0) target = $region57
  $region56: #{forward_pallas.1} parent=0 // pred_region
    _
  $region57: #{forward_pallas.1} parent=0 // pred_fallthru
    _
  // Predicated region
  $region58: #{forward_pallas.1} parent=0 // pred_check
    _
  $region59: #{forward_pallas.1} parent=0 // pred_check_branch
    %55 = sbr.rel (0) target = $region61
  $region60: #{forward_pallas.1} parent=0 // pred_region
    _
  $region61: #{forward_pallas.1} parent=0 // pred_fallthru
    _
  // Predicated region
  $region62: #{forward_pallas.1} parent=0 // pred_check
    _
  $region63: #{forward_pallas.1} parent=0 // pred_check_branch
    %57 = sbr.rel (0) target = $region65
  $region64: #{forward_pallas.1} parent=0 // pred_region
    _
  $region65: #{forward_pallas.1} parent=0 // pred_fallthru
    _
  // Predicated region
  $region66: #{forward_pallas.1} parent=0 // pred_check
    _
  $region67: #{forward_pallas.1} parent=0 // pred_check_branch
    %59 = sbr.rel (0) target = $region69
  $region68: #{forward_pallas.1} parent=0 // pred_region
    _
  $region69: #{forward_pallas.1} parent=0 // pred_fallthru
    _
  // Predicated region
  $region70: #{forward_pallas.1} parent=0 // pred_check
    _
  $region71: #{forward_pallas.1} parent=0 // pred_check_branch
    %61 = sbr.rel (0) target = $region73
  $region72: #{forward_pallas.1} parent=0 // pred_region
    _
  $region73: #{forward_pallas.1} parent=0 // pred_fallthru
    _
  // Predicated region
  $region74: #{forward_pallas.1} parent=0 // pred_check
    _
  $region75: #{forward_pallas.1} parent=0 // pred_check_branch
    %63 = sbr.rel (0) target = $region77
  $region76: #{forward_pallas.1} parent=0 // pred_region
    _
  $region77: #{forward_pallas.1} parent=0 // pred_fallthru
    _
  %v64 = vld [vmem:[%s0] sm:$0xff]
  %v65 = vld [vmem:[%s0 + $0x8] sm:$0xff]
  %v66 = vld [vmem:[%s0 + $0x10] sm:$0xff]
  %v67 = vld [vmem:[%s0 + $0x18] sm:$0xff]
  %v68 = vld [vmem:[%s0 + $0x20] sm:$0xff]
  %v69 = vld [vmem:[%s0 + $0x28] sm:$0x3]
  %v70 = vld [vmem:[%s1] sm:$0xff]
  %v71 = vld [vmem:[%s1 + $0x8] sm:$0x3f]
  %v72 = vld [vmem:[%s2] sm:$0xff]
  %v73 = vld [vmem:[%s2 + $0x8] sm:$0x3f]
  %75 = vset.pattern.permute.xlu0 0
  %76 = vperm.xlu0 %75, %v72
  %v77 = vpop.permute.xlu0 %76
  %80 = vset.pattern.permute.xlu0 0
  %81 = vperm.xlu0 %80, %v73
  %v82 = vpop.permute.xlu0 %81
  %vm84 = vcmask 343040
  %v86 = vsel %vm84, %v70, 0
  %v89 = vsel %vm84, %v71, 0
  %vm91 = vcmask 1041408
  %v93 = vsel %vm91, %v69, 0
  %95 = vmatprep.subr.mxu0 0.0
  %96 = vmatpush1.msra.mxu0 %v64
  %97 = vmatprep.subr.mxu0 0.0
  %98 = vmatpush1.msra.mxu0 %v65
  %99 = vmatprep.subr.mxu0 0.0
  %100 = vmatpush1.msra.mxu0 %v66
  %101 = vmatprep.subr.mxu0 0.0
  %102 = vmatpush1.msra.mxu0 %v67
  %103 = vmatprep.subr.mxu0 0.0
  %104 = vmatpush1.msra.mxu0 %v68
  %105 = vmatprep.subr.mxu0 0.0
  %106 = vmatpush1.msra.mxu0 %v93
  %107 = vmatprep.subr.mxu0 0.0
  %108 = vmatpush1.msra.mxu0 0.0
  %109 = vmatprep.subr.mxu0 0.0
  %110 = vmatpush1.msra.mxu0 0.0
  %111 = vmatprep.subr.mxu0 0.0
  %112 = vmatpush1.msra.mxu0 0.0
  %113 = vmatprep.subr.mxu0 0.0
  %114 = vmatpush1.msra.mxu0 0.0
  %115 = vmatprep.subr.mxu0 0.0
  %116 = vmatpush1.msra.mxu0 0.0
  %117 = vmatprep.subr.mxu0 0.0
  %118 = vmatpush1.msra.mxu0 0.0
  %119 = vmatprep.subr.mxu0 0.0
  %120 = vmatpush1.msra.mxu0 0.0
  %121 = vmatprep.subr.mxu0 0.0
  %122 = vmatpush1.msra.mxu0 0.0
  %123 = vmatprep.subr.mxu0 0.0
  %124 = vmatpush1.msra.mxu0 0.0
  %125 = vmatprep.subr.mxu0 0.0
  %126 = vmatpush1.msra.mxu0 0.0
  %127 = vmatprep.subr.mxu0 0.0
  %128 = vmatpush1.msra.mxu0 0.0
  %129 = vmatprep.subr.mxu0 0.0
  %130 = vmatpush1.msra.mxu0 0.0
  %131 = vmatprep.subr.mxu0 0.0
  %132 = vmatpush1.msra.mxu0 0.0
  %133 = vmatprep.subr.mxu0 0.0
  %134 = vmatpush1.msra.mxu0 0.0
  %135 = vmatprep.subr.mxu0 0.0
  %136 = vmatpush1.msra.mxu0 0.0
  %137 = vmatprep.subr.mxu0 0.0
  %138 = vmatpush1.msra.mxu0 0.0
  %139 = vmatprep.subr.mxu0 0.0
  %140 = vmatpush1.msra.mxu0 0.0
  %141 = vmatprep.subr.mxu0 0.0
  %142 = vmatpush1.msra.mxu0 0.0
  %143 = vmatprep.subr.mxu0 0.0
  %144 = vmatpush1.msra.mxu0 0.0
  %145 = vmatprep.subr.mxu0 0.0
  %146 = vmatpush1.msra.mxu0 0.0
  %147 = vmatprep.subr.mxu0 0.0
  %148 = vmatpush1.msra.mxu0 0.0
  %149 = vmatprep.subr.mxu0 0.0
  %150 = vmatpush1.msra.mxu0 0.0
  %151 = vmatprep.subr.mxu0 0.0
  %152 = vmatpush1.msra.mxu0 0.0
  %153 = vmatprep.subr.mxu0 0.0
  %154 = vmatpush1.msra.mxu0 0.0
  %155 = vmatprep.subr.mxu0 0.0
  %156 = vmatpush1.msra.mxu0 0.0
  %157 = vmatprep.subr.mxu0 0.0
  %158 = vmatpush1.msra.mxu0 0.0
  %159 = vmatprep.mubr.f32.mxu0 0.0
  %160 = vmatmul.mubr.f32.gmra.mrb[0].mxu0 %v86
  %v161 = vpop.f32.mrb[0].mxu0
  %v162 = vadd.f32 %v77, %v161
  %v163 = vpop.f32.mrb[0].mxu0
  %164 = vmatprep.mubr.f32.mxu0 0.0
  %165 = vmatmul.mubr.f32.gmra.mrb[0].mxu0 %v89
  %v166 = vpop.f32.mrb[0].mxu0
  %v167 = vadd.f32 %v82, %v166
  %v168 = vpop.f32.mrb[0].mxu0
  %169 = vdwg.mxu0
  %vm170 = vcmp.ge.f32.partialorder %v162, 0.0
  %vm171 = vcmp.ge.f32.partialorder %v167, 0.0
  %v172 = vmul.f32 %v162, 0.01
  %v173 = vmul.f32 %v167, 0.01
  %v174 = vsel %vm170, %v162, %v172
  %v175 = vsel %vm171, %v167, %v173
  %178 = vrot.lane.b32.xlu0 %v174, 1
  %v179 = vpop.permute.xlu0 %178
  %180 = vrot.lane.b32.xlu0 %v175, 1
  %v181 = vpop.permute.xlu0 %180
  %184 = vrot.lane.b32.xlu0 %v174, 3
  %v185 = vpop.permute.xlu0 %184
  %186 = vrot.lane.b32.xlu0 %v175, 3
  %v187 = vpop.permute.xlu0 %186
  %vm190 = vcmask 7168
  %v191 = vsel %vm190, 0.0, %v179
  %v192 = vsel %vm190, 0.0, %v181
  %vm193 = vcmask 130048
  %v194 = vsel %vm193, %v191, 0.0
  %v195 = vsel %vm193, %v192, 0.0
  %vm196 = vcmask 138240
  %v197 = vsel %vm196, %v194, 0.0
  %v198 = vsel %vm196, %v195, 0.0
  %vm199 = vcmask 146432
  %v200 = vsel %vm199, %v197, %v185
  %v201 = vsel %vm199, %v198, %v187
  %vm202 = vcmask 269312
  %v203 = vsel %vm202, %v200, 0.0
  %v204 = vsel %vm202, %v201, 0.0
  %207 = vrot.lane.b32.xlu0 %v203, 120
  %v208 = vpop.permute.xlu0 %207
  %209 = vrot.lane.b32.xlu0 %v204, 120
  %v210 = vpop.permute.xlu0 %209
  %vm213 = vcmask 72704
  %v214 = vsel %vm213, %v203, %v208
  %v215 = vsel %vm213, %v204, %v210
  %v216 = vld [vmem:[%s3] sm:$0xff]
  %v217 = vld [vmem:[%s3 + $0x8] sm:$0x3f]
  %218 = vrot.lane.b32.xlu0 %v203, 124
  %v219 = vpop.permute.xlu0 %218
  %220 = vrot.lane.b32.xlu0 %v204, 124
  %v221 = vpop.permute.xlu0 %220
  %224 = vrot.lane.b32.xlu0 %v203, 116
  %v225 = vpop.permute.xlu0 %224
  %226 = vrot.lane.b32.xlu0 %v204, 116
  %v227 = vpop.permute.xlu0 %226
  %v230 = vsel %vm213, %v219, %v225
  %v231 = vsel %vm213, %v221, %v227
  %s232 = scalar_lea.vmem %s3, 16
  %v233 = vld [vmem:[%s232] sm:$0xff]
  %v234 = vld [vmem:[%s232 + $0x8] sm:$0x3f]
  %vm235 = vcmask 113664
  %v237 = vsel %vm235, %v233, 0
  %v240 = vsel %vm235, %v234, 0
  %vm242 = vcmask 1045504
  %v244 = vsel %vm242, %v231, 0
  %246 = vmatprep.subr.mxu0 0.0
  %247 = vmatpush1.msra.mxu0 %v230
  %248 = vmatprep.subr.mxu0 0.0
  %249 = vmatpush1.msra.mxu0 %v244
  %250 = vmatprep.subr.mxu0 0.0
  %251 = vmatpush1.msra.mxu0 0.0
  %252 = vmatprep.subr.mxu0 0.0
  %253 = vmatpush1.msra.mxu0 0.0
  %254 = vmatprep.subr.mxu0 0.0
  %255 = vmatpush1.msra.mxu0 0.0
  %256 = vmatprep.subr.mxu0 0.0
  %257 = vmatpush1.msra.mxu0 0.0
  %258 = vmatprep.subr.mxu0 0.0
  %259 = vmatpush1.msra.mxu0 0.0
  %260 = vmatprep.subr.mxu0 0.0
  %261 = vmatpush1.msra.mxu0 0.0
  %262 = vmatprep.subr.mxu0 0.0
  %263 = vmatpush1.msra.mxu0 0.0
  %264 = vmatprep.subr.mxu0 0.0
  %265 = vmatpush1.msra.mxu0 0.0
  %266 = vmatprep.subr.mxu0 0.0
  %267 = vmatpush1.msra.mxu0 0.0
  %268 = vmatprep.subr.mxu0 0.0
  %269 = vmatpush1.msra.mxu0 0.0
  %270 = vmatprep.subr.mxu0 0.0
  %271 = vmatpush1.msra.mxu0 0.0
  %272 = vmatprep.subr.mxu0 0.0
  %273 = vmatpush1.msra.mxu0 0.0
  %274 = vmatprep.subr.mxu0 0.0
  %275 = vmatpush1.msra.mxu0 0.0
  %276 = vmatprep.subr.mxu0 0.0
  %277 = vmatpush1.msra.mxu0 0.0
  %278 = vmatprep.subr.mxu0 0.0
  %279 = vmatpush1.msra.mxu0 0.0
  %280 = vmatprep.subr.mxu0 0.0
  %281 = vmatpush1.msra.mxu0 0.0
  %282 = vmatprep.subr.mxu0 0.0
  %283 = vmatpush1.msra.mxu0 0.0
  %284 = vmatprep.subr.mxu0 0.0
  %285 = vmatpush1.msra.mxu0 0.0
  %286 = vmatprep.subr.mxu0 0.0
  %287 = vmatpush1.msra.mxu0 0.0
  %288 = vmatprep.subr.mxu0 0.0
  %289 = vmatpush1.msra.mxu0 0.0
  %290 = vmatprep.subr.mxu0 0.0
  %291 = vmatpush1.msra.mxu0 0.0
  %292 = vmatprep.subr.mxu0 0.0
  %293 = vmatpush1.msra.mxu0 0.0
  %294 = vmatprep.subr.mxu0 0.0
  %295 = vmatpush1.msra.mxu0 0.0
  %296 = vmatprep.subr.mxu0 0.0
  %297 = vmatpush1.msra.mxu0 0.0
  %298 = vmatprep.subr.mxu0 0.0
  %299 = vmatpush1.msra.mxu0 0.0
  %300 = vmatprep.subr.mxu0 0.0
  %301 = vmatpush1.msra.mxu0 0.0
  %302 = vmatprep.subr.mxu0 0.0
  %303 = vmatpush1.msra.mxu0 0.0
  %304 = vmatprep.subr.mxu0 0.0
  %305 = vmatpush1.msra.mxu0 0.0
  %306 = vmatprep.subr.mxu0 0.0
  %307 = vmatpush1.msra.mxu0 0.0
  %308 = vmatprep.subr.mxu0 0.0
  %309 = vmatpush1.msra.mxu0 0.0
  %310 = vmatprep.mubr.f32.mxu0 0.0
  %311 = vmatmul.mubr.f32.gmra.mrb[0].mxu0 %v237
  %v312 = vpop.f32.mrb[0].mxu0
  %v313 = vadd.f32 0.0, %v312
  %v314 = vpop.f32.mrb[0].mxu0
  %315 = vmatprep.mubr.f32.mxu0 0.0
  %316 = vmatmul.mubr.f32.gmra.mrb[0].mxu0 %v240
  %v317 = vpop.f32.mrb[0].mxu0
  %v318 = vadd.f32 0.0, %v317
  %v319 = vpop.f32.mrb[0].mxu0
  %320 = vdwg.mxu0
  %v322 = vsel %vm235, %v216, 0
  %v325 = vsel %vm235, %v217, 0
  %v328 = vsel %vm242, %v215, 0
  %330 = vmatprep.subr.mxu0 0.0
  %331 = vmatpush1.msra.mxu0 %v214
  %332 = vmatprep.subr.mxu0 0.0
  %333 = vmatpush1.msra.mxu0 %v328
  %334 = vmatprep.subr.mxu0 0.0
  %335 = vmatpush1.msra.mxu0 0.0
  %336 = vmatprep.subr.mxu0 0.0
  %337 = vmatpush1.msra.mxu0 0.0
  %338 = vmatprep.subr.mxu0 0.0
  %339 = vmatpush1.msra.mxu0 0.0
  %340 = vmatprep.subr.mxu0 0.0
  %341 = vmatpush1.msra.mxu0 0.0
  %342 = vmatprep.subr.mxu0 0.0
  %343 = vmatpush1.msra.mxu0 0.0
  %344 = vmatprep.subr.mxu0 0.0
  %345 = vmatpush1.msra.mxu0 0.0
  %346 = vmatprep.subr.mxu0 0.0
  %347 = vmatpush1.msra.mxu0 0.0
  %348 = vmatprep.subr.mxu0 0.0
  %349 = vmatpush1.msra.mxu0 0.0
  %350 = vmatprep.subr.mxu0 0.0
  %351 = vmatpush1.msra.mxu0 0.0
  %352 = vmatprep.subr.mxu0 0.0
  %353 = vmatpush1.msra.mxu0 0.0
  %354 = vmatprep.subr.mxu0 0.0
  %355 = vmatpush1.msra.mxu0 0.0
  %356 = vmatprep.subr.mxu0 0.0
  %357 = vmatpush1.msra.mxu0 0.0
  %358 = vmatprep.subr.mxu0 0.0
  %359 = vmatpush1.msra.mxu0 0.0
  %360 = vmatprep.subr.mxu0 0.0
  %361 = vmatpush1.msra.mxu0 0.0
  %362 = vmatprep.subr.mxu0 0.0
  %363 = vmatpush1.msra.mxu0 0.0
  %364 = vmatprep.subr.mxu0 0.0
  %365 = vmatpush1.msra.mxu0 0.0
  %366 = vmatprep.subr.mxu0 0.0
  %367 = vmatpush1.msra.mxu0 0.0
  %368 = vmatprep.subr.mxu0 0.0
  %369 = vmatpush1.msra.mxu0 0.0
  %370 = vmatprep.subr.mxu0 0.0
  %371 = vmatpush1.msra.mxu0 0.0
  %372 = vmatprep.subr.mxu0 0.0
  %373 = vmatpush1.msra.mxu0 0.0
  %374 = vmatprep.subr.mxu0 0.0
  %375 = vmatpush1.msra.mxu0 0.0
  %376 = vmatprep.subr.mxu0 0.0
  %377 = vmatpush1.msra.mxu0 0.0
  %378 = vmatprep.subr.mxu0 0.0
  %379 = vmatpush1.msra.mxu0 0.0
  %380 = vmatprep.subr.mxu0 0.0
  %381 = vmatpush1.msra.mxu0 0.0
  %382 = vmatprep.subr.mxu0 0.0
  %383 = vmatpush1.msra.mxu0 0.0
  %384 = vmatprep.subr.mxu0 0.0
  %385 = vmatpush1.msra.mxu0 0.0
  %386 = vmatprep.subr.mxu0 0.0
  %387 = vmatpush1.msra.mxu0 0.0
  %388 = vmatprep.subr.mxu0 0.0
  %389 = vmatpush1.msra.mxu0 0.0
  %390 = vmatprep.subr.mxu0 0.0
  %391 = vmatpush1.msra.mxu0 0.0
  %392 = vmatprep.subr.mxu0 0.0
  %393 = vmatpush1.msra.mxu0 0.0
  %394 = vmatprep.mubr.f32.mxu0 0.0
  %395 = vmatmul.mubr.f32.gmra.mrb[0].mxu0 %v322
  %v396 = vpop.f32.mrb[0].mxu0
  %v397 = vadd.f32 %v313, %v396
  %v398 = vpop.f32.mrb[0].mxu0
  %399 = vmatprep.mubr.f32.mxu0 0.0
  %400 = vmatmul.mubr.f32.gmra.mrb[0].mxu0 %v325
  %v401 = vpop.f32.mrb[0].mxu0
  %v402 = vadd.f32 %v318, %v401
  %v403 = vpop.f32.mrb[0].mxu0
  %404 = vdwg.mxu0
  %405 = vrot.lane.b32.xlu0 %v203, 112
  %v406 = vpop.permute.xlu0 %405
  %407 = vrot.lane.b32.xlu0 %v204, 112
  %v408 = vpop.permute.xlu0 %407
  %v411 = vsel %vm213, %v208, %v406
  %v412 = vsel %vm213, %v210, %v408
  %s413 = scalar_lea.vmem %s3, 32
  %v414 = vld [vmem:[%s413] sm:$0xff]
  %v415 = vld [vmem:[%s413 + $0x8] sm:$0x3f]
  %v417 = vsel %vm235, %v414, 0
  %v420 = vsel %vm235, %v415, 0
  %v423 = vsel %vm242, %v412, 0
  %425 = vmatprep.subr.mxu0 0.0
  %426 = vmatpush1.msra.mxu0 %v411
  %427 = vmatprep.subr.mxu0 0.0
  %428 = vmatpush1.msra.mxu0 %v423
  %429 = vmatprep.subr.mxu0 0.0
  %430 = vmatpush1.msra.mxu0 0.0
  %431 = vmatprep.subr.mxu0 0.0
  %432 = vmatpush1.msra.mxu0 0.0
  %433 = vmatprep.subr.mxu0 0.0
  %434 = vmatpush1.msra.mxu0 0.0
  %435 = vmatprep.subr.mxu0 0.0
  %436 = vmatpush1.msra.mxu0 0.0
  %437 = vmatprep.subr.mxu0 0.0
  %438 = vmatpush1.msra.mxu0 0.0
  %439 = vmatprep.subr.mxu0 0.0
  %440 = vmatpush1.msra.mxu0 0.0
  %441 = vmatprep.subr.mxu0 0.0
  %442 = vmatpush1.msra.mxu0 0.0
  %443 = vmatprep.subr.mxu0 0.0
  %444 = vmatpush1.msra.mxu0 0.0
  %445 = vmatprep.subr.mxu0 0.0
  %446 = vmatpush1.msra.mxu0 0.0
  %447 = vmatprep.subr.mxu0 0.0
  %448 = vmatpush1.msra.mxu0 0.0
  %449 = vmatprep.subr.mxu0 0.0
  %450 = vmatpush1.msra.mxu0 0.0
  %451 = vmatprep.subr.mxu0 0.0
  %452 = vmatpush1.msra.mxu0 0.0
  %453 = vmatprep.subr.mxu0 0.0
  %454 = vmatpush1.msra.mxu0 0.0
  %455 = vmatprep.subr.mxu0 0.0
  %456 = vmatpush1.msra.mxu0 0.0
  %457 = vmatprep.subr.mxu0 0.0
  %458 = vmatpush1.msra.mxu0 0.0
  %459 = vmatprep.subr.mxu0 0.0
  %460 = vmatpush1.msra.mxu0 0.0
  %461 = vmatprep.subr.mxu0 0.0
  %462 = vmatpush1.msra.mxu0 0.0
  %463 = vmatprep.subr.mxu0 0.0
  %464 = vmatpush1.msra.mxu0 0.0
  %465 = vmatprep.subr.mxu0 0.0
  %466 = vmatpush1.msra.mxu0 0.0
  %467 = vmatprep.subr.mxu0 0.0
  %468 = vmatpush1.msra.mxu0 0.0
  %469 = vmatprep.subr.mxu0 0.0
  %470 = vmatpush1.msra.mxu0 0.0
  %471 = vmatprep.subr.mxu0 0.0
  %472 = vmatpush1.msra.mxu0 0.0
  %473 = vmatprep.subr.mxu0 0.0
  %474 = vmatpush1.msra.mxu0 0.0
  %475 = vmatprep.subr.mxu0 0.0
  %476 = vmatpush1.msra.mxu0 0.0
  %477 = vmatprep.subr.mxu0 0.0
  %478 = vmatpush1.msra.mxu0 0.0
  %479 = vmatprep.subr.mxu0 0.0
  %480 = vmatpush1.msra.mxu0 0.0
  %481 = vmatprep.subr.mxu0 0.0
  %482 = vmatpush1.msra.mxu0 0.0
  %483 = vmatprep.subr.mxu0 0.0
  %484 = vmatpush1.msra.mxu0 0.0
  %485 = vmatprep.subr.mxu0 0.0
  %486 = vmatpush1.msra.mxu0 0.0
  %487 = vmatprep.subr.mxu0 0.0
  %488 = vmatpush1.msra.mxu0 0.0
  %489 = vmatprep.mubr.f32.mxu0 0.0
  %490 = vmatmul.mubr.f32.gmra.mrb[0].mxu0 %v417
  %v491 = vpop.f32.mrb[0].mxu0
  %v492 = vadd.f32 0.0, %v491
  %v493 = vpop.f32.mrb[0].mxu0
  %494 = vmatprep.mubr.f32.mxu0 0.0
  %495 = vmatmul.mubr.f32.gmra.mrb[0].mxu0 %v420
  %v496 = vpop.f32.mrb[0].mxu0
  %v497 = vadd.f32 0.0, %v496
  %v498 = vpop.f32.mrb[0].mxu0
  %499 = vdwg.mxu0
  %v500 = vadd.f32 %v397, %v492
  %v501 = vadd.f32 %v402, %v497
  %v502 = vlaneseq
  %v503 = vand.u32 %v502, 127
  %vm504 = vcmp.ge.s32.totalorder %v503, 0
  %vm505 = vcmp.lt.s32.totalorder %v503, 9
  %vm506 = vmand %vm504, %vm505
  %vm507 = vcmp.lt.s32.totalorder %v503, 0
  %v508 = vsub.s32 0, %v503
  %v509 = vsel %vm507, %v508, %v503
  %v510 = vshrl.u32 %v509, 1
  %v511 = vand.u32 %v509, 1
  %v512 = vsub.s32 0, %v511
  %v513 = vsel %vm507, %v512, %v511
  %vm514 = vcmp.ne.s32.totalorder %v513, 0
  %vm515 = vcmp.lt.s32.totalorder %v513, 0
  %vm516 = vmand %vm515, %vm514
  %v517 = vadd.s32 %v513, 2
  %v518 = vsel %vm516, %v517, %v513
  %vm519 = vcmp.eq.s32.totalorder %v518, 0
  %vm520 = vmand %vm506, %vm519
  %v521 = vsel %vm520, %v500, -inf
  %v522 = vsel %vm520, %v501, -inf
  %v523 = vsel %vm199, %v521, -inf
  %524 = vmax.xlane.f32.xlu0 %v523
  %v525 = vpop.xlane.xlu0 %524
  %vm526 = vcmask 144384
  %v527 = vsel %vm526, %v522, -inf
  %528 = vmax.xlane.f32.xlu0 %v527
  %v529 = vpop.xlane.xlu0 %528
  %v530 = vsub.s32 %v503, 9
  %vm531 = vcmp.ge.s32.totalorder %v530, 0
  %vm532 = vcmp.lt.s32.totalorder %v530, 9
  %vm533 = vmand %vm531, %vm532
  %vm534 = vcmp.lt.s32.totalorder %v530, 0
  %v535 = vsub.s32 0, %v530
  %v536 = vsel %vm534, %v535, %v530
  %v537 = vshrl.u32 %v536, 1
  %v538 = vand.u32 %v536, 1
  %v539 = vsub.s32 0, %v538
  %v540 = vsel %vm534, %v539, %v538
  %vm541 = vcmp.ne.s32.totalorder %v540, 0
  %vm542 = vcmp.lt.s32.totalorder %v540, 0
  %vm543 = vmand %vm542, %vm541
  %v544 = vadd.s32 %v540, 2
  %v545 = vsel %vm543, %v544, %v540
  %vm546 = vcmp.eq.s32.totalorder %v545, 0
  %vm547 = vmand %vm533, %vm546
  %v548 = vsel %vm547, %v500, -inf
  %v549 = vsel %vm547, %v501, -inf
  %v550 = vsel %vm199, %v548, -inf
  %551 = vmax.xlane.f32.xlu0 %v550
  %v552 = vpop.xlane.xlu0 %551
  %v553 = vsel %vm526, %v549, -inf
  %554 = vmax.xlane.f32.xlu0 %v553
  %v555 = vpop.xlane.xlu0 %554
  %v556 = vsel %vm190, %v525, %v552
  %v557 = vsel %vm190, %v529, %v555
  %v558 = vld [vmem:[%s4] sm:$0xff]
  %v559 = vld [vmem:[%s4 + $0x8] sm:$0x3f]
  %561 = vset.pattern.permute.xlu0 0
  %562 = vperm.xlu0 %561, %v558
  %v563 = vpop.permute.xlu0 %562
  %566 = vset.pattern.permute.xlu0 0
  %567 = vperm.xlu0 %566, %v559
  %v568 = vpop.permute.xlu0 %567
  %v570 = vadd.f32 %v556, %v563
  %v571 = vadd.f32 %v557, %v568
  %vm572 = vcmp.ge.f32.partialorder %v570, 0.0
  %vm573 = vcmp.ge.f32.partialorder %v571, 0.0
  %v574 = vmul.f32 %v570, 0.01
  %v575 = vmul.f32 %v571, 0.01
  %v576 = vsel %vm572, %v570, %v574
  %v577 = vsel %vm573, %v571, %v575
  %v578 = vld [vmem:[%s5] sm:$0xff]
  %v579 = vld [vmem:[%s5 + $0x8] sm:$0x3f]
  %v580 = vld [vmem:[%s6] sm:$0xff]
  %v581 = vld [vmem:[%s6 + $0x8] sm:$0x3f]
  %583 = vset.pattern.permute.xlu0 0
  %584 = vperm.xlu0 %583, %v580
  %v585 = vpop.permute.xlu0 %584
  %588 = vset.pattern.permute.xlu0 0
  %589 = vperm.xlu0 %588, %v581
  %v590 = vpop.permute.xlu0 %589
  %v593 = vsel %vm84, %v578, 0
  %v596 = vsel %vm84, %v579, 0
  %598 = vmatprep.subr.mxu0 0.0
  %599 = vmatpush1.msra.mxu0 %v64
  %600 = vmatprep.subr.mxu0 0.0
  %601 = vmatpush1.msra.mxu0 %v65
  %602 = vmatprep.subr.mxu0 0.0
  %603 = vmatpush1.msra.mxu0 %v66
  %604 = vmatprep.subr.mxu0 0.0
  %605 = vmatpush1.msra.mxu0 %v67
  %606 = vmatprep.subr.mxu0 0.0
  %607 = vmatpush1.msra.mxu0 %v68
  %608 = vmatprep.subr.mxu0 0.0
  %609 = vmatpush1.msra.mxu0 %v93
  %610 = vmatprep.subr.mxu0 0.0
  %611 = vmatpush1.msra.mxu0 0.0
  %612 = vmatprep.subr.mxu0 0.0
  %613 = vmatpush1.msra.mxu0 0.0
  %614 = vmatprep.subr.mxu0 0.0
  %615 = vmatpush1.msra.mxu0 0.0
  %616 = vmatprep.subr.mxu0 0.0
  %617 = vmatpush1.msra.mxu0 0.0
  %618 = vmatprep.subr.mxu0 0.0
  %619 = vmatpush1.msra.mxu0 0.0
  %620 = vmatprep.subr.mxu0 0.0
  %621 = vmatpush1.msra.mxu0 0.0
  %622 = vmatprep.subr.mxu0 0.0
  %623 = vmatpush1.msra.mxu0 0.0
  %624 = vmatprep.subr.mxu0 0.0
  %625 = vmatpush1.msra.mxu0 0.0
  %626 = vmatprep.subr.mxu0 0.0
  %627 = vmatpush1.msra.mxu0 0.0
  %628 = vmatprep.subr.mxu0 0.0
  %629 = vmatpush1.msra.mxu0 0.0
  %630 = vmatprep.subr.mxu0 0.0
  %631 = vmatpush1.msra.mxu0 0.0
  %632 = vmatprep.subr.mxu0 0.0
  %633 = vmatpush1.msra.mxu0 0.0
  %634 = vmatprep.subr.mxu0 0.0
  %635 = vmatpush1.msra.mxu0 0.0
  %636 = vmatprep.subr.mxu0 0.0
  %637 = vmatpush1.msra.mxu0 0.0
  %638 = vmatprep.subr.mxu0 0.0
  %639 = vmatpush1.msra.mxu0 0.0
  %640 = vmatprep.subr.mxu0 0.0
  %641 = vmatpush1.msra.mxu0 0.0
  %642 = vmatprep.subr.mxu0 0.0
  %643 = vmatpush1.msra.mxu0 0.0
  %644 = vmatprep.subr.mxu0 0.0
  %645 = vmatpush1.msra.mxu0 0.0
  %646 = vmatprep.subr.mxu0 0.0
  %647 = vmatpush1.msra.mxu0 0.0
  %648 = vmatprep.subr.mxu0 0.0
  %649 = vmatpush1.msra.mxu0 0.0
  %650 = vmatprep.subr.mxu0 0.0
  %651 = vmatpush1.msra.mxu0 0.0
  %652 = vmatprep.subr.mxu0 0.0
  %653 = vmatpush1.msra.mxu0 0.0
  %654 = vmatprep.subr.mxu0 0.0
  %655 = vmatpush1.msra.mxu0 0.0
  %656 = vmatprep.subr.mxu0 0.0
  %657 = vmatpush1.msra.mxu0 0.0
  %658 = vmatprep.subr.mxu0 0.0
  %659 = vmatpush1.msra.mxu0 0.0
  %660 = vmatprep.subr.mxu0 0.0
  %661 = vmatpush1.msra.mxu0 0.0
  %662 = vmatprep.mubr.f32.mxu0 0.0
  %663 = vmatmul.mubr.f32.gmra.mrb[0].mxu0 %v593
  %v664 = vpop.f32.mrb[0].mxu0
  %v665 = vadd.f32 %v585, %v664
  %v666 = vpop.f32.mrb[0].mxu0
  %667 = vmatprep.mubr.f32.mxu0 0.0
  %668 = vmatmul.mubr.f32.gmra.mrb[0].mxu0 %v596
  %v669 = vpop.f32.mrb[0].mxu0
  %v670 = vadd.f32 %v590, %v669
  %v671 = vpop.f32.mrb[0].mxu0
  %672 = vdwg.mxu0
  %vm673 = vcmp.ge.f32.partialorder %v665, 0.0
  %vm674 = vcmp.ge.f32.partialorder %v670, 0.0
  %v675 = vmul.f32 %v665, 0.01
  %v676 = vmul.f32 %v670, 0.01
  %v677 = vsel %vm673, %v665, %v675
  %v678 = vsel %vm674, %v670, %v676
  %681 = vrot.lane.b32.xlu0 %v677, 1
  %v682 = vpop.permute.xlu0 %681
  %683 = vrot.lane.b32.xlu0 %v678, 1
  %v684 = vpop.permute.xlu0 %683
  %687 = vrot.lane.b32.xlu0 %v677, 3
  %v688 = vpop.permute.xlu0 %687
  %689 = vrot.lane.b32.xlu0 %v678, 3
  %v690 = vpop.permute.xlu0 %689
  %v693 = vsel %vm190, 0.0, %v682
  %v694 = vsel %vm190, 0.0, %v684
  %v695 = vsel %vm193, %v693, 0.0
  %v696 = vsel %vm193, %v694, 0.0
  %v697 = vsel %vm196, %v695, 0.0
  %v698 = vsel %vm196, %v696, 0.0
  %v699 = vsel %vm199, %v697, %v688
  %v700 = vsel %vm199, %v698, %v690
  %v701 = vsel %vm202, %v699, 0.0
  %v702 = vsel %vm202, %v700, 0.0
  %705 = vrot.lane.b32.xlu0 %v701, 120
  %v706 = vpop.permute.xlu0 %705
  %707 = vrot.lane.b32.xlu0 %v702, 120
  %v708 = vpop.permute.xlu0 %707
  %v711 = vsel %vm213, %v701, %v706
  %v712 = vsel %vm213, %v702, %v708
  %v713 = vld [vmem:[%s7] sm:$0xff]
  %v714 = vld [vmem:[%s7 + $0x8] sm:$0x3f]
  %715 = vrot.lane.b32.xlu0 %v701, 126
  %v716 = vpop.permute.xlu0 %715
  %717 = vrot.lane.b32.xlu0 %v702, 126
  %v718 = vpop.permute.xlu0 %717
  %721 = vrot.lane.b32.xlu0 %v701, 118
  %v722 = vpop.permute.xlu0 %721
  %723 = vrot.lane.b32.xlu0 %v702, 118
  %v724 = vpop.permute.xlu0 %723
  %v727 = vsel %vm213, %v716, %v722
  %v728 = vsel %vm213, %v718, %v724
  %s729 = scalar_lea.vmem %s7, 16
  %v730 = vld [vmem:[%s729] sm:$0xff]
  %v731 = vld [vmem:[%s729 + $0x8] sm:$0x3f]
  %v733 = vsel %vm235, %v730, 0
  %v736 = vsel %vm235, %v731, 0
  %v739 = vsel %vm242, %v728, 0
  %741 = vmatprep.subr.mxu0 0.0
  %742 = vmatpush1.msra.mxu0 %v727
  %743 = vmatprep.subr.mxu0 0.0
  %744 = vmatpush1.msra.mxu0 %v739
  %745 = vmatprep.subr.mxu0 0.0
  %746 = vmatpush1.msra.mxu0 0.0
  %747 = vmatprep.subr.mxu0 0.0
  %748 = vmatpush1.msra.mxu0 0.0
  %749 = vmatprep.subr.mxu0 0.0
  %750 = vmatpush1.msra.mxu0 0.0
  %751 = vmatprep.subr.mxu0 0.0
  %752 = vmatpush1.msra.mxu0 0.0
  %753 = vmatprep.subr.mxu0 0.0
  %754 = vmatpush1.msra.mxu0 0.0
  %755 = vmatprep.subr.mxu0 0.0
  %756 = vmatpush1.msra.mxu0 0.0
  %757 = vmatprep.subr.mxu0 0.0
  %758 = vmatpush1.msra.mxu0 0.0
  %759 = vmatprep.subr.mxu0 0.0
  %760 = vmatpush1.msra.mxu0 0.0
  %761 = vmatprep.subr.mxu0 0.0
  %762 = vmatpush1.msra.mxu0 0.0
  %763 = vmatprep.subr.mxu0 0.0
  %764 = vmatpush1.msra.mxu0 0.0
  %765 = vmatprep.subr.mxu0 0.0
  %766 = vmatpush1.msra.mxu0 0.0
  %767 = vmatprep.subr.mxu0 0.0
  %768 = vmatpush1.msra.mxu0 0.0
  %769 = vmatprep.subr.mxu0 0.0
  %770 = vmatpush1.msra.mxu0 0.0
  %771 = vmatprep.subr.mxu0 0.0
  %772 = vmatpush1.msra.mxu0 0.0
  %773 = vmatprep.subr.mxu0 0.0
  %774 = vmatpush1.msra.mxu0 0.0
  %775 = vmatprep.subr.mxu0 0.0
  %776 = vmatpush1.msra.mxu0 0.0
  %777 = vmatprep.subr.mxu0 0.0
  %778 = vmatpush1.msra.mxu0 0.0
  %779 = vmatprep.subr.mxu0 0.0
  %780 = vmatpush1.msra.mxu0 0.0
  %781 = vmatprep.subr.mxu0 0.0
  %782 = vmatpush1.msra.mxu0 0.0
  %783 = vmatprep.subr.mxu0 0.0
  %784 = vmatpush1.msra.mxu0 0.0
  %785 = vmatprep.subr.mxu0 0.0
  %786 = vmatpush1.msra.mxu0 0.0
  %787 = vmatprep.subr.mxu0 0.0
  %788 = vmatpush1.msra.mxu0 0.0
  %789 = vmatprep.subr.mxu0 0.0
  %790 = vmatpush1.msra.mxu0 0.0
  %791 = vmatprep.subr.mxu0 0.0
  %792 = vmatpush1.msra.mxu0 0.0
  %793 = vmatprep.subr.mxu0 0.0
  %794 = vmatpush1.msra.mxu0 0.0
  %795 = vmatprep.subr.mxu0 0.0
  %796 = vmatpush1.msra.mxu0 0.0
  %797 = vmatprep.subr.mxu0 0.0
  %798 = vmatpush1.msra.mxu0 0.0
  %799 = vmatprep.subr.mxu0 0.0
  %800 = vmatpush1.msra.mxu0 0.0
  %801 = vmatprep.subr.mxu0 0.0
  %802 = vmatpush1.msra.mxu0 0.0
  %803 = vmatprep.subr.mxu0 0.0
  %804 = vmatpush1.msra.mxu0 0.0
  %805 = vmatprep.mubr.f32.mxu0 0.0
  %806 = vmatmul.mubr.f32.gmra.mrb[0].mxu0 %v733
  %v807 = vpop.f32.mrb[0].mxu0
  %v808 = vadd.f32 0.0, %v807
  %v809 = vpop.f32.mrb[0].mxu0
  %810 = vmatprep.mubr.f32.mxu0 0.0
  %811 = vmatmul.mubr.f32.gmra.mrb[0].mxu0 %v736
  %v812 = vpop.f32.mrb[0].mxu0
  %v813 = vadd.f32 0.0, %v812
  %v814 = vpop.f32.mrb[0].mxu0
  %815 = vdwg.mxu0
  %v817 = vsel %vm235, %v713, 0
  %v820 = vsel %vm235, %v714, 0
  %v823 = vsel %vm242, %v712, 0
  %825 = vmatprep.subr.mxu0 0.0
  %826 = vmatpush1.msra.mxu0 %v711
  %827 = vmatprep.subr.mxu0 0.0
  %828 = vmatpush1.msra.mxu0 %v823
  %829 = vmatprep.subr.mxu0 0.0
  %830 = vmatpush1.msra.mxu0 0.0
  %831 = vmatprep.subr.mxu0 0.0
  %832 = vmatpush1.msra.mxu0 0.0
  %833 = vmatprep.subr.mxu0 0.0
  %834 = vmatpush1.msra.mxu0 0.0
  %835 = vmatprep.subr.mxu0 0.0
  %836 = vmatpush1.msra.mxu0 0.0
  %837 = vmatprep.subr.mxu0 0.0
  %838 = vmatpush1.msra.mxu0 0.0
  %839 = vmatprep.subr.mxu0 0.0
  %840 = vmatpush1.msra.mxu0 0.0
  %841 = vmatprep.subr.mxu0 0.0
  %842 = vmatpush1.msra.mxu0 0.0
  %843 = vmatprep.subr.mxu0 0.0
  %844 = vmatpush1.msra.mxu0 0.0
  %845 = vmatprep.subr.mxu0 0.0
  %846 = vmatpush1.msra.mxu0 0.0
  %847 = vmatprep.subr.mxu0 0.0
  %848 = vmatpush1.msra.mxu0 0.0
  %849 = vmatprep.subr.mxu0 0.0
  %850 = vmatpush1.msra.mxu0 0.0
  %851 = vmatprep.subr.mxu0 0.0
  %852 = vmatpush1.msra.mxu0 0.0
  %853 = vmatprep.subr.mxu0 0.0
  %854 = vmatpush1.msra.mxu0 0.0
  %855 = vmatprep.subr.mxu0 0.0
  %856 = vmatpush1.msra.mxu0 0.0
  %857 = vmatprep.subr.mxu0 0.0
  %858 = vmatpush1.msra.mxu0 0.0
  %859 = vmatprep.subr.mxu0 0.0
  %860 = vmatpush1.msra.mxu0 0.0
  %861 = vmatprep.subr.mxu0 0.0
  %862 = vmatpush1.msra.mxu0 0.0
  %863 = vmatprep.subr.mxu0 0.0
  %864 = vmatpush1.msra.mxu0 0.0
  %865 = vmatprep.subr.mxu0 0.0
  %866 = vmatpush1.msra.mxu0 0.0
  %867 = vmatprep.subr.mxu0 0.0
  %868 = vmatpush1.msra.mxu0 0.0
  %869 = vmatprep.subr.mxu0 0.0
  %870 = vmatpush1.msra.mxu0 0.0
  %871 = vmatprep.subr.mxu0 0.0
  %872 = vmatpush1.msra.mxu0 0.0
  %873 = vmatprep.subr.mxu0 0.0
  %874 = vmatpush1.msra.mxu0 0.0
  %875 = vmatprep.subr.mxu0 0.0
  %876 = vmatpush1.msra.mxu0 0.0
  %877 = vmatprep.subr.mxu0 0.0
  %878 = vmatpush1.msra.mxu0 0.0
  %879 = vmatprep.subr.mxu0 0.0
  %880 = vmatpush1.msra.mxu0 0.0
  %881 = vmatprep.subr.mxu0 0.0
  %882 = vmatpush1.msra.mxu0 0.0
  %883 = vmatprep.subr.mxu0 0.0
  %884 = vmatpush1.msra.mxu0 0.0
  %885 = vmatprep.subr.mxu0 0.0
  %886 = vmatpush1.msra.mxu0 0.0
  %887 = vmatprep.subr.mxu0 0.0
  %888 = vmatpush1.msra.mxu0 0.0
  %889 = vmatprep.mubr.f32.mxu0 0.0
  %890 = vmatmul.mubr.f32.gmra.mrb[0].mxu0 %v817
  %v891 = vpop.f32.mrb[0].mxu0
  %v892 = vadd.f32 %v808, %v891
  %v893 = vpop.f32.mrb[0].mxu0
  %894 = vmatprep.mubr.f32.mxu0 0.0
  %895 = vmatmul.mubr.f32.gmra.mrb[0].mxu0 %v820
  %v896 = vpop.f32.mrb[0].mxu0
  %v897 = vadd.f32 %v813, %v896
  %v898 = vpop.f32.mrb[0].mxu0
  %899 = vdwg.mxu0
  %900 = vrot.lane.b32.xlu0 %v701, 124
  %v901 = vpop.permute.xlu0 %900
  %902 = vrot.lane.b32.xlu0 %v702, 124
  %v903 = vpop.permute.xlu0 %902
  %906 = vrot.lane.b32.xlu0 %v701, 116
  %v907 = vpop.permute.xlu0 %906
  %908 = vrot.lane.b32.xlu0 %v702, 116
  %v909 = vpop.permute.xlu0 %908
  %v912 = vsel %vm213, %v901, %v907
  %v913 = vsel %vm213, %v903, %v909
  %s914 = scalar_lea.vmem %s7, 32
  %v915 = vld [vmem:[%s914] sm:$0xff]
  %v916 = vld [vmem:[%s914 + $0x8] sm:$0x3f]
  %v918 = vsel %vm235, %v915, 0
  %v921 = vsel %vm235, %v916, 0
  %v924 = vsel %vm242, %v913, 0
  %926 = vmatprep.subr.mxu0 0.0
  %927 = vmatpush1.msra.mxu0 %v912
  %928 = vmatprep.subr.mxu0 0.0
  %929 = vmatpush1.msra.mxu0 %v924
  %930 = vmatprep.subr.mxu0 0.0
  %931 = vmatpush1.msra.mxu0 0.0
  %932 = vmatprep.subr.mxu0 0.0
  %933 = vmatpush1.msra.mxu0 0.0
  %934 = vmatprep.subr.mxu0 0.0
  %935 = vmatpush1.msra.mxu0 0.0
  %936 = vmatprep.subr.mxu0 0.0
  %937 = vmatpush1.msra.mxu0 0.0
  %938 = vmatprep.subr.mxu0 0.0
  %939 = vmatpush1.msra.mxu0 0.0
  %940 = vmatprep.subr.mxu0 0.0
  %941 = vmatpush1.msra.mxu0 0.0
  %942 = vmatprep.subr.mxu0 0.0
  %943 = vmatpush1.msra.mxu0 0.0
  %944 = vmatprep.subr.mxu0 0.0
  %945 = vmatpush1.msra.mxu0 0.0
  %946 = vmatprep.subr.mxu0 0.0
  %947 = vmatpush1.msra.mxu0 0.0
  %948 = vmatprep.subr.mxu0 0.0
  %949 = vmatpush1.msra.mxu0 0.0
  %950 = vmatprep.subr.mxu0 0.0
  %951 = vmatpush1.msra.mxu0 0.0
  %952 = vmatprep.subr.mxu0 0.0
  %953 = vmatpush1.msra.mxu0 0.0
  %954 = vmatprep.subr.mxu0 0.0
  %955 = vmatpush1.msra.mxu0 0.0
  %956 = vmatprep.subr.mxu0 0.0
  %957 = vmatpush1.msra.mxu0 0.0
  %958 = vmatprep.subr.mxu0 0.0
  %959 = vmatpush1.msra.mxu0 0.0
  %960 = vmatprep.subr.mxu0 0.0
  %961 = vmatpush1.msra.mxu0 0.0
  %962 = vmatprep.subr.mxu0 0.0
  %963 = vmatpush1.msra.mxu0 0.0
  %964 = vmatprep.subr.mxu0 0.0
  %965 = vmatpush1.msra.mxu0 0.0
  %966 = vmatprep.subr.mxu0 0.0
  %967 = vmatpush1.msra.mxu0 0.0
  %968 = vmatprep.subr.mxu0 0.0
  %969 = vmatpush1.msra.mxu0 0.0
  %970 = vmatprep.subr.mxu0 0.0
  %971 = vmatpush1.msra.mxu0 0.0
  %972 = vmatprep.subr.mxu0 0.0
  %973 = vmatpush1.msra.mxu0 0.0
  %974 = vmatprep.subr.mxu0 0.0
  %975 = vmatpush1.msra.mxu0 0.0
  %976 = vmatprep.subr.mxu0 0.0
  %977 = vmatpush1.msra.mxu0 0.0
  %978 = vmatprep.subr.mxu0 0.0
  %979 = vmatpush1.msra.mxu0 0.0
  %980 = vmatprep.subr.mxu0 0.0
  %981 = vmatpush1.msra.mxu0 0.0
  %982 = vmatprep.subr.mxu0 0.0
  %983 = vmatpush1.msra.mxu0 0.0
  %984 = vmatprep.subr.mxu0 0.0
  %985 = vmatpush1.msra.mxu0 0.0
  %986 = vmatprep.subr.mxu0 0.0
  %987 = vmatpush1.msra.mxu0 0.0
  %988 = vmatprep.subr.mxu0 0.0
  %989 = vmatpush1.msra.mxu0 0.0
  %990 = vmatprep.mubr.f32.mxu0 0.0
  %991 = vmatmul.mubr.f32.gmra.mrb[0].mxu0 %v918
  %v992 = vpop.f32.mrb[0].mxu0
  %v993 = vadd.f32 0.0, %v992
  %v994 = vpop.f32.mrb[0].mxu0
  %995 = vmatprep.mubr.f32.mxu0 0.0
  %996 = vmatmul.mubr.f32.gmra.mrb[0].mxu0 %v921
  %v997 = vpop.f32.mrb[0].mxu0
  %v998 = vadd.f32 0.0, %v997
  %v999 = vpop.f32.mrb[0].mxu0
  %1000 = vdwg.mxu0
  %v1001 = vadd.f32 %v892, %v993
  %v1002 = vadd.f32 %v897, %v998
  %1003 = vrot.lane.b32.xlu0 %v701, 122
  %v1004 = vpop.permute.xlu0 %1003
  %1005 = vrot.lane.b32.xlu0 %v702, 122
  %v1006 = vpop.permute.xlu0 %1005
  %1009 = vrot.lane.b32.xlu0 %v701, 114
  %v1010 = vpop.permute.xlu0 %1009
  %1011 = vrot.lane.b32.xlu0 %v702, 114
  %v1012 = vpop.permute.xlu0 %1011
  %v1015 = vsel %vm213, %v1004, %v1010
  %v1016 = vsel %vm213, %v1006, %v1012
  %s1017 = scalar_lea.vmem %s7, 48
  %v1018 = vld [vmem:[%s1017] sm:$0xff]
  %v1019 = vld [vmem:[%s1017 + $0x8] sm:$0x3f]
  %v1021 = vsel %vm235, %v1018, 0
  %v1024 = vsel %vm235, %v1019, 0
  %v1027 = vsel %vm242, %v1016, 0
  %1029 = vmatprep.subr.mxu0 0.0
  %1030 = vmatpush1.msra.mxu0 %v1015
  %1031 = vmatprep.subr.mxu0 0.0
  %1032 = vmatpush1.msra.mxu0 %v1027
  %1033 = vmatprep.subr.mxu0 0.0
  %1034 = vmatpush1.msra.mxu0 0.0
  %1035 = vmatprep.subr.mxu0 0.0
  %1036 = vmatpush1.msra.mxu0 0.0
  %1037 = vmatprep.subr.mxu0 0.0
  %1038 = vmatpush1.msra.mxu0 0.0
  %1039 = vmatprep.subr.mxu0 0.0
  %1040 = vmatpush1.msra.mxu0 0.0
  %1041 = vmatprep.subr.mxu0 0.0
  %1042 = vmatpush1.msra.mxu0 0.0
  %1043 = vmatprep.subr.mxu0 0.0
  %1044 = vmatpush1.msra.mxu0 0.0
  %1045 = vmatprep.subr.mxu0 0.0
  %1046 = vmatpush1.msra.mxu0 0.0
  %1047 = vmatprep.subr.mxu0 0.0
  %1048 = vmatpush1.msra.mxu0 0.0
  %1049 = vmatprep.subr.mxu0 0.0
  %1050 = vmatpush1.msra.mxu0 0.0
  %1051 = vmatprep.subr.mxu0 0.0
  %1052 = vmatpush1.msra.mxu0 0.0
  %1053 = vmatprep.subr.mxu0 0.0
  %1054 = vmatpush1.msra.mxu0 0.0
  %1055 = vmatprep.subr.mxu0 0.0
  %1056 = vmatpush1.msra.mxu0 0.0
  %1057 = vmatprep.subr.mxu0 0.0
  %1058 = vmatpush1.msra.mxu0 0.0
  %1059 = vmatprep.subr.mxu0 0.0
  %1060 = vmatpush1.msra.mxu0 0.0
  %1061 = vmatprep.subr.mxu0 0.0
  %1062 = vmatpush1.msra.mxu0 0.0
  %1063 = vmatprep.subr.mxu0 0.0
  %1064 = vmatpush1.msra.mxu0 0.0
  %1065 = vmatprep.subr.mxu0 0.0
  %1066 = vmatpush1.msra.mxu0 0.0
  %1067 = vmatprep.subr.mxu0 0.0
  %1068 = vmatpush1.msra.mxu0 0.0
  %1069 = vmatprep.subr.mxu0 0.0
  %1070 = vmatpush1.msra.mxu0 0.0
  %1071 = vmatprep.subr.mxu0 0.0
  %1072 = vmatpush1.msra.mxu0 0.0
  %1073 = vmatprep.subr.mxu0 0.0
  %1074 = vmatpush1.msra.mxu0 0.0
  %1075 = vmatprep.subr.mxu0 0.0
  %1076 = vmatpush1.msra.mxu0 0.0
  %1077 = vmatprep.subr.mxu0 0.0
  %1078 = vmatpush1.msra.mxu0 0.0
  %1079 = vmatprep.subr.mxu0 0.0
  %1080 = vmatpush1.msra.mxu0 0.0
  %1081 = vmatprep.subr.mxu0 0.0
  %1082 = vmatpush1.msra.mxu0 0.0
  %1083 = vmatprep.subr.mxu0 0.0
  %1084 = vmatpush1.msra.mxu0 0.0
  %1085 = vmatprep.subr.mxu0 0.0
  %1086 = vmatpush1.msra.mxu0 0.0
  %1087 = vmatprep.subr.mxu0 0.0
  %1088 = vmatpush1.msra.mxu0 0.0
  %1089 = vmatprep.subr.mxu0 0.0
  %1090 = vmatpush1.msra.mxu0 0.0
  %1091 = vmatprep.subr.mxu0 0.0
  %1092 = vmatpush1.msra.mxu0 0.0
  %1093 = vmatprep.mubr.f32.mxu0 0.0
  %1094 = vmatmul.mubr.f32.gmra.mrb[0].mxu0 %v1021
  %v1095 = vpop.f32.mrb[0].mxu0
  %v1096 = vadd.f32 0.0, %v1095
  %v1097 = vpop.f32.mrb[0].mxu0
  %1098 = vmatprep.mubr.f32.mxu0 0.0
  %1099 = vmatmul.mubr.f32.gmra.mrb[0].mxu0 %v1024
  %v1100 = vpop.f32.mrb[0].mxu0
  %v1101 = vadd.f32 0.0, %v1100
  %v1102 = vpop.f32.mrb[0].mxu0
  %1103 = vdwg.mxu0
  %v1104 = vadd.f32 %v1001, %v1096
  %v1105 = vadd.f32 %v1002, %v1101
  %1106 = vrot.lane.b32.xlu0 %v701, 112
  %v1107 = vpop.permute.xlu0 %1106
  %1108 = vrot.lane.b32.xlu0 %v702, 112
  %v1109 = vpop.permute.xlu0 %1108
  %v1112 = vsel %vm213, %v706, %v1107
  %v1113 = vsel %vm213, %v708, %v1109
  %s1114 = scalar_lea.vmem %s7, 64
  %v1115 = vld [vmem:[%s1114] sm:$0xff]
  %v1116 = vld [vmem:[%s1114 + $0x8] sm:$0x3f]
  %v1118 = vsel %vm235, %v1115, 0
  %v1121 = vsel %vm235, %v1116, 0
  %v1124 = vsel %vm242, %v1113, 0
  %1126 = vmatprep.subr.mxu0 0.0
  %1127 = vmatpush1.msra.mxu0 %v1112
  %1128 = vmatprep.subr.mxu0 0.0
  %1129 = vmatpush1.msra.mxu0 %v1124
  %1130 = vmatprep.subr.mxu0 0.0
  %1131 = vmatpush1.msra.mxu0 0.0
  %1132 = vmatprep.subr.mxu0 0.0
  %1133 = vmatpush1.msra.mxu0 0.0
  %1134 = vmatprep.subr.mxu0 0.0
  %1135 = vmatpush1.msra.mxu0 0.0
  %1136 = vmatprep.subr.mxu0 0.0
  %1137 = vmatpush1.msra.mxu0 0.0
  %1138 = vmatprep.subr.mxu0 0.0
  %1139 = vmatpush1.msra.mxu0 0.0
  %1140 = vmatprep.subr.mxu0 0.0
  %1141 = vmatpush1.msra.mxu0 0.0
  %1142 = vmatprep.subr.mxu0 0.0
  %1143 = vmatpush1.msra.mxu0 0.0
  %1144 = vmatprep.subr.mxu0 0.0
  %1145 = vmatpush1.msra.mxu0 0.0
  %1146 = vmatprep.subr.mxu0 0.0
  %1147 = vmatpush1.msra.mxu0 0.0
  %1148 = vmatprep.subr.mxu0 0.0
  %1149 = vmatpush1.msra.mxu0 0.0
  %1150 = vmatprep.subr.mxu0 0.0
  %1151 = vmatpush1.msra.mxu0 0.0
  %1152 = vmatprep.subr.mxu0 0.0
  %1153 = vmatpush1.msra.mxu0 0.0
  %1154 = vmatprep.subr.mxu0 0.0
  %1155 = vmatpush1.msra.mxu0 0.0
  %1156 = vmatprep.subr.mxu0 0.0
  %1157 = vmatpush1.msra.mxu0 0.0
  %1158 = vmatprep.subr.mxu0 0.0
  %1159 = vmatpush1.msra.mxu0 0.0
  %1160 = vmatprep.subr.mxu0 0.0
  %1161 = vmatpush1.msra.mxu0 0.0
  %1162 = vmatprep.subr.mxu0 0.0
  %1163 = vmatpush1.msra.mxu0 0.0
  %1164 = vmatprep.subr.mxu0 0.0
  %1165 = vmatpush1.msra.mxu0 0.0
  %1166 = vmatprep.subr.mxu0 0.0
  %1167 = vmatpush1.msra.mxu0 0.0
  %1168 = vmatprep.subr.mxu0 0.0
  %1169 = vmatpush1.msra.mxu0 0.0
  %1170 = vmatprep.subr.mxu0 0.0
  %1171 = vmatpush1.msra.mxu0 0.0
  %1172 = vmatprep.subr.mxu0 0.0
  %1173 = vmatpush1.msra.mxu0 0.0
  %1174 = vmatprep.subr.mxu0 0.0
  %1175 = vmatpush1.msra.mxu0 0.0
  %1176 = vmatprep.subr.mxu0 0.0
  %1177 = vmatpush1.msra.mxu0 0.0
  %1178 = vmatprep.subr.mxu0 0.0
  %1179 = vmatpush1.msra.mxu0 0.0
  %1180 = vmatprep.subr.mxu0 0.0
  %1181 = vmatpush1.msra.mxu0 0.0
  %1182 = vmatprep.subr.mxu0 0.0
  %1183 = vmatpush1.msra.mxu0 0.0
  %1184 = vmatprep.subr.mxu0 0.0
  %1185 = vmatpush1.msra.mxu0 0.0
  %1186 = vmatprep.subr.mxu0 0.0
  %1187 = vmatpush1.msra.mxu0 0.0
  %1188 = vmatprep.subr.mxu0 0.0
  %1189 = vmatpush1.msra.mxu0 0.0
  %1190 = vmatprep.mubr.f32.mxu0 0.0
  %1191 = vmatmul.mubr.f32.gmra.mrb[0].mxu0 %v1118
  %v1192 = vpop.f32.mrb[0].mxu0
  %v1193 = vadd.f32 0.0, %v1192
  %v1194 = vpop.f32.mrb[0].mxu0
  %1195 = vmatprep.mubr.f32.mxu0 0.0
  %1196 = vmatmul.mubr.f32.gmra.mrb[0].mxu0 %v1121
  %v1197 = vpop.f32.mrb[0].mxu0
  %v1198 = vadd.f32 0.0, %v1197
  %v1199 = vpop.f32.mrb[0].mxu0
  %1200 = vdwg.mxu0
  %v1201 = vadd.f32 %v1104, %v1193
  %v1202 = vadd.f32 %v1105, %v1198
  %v1203 = vsel %vm520, %v1201, -inf
  %v1204 = vsel %vm520, %v1202, -inf
  %v1205 = vsel %vm199, %v1203, -inf
  %1206 = vmax.xlane.f32.xlu0 %v1205
  %v1207 = vpop.xlane.xlu0 %1206
  %v1208 = vsel %vm526, %v1204, -inf
  %1209 = vmax.xlane.f32.xlu0 %v1208
  %v1210 = vpop.xlane.xlu0 %1209
  %v1211 = vsel %vm547, %v1201, -inf
  %v1212 = vsel %vm547, %v1202, -inf
  %v1213 = vsel %vm199, %v1211, -inf
  %1214 = vmax.xlane.f32.xlu0 %v1213
  %v1215 = vpop.xlane.xlu0 %1214
  %v1216 = vsel %vm526, %v1212, -inf
  %1217 = vmax.xlane.f32.xlu0 %v1216
  %v1218 = vpop.xlane.xlu0 %1217
  %v1219 = vsel %vm190, %v1207, %v1215
  %v1220 = vsel %vm190, %v1210, %v1218
  %v1221 = vld [vmem:[%s8] sm:$0xff]
  %v1222 = vld [vmem:[%s8 + $0x8] sm:$0x3f]
  %1224 = vset.pattern.permute.xlu0 0
  %1225 = vperm.xlu0 %1224, %v1221
  %v1226 = vpop.permute.xlu0 %1225
  %1229 = vset.pattern.permute.xlu0 0
  %1230 = vperm.xlu0 %1229, %v1222
  %v1231 = vpop.permute.xlu0 %1230
  %v1233 = vadd.f32 %v1219, %v1226
  %v1234 = vadd.f32 %v1220, %v1231
  %vm1235 = vcmp.ge.f32.partialorder %v1233, 0.0
  %vm1236 = vcmp.ge.f32.partialorder %v1234, 0.0
  %v1237 = vmul.f32 %v1233, 0.01
  %v1238 = vmul.f32 %v1234, 0.01
  %v1239 = vsel %vm1235, %v1233, %v1237
  %v1240 = vsel %vm1236, %v1234, %v1238
  %v1241 = vld [vmem:[%s9] sm:$0xff]
  %v1242 = vld [vmem:[%s9 + $0x8] sm:$0x3f]
  %v1243 = vld [vmem:[%s10] sm:$0xff]
  %v1244 = vld [vmem:[%s10 + $0x8] sm:$0x3f]
  %1246 = vset.pattern.permute.xlu0 0
  %1247 = vperm.xlu0 %1246, %v1243
  %v1248 = vpop.permute.xlu0 %1247
  %1251 = vset.pattern.permute.xlu0 0
  %1252 = vperm.xlu0 %1251, %v1244
  %v1253 = vpop.permute.xlu0 %1252
  %v1256 = vsel %vm84, %v1241, 0
  %v1259 = vsel %vm84, %v1242, 0
  %1261 = vmatprep.subr.mxu0 0.0
  %1262 = vmatpush1.msra.mxu0 %v64
  %1263 = vmatprep.subr.mxu0 0.0
  %1264 = vmatpush1.msra.mxu0 %v65
  %1265 = vmatprep.subr.mxu0 0.0
  %1266 = vmatpush1.msra.mxu0 %v66
  %1267 = vmatprep.subr.mxu0 0.0
  %1268 = vmatpush1.msra.mxu0 %v67
  %1269 = vmatprep.subr.mxu0 0.0
  %1270 = vmatpush1.msra.mxu0 %v68
  %1271 = vmatprep.subr.mxu0 0.0
  %1272 = vmatpush1.msra.mxu0 %v93
  %1273 = vmatprep.subr.mxu0 0.0
  %1274 = vmatpush1.msra.mxu0 0.0
  %1275 = vmatprep.subr.mxu0 0.0
  %1276 = vmatpush1.msra.mxu0 0.0
  %1277 = vmatprep.subr.mxu0 0.0
  %1278 = vmatpush1.msra.mxu0 0.0
  %1279 = vmatprep.subr.mxu0 0.0
  %1280 = vmatpush1.msra.mxu0 0.0
  %1281 = vmatprep.subr.mxu0 0.0
  %1282 = vmatpush1.msra.mxu0 0.0
  %1283 = vmatprep.subr.mxu0 0.0
  %1284 = vmatpush1.msra.mxu0 0.0
  %1285 = vmatprep.subr.mxu0 0.0
  %1286 = vmatpush1.msra.mxu0 0.0
  %1287 = vmatprep.subr.mxu0 0.0
  %1288 = vmatpush1.msra.mxu0 0.0
  %1289 = vmatprep.subr.mxu0 0.0
  %1290 = vmatpush1.msra.mxu0 0.0
  %1291 = vmatprep.subr.mxu0 0.0
  %1292 = vmatpush1.msra.mxu0 0.0
  %1293 = vmatprep.subr.mxu0 0.0
  %1294 = vmatpush1.msra.mxu0 0.0
  %1295 = vmatprep.subr.mxu0 0.0
  %1296 = vmatpush1.msra.mxu0 0.0
  %1297 = vmatprep.subr.mxu0 0.0
  %1298 = vmatpush1.msra.mxu0 0.0
  %1299 = vmatprep.subr.mxu0 0.0
  %1300 = vmatpush1.msra.mxu0 0.0
  %1301 = vmatprep.subr.mxu0 0.0
  %1302 = vmatpush1.msra.mxu0 0.0
  %1303 = vmatprep.subr.mxu0 0.0
  %1304 = vmatpush1.msra.mxu0 0.0
  %1305 = vmatprep.subr.mxu0 0.0
  %1306 = vmatpush1.msra.mxu0 0.0
  %1307 = vmatprep.subr.mxu0 0.0
  %1308 = vmatpush1.msra.mxu0 0.0
  %1309 = vmatprep.subr.mxu0 0.0
  %1310 = vmatpush1.msra.mxu0 0.0
  %1311 = vmatprep.subr.mxu0 0.0
  %1312 = vmatpush1.msra.mxu0 0.0
  %1313 = vmatprep.subr.mxu0 0.0
  %1314 = vmatpush1.msra.mxu0 0.0
  %1315 = vmatprep.subr.mxu0 0.0
  %1316 = vmatpush1.msra.mxu0 0.0
  %1317 = vmatprep.subr.mxu0 0.0
  %1318 = vmatpush1.msra.mxu0 0.0
  %1319 = vmatprep.subr.mxu0 0.0
  %1320 = vmatpush1.msra.mxu0 0.0
  %1321 = vmatprep.subr.mxu0 0.0
  %1322 = vmatpush1.msra.mxu0 0.0
  %1323 = vmatprep.subr.mxu0 0.0
  %1324 = vmatpush1.msra.mxu0 0.0
  %1325 = vmatprep.mubr.f32.mxu0 0.0
  %1326 = vmatmul.mubr.f32.gmra.mrb[0].mxu0 %v1256
  %v1327 = vpop.f32.mrb[0].mxu0
  %v1328 = vadd.f32 %v1248, %v1327
  %v1329 = vpop.f32.mrb[0].mxu0
  %1330 = vmatprep.mubr.f32.mxu0 0.0
  %1331 = vmatmul.mubr.f32.gmra.mrb[0].mxu0 %v1259
  %v1332 = vpop.f32.mrb[0].mxu0
  %v1333 = vadd.f32 %v1253, %v1332
  %v1334 = vpop.f32.mrb[0].mxu0
  %1335 = vdwg.mxu0
  %vm1336 = vcmp.ge.f32.partialorder %v1328, 0.0
  %vm1337 = vcmp.ge.f32.partialorder %v1333, 0.0
  %v1338 = vmul.f32 %v1328, 0.01
  %v1339 = vmul.f32 %v1333, 0.01
  %v1340 = vsel %vm1336, %v1328, %v1338
  %v1341 = vsel %vm1337, %v1333, %v1339
  %1344 = vrot.lane.b32.xlu0 %v1340, 1
  %v1345 = vpop.permute.xlu0 %1344
  %1346 = vrot.lane.b32.xlu0 %v1341, 1
  %v1347 = vpop.permute.xlu0 %1346
  %1350 = vrot.lane.b32.xlu0 %v1340, 3
  %v1351 = vpop.permute.xlu0 %1350
  %1352 = vrot.lane.b32.xlu0 %v1341, 3
  %v1353 = vpop.permute.xlu0 %1352
  %v1356 = vsel %vm190, 0.0, %v1345
  %v1357 = vsel %vm190, 0.0, %v1347
  %v1358 = vsel %vm193, %v1356, 0.0
  %v1359 = vsel %vm193, %v1357, 0.0
  %v1360 = vsel %vm196, %v1358, 0.0
  %v1361 = vsel %vm196, %v1359, 0.0
  %v1362 = vsel %vm199, %v1360, %v1351
  %v1363 = vsel %vm199, %v1361, %v1353
  %v1364 = vsel %vm202, %v1362, 0.0
  %v1365 = vsel %vm202, %v1363, 0.0
  %1368 = vrot.lane.b32.xlu0 %v1364, 122
  %v1369 = vpop.permute.xlu0 %1368
  %1370 = vrot.lane.b32.xlu0 %v1365, 122
  %v1371 = vpop.permute.xlu0 %1370
  %vm1374 = vcmask 89088
  %v1375 = vsel %vm1374, %v1364, %v1369
  %v1376 = vsel %vm1374, %v1365, %v1371
  %v1377 = vld [vmem:[%s11] sm:$0xff]
  %v1378 = vld [vmem:[%s11 + $0x8] sm:$0x3f]
  %1379 = vrot.lane.b32.xlu0 %v1364, 127
  %v1380 = vpop.permute.xlu0 %1379
  %1381 = vrot.lane.b32.xlu0 %v1365, 127
  %v1382 = vpop.permute.xlu0 %1381
  %1385 = vrot.lane.b32.xlu0 %v1364, 121
  %v1386 = vpop.permute.xlu0 %1385
  %1387 = vrot.lane.b32.xlu0 %v1365, 121
  %v1388 = vpop.permute.xlu0 %1387
  %v1391 = vsel %vm1374, %v1380, %v1386
  %v1392 = vsel %vm1374, %v1382, %v1388
  %s1393 = scalar_lea.vmem %s11, 16
  %v1394 = vld [vmem:[%s1393] sm:$0xff]
  %v1395 = vld [vmem:[%s1393 + $0x8] sm:$0x3f]
  %v1397 = vsel %vm235, %v1394, 0
  %v1400 = vsel %vm235, %v1395, 0
  %v1403 = vsel %vm242, %v1392, 0
  %1405 = vmatprep.subr.mxu0 0.0
  %1406 = vmatpush1.msra.mxu0 %v1391
  %1407 = vmatprep.subr.mxu0 0.0
  %1408 = vmatpush1.msra.mxu0 %v1403
  %1409 = vmatprep.subr.mxu0 0.0
  %1410 = vmatpush1.msra.mxu0 0.0
  %1411 = vmatprep.subr.mxu0 0.0
  %1412 = vmatpush1.msra.mxu0 0.0
  %1413 = vmatprep.subr.mxu0 0.0
  %1414 = vmatpush1.msra.mxu0 0.0
  %1415 = vmatprep.subr.mxu0 0.0
  %1416 = vmatpush1.msra.mxu0 0.0
  %1417 = vmatprep.subr.mxu0 0.0
  %1418 = vmatpush1.msra.mxu0 0.0
  %1419 = vmatprep.subr.mxu0 0.0
  %1420 = vmatpush1.msra.mxu0 0.0
  %1421 = vmatprep.subr.mxu0 0.0
  %1422 = vmatpush1.msra.mxu0 0.0
  %1423 = vmatprep.subr.mxu0 0.0
  %1424 = vmatpush1.msra.mxu0 0.0
  %1425 = vmatprep.subr.mxu0 0.0
  %1426 = vmatpush1.msra.mxu0 0.0
  %1427 = vmatprep.subr.mxu0 0.0
  %1428 = vmatpush1.msra.mxu0 0.0
  %1429 = vmatprep.subr.mxu0 0.0
  %1430 = vmatpush1.msra.mxu0 0.0
  %1431 = vmatprep.subr.mxu0 0.0
  %1432 = vmatpush1.msra.mxu0 0.0
  %1433 = vmatprep.subr.mxu0 0.0
  %1434 = vmatpush1.msra.mxu0 0.0
  %1435 = vmatprep.subr.mxu0 0.0
  %1436 = vmatpush1.msra.mxu0 0.0
  %1437 = vmatprep.subr.mxu0 0.0
  %1438 = vmatpush1.msra.mxu0 0.0
  %1439 = vmatprep.subr.mxu0 0.0
  %1440 = vmatpush1.msra.mxu0 0.0
  %1441 = vmatprep.subr.mxu0 0.0
  %1442 = vmatpush1.msra.mxu0 0.0
  %1443 = vmatprep.subr.mxu0 0.0
  %1444 = vmatpush1.msra.mxu0 0.0
  %1445 = vmatprep.subr.mxu0 0.0
  %1446 = vmatpush1.msra.mxu0 0.0
  %1447 = vmatprep.subr.mxu0 0.0
  %1448 = vmatpush1.msra.mxu0 0.0
  %1449 = vmatprep.subr.mxu0 0.0
  %1450 = vmatpush1.msra.mxu0 0.0
  %1451 = vmatprep.subr.mxu0 0.0
  %1452 = vmatpush1.msra.mxu0 0.0
  %1453 = vmatprep.subr.mxu0 0.0
  %1454 = vmatpush1.msra.mxu0 0.0
  %1455 = vmatprep.subr.mxu0 0.0
  %1456 = vmatpush1.msra.mxu0 0.0
  %1457 = vmatprep.subr.mxu0 0.0
  %1458 = vmatpush1.msra.mxu0 0.0
  %1459 = vmatprep.subr.mxu0 0.0
  %1460 = vmatpush1.msra.mxu0 0.0
  %1461 = vmatprep.subr.mxu0 0.0
  %1462 = vmatpush1.msra.mxu0 0.0
  %1463 = vmatprep.subr.mxu0 0.0
  %1464 = vmatpush1.msra.mxu0 0.0
  %1465 = vmatprep.subr.mxu0 0.0
  %1466 = vmatpush1.msra.mxu0 0.0
  %1467 = vmatprep.subr.mxu0 0.0
  %1468 = vmatpush1.msra.mxu0 0.0
  %1469 = vmatprep.mubr.f32.mxu0 0.0
  %1470 = vmatmul.mubr.f32.gmra.mrb[0].mxu0 %v1397
  %v1471 = vpop.f32.mrb[0].mxu0
  %v1472 = vadd.f32 0.0, %v1471
  %v1473 = vpop.f32.mrb[0].mxu0
  %1474 = vmatprep.mubr.f32.mxu0 0.0
  %1475 = vmatmul.mubr.f32.gmra.mrb[0].mxu0 %v1400
  %v1476 = vpop.f32.mrb[0].mxu0
  %v1477 = vadd.f32 0.0, %v1476
  %v1478 = vpop.f32.mrb[0].mxu0
  %1479 = vdwg.mxu0
  %v1481 = vsel %vm235, %v1377, 0
  %v1484 = vsel %vm235, %v1378, 0
  %v1487 = vsel %vm242, %v1376, 0
  %1489 = vmatprep.subr.mxu0 0.0
  %1490 = vmatpush1.msra.mxu0 %v1375
  %1491 = vmatprep.subr.mxu0 0.0
  %1492 = vmatpush1.msra.mxu0 %v1487
  %1493 = vmatprep.subr.mxu0 0.0
  %1494 = vmatpush1.msra.mxu0 0.0
  %1495 = vmatprep.subr.mxu0 0.0
  %1496 = vmatpush1.msra.mxu0 0.0
  %1497 = vmatprep.subr.mxu0 0.0
  %1498 = vmatpush1.msra.mxu0 0.0
  %1499 = vmatprep.subr.mxu0 0.0
  %1500 = vmatpush1.msra.mxu0 0.0
  %1501 = vmatprep.subr.mxu0 0.0
  %1502 = vmatpush1.msra.mxu0 0.0
  %1503 = vmatprep.subr.mxu0 0.0
  %1504 = vmatpush1.msra.mxu0 0.0
  %1505 = vmatprep.subr.mxu0 0.0
  %1506 = vmatpush1.msra.mxu0 0.0
  %1507 = vmatprep.subr.mxu0 0.0
  %1508 = vmatpush1.msra.mxu0 0.0
  %1509 = vmatprep.subr.mxu0 0.0
  %1510 = vmatpush1.msra.mxu0 0.0
  %1511 = vmatprep.subr.mxu0 0.0
  %1512 = vmatpush1.msra.mxu0 0.0
  %1513 = vmatprep.subr.mxu0 0.0
  %1514 = vmatpush1.msra.mxu0 0.0
  %1515 = vmatprep.subr.mxu0 0.0
  %1516 = vmatpush1.msra.mxu0 0.0
  %1517 = vmatprep.subr.mxu0 0.0
  %1518 = vmatpush1.msra.mxu0 0.0
  %1519 = vmatprep.subr.mxu0 0.0
  %1520 = vmatpush1.msra.mxu0 0.0
  %1521 = vmatprep.subr.mxu0 0.0
  %1522 = vmatpush1.msra.mxu0 0.0
  %1523 = vmatprep.subr.mxu0 0.0
  %1524 = vmatpush1.msra.mxu0 0.0
  %1525 = vmatprep.subr.mxu0 0.0
  %1526 = vmatpush1.msra.mxu0 0.0
  %1527 = vmatprep.subr.mxu0 0.0
  %1528 = vmatpush1.msra.mxu0 0.0
  %1529 = vmatprep.subr.mxu0 0.0
  %1530 = vmatpush1.msra.mxu0 0.0
  %1531 = vmatprep.subr.mxu0 0.0
  %1532 = vmatpush1.msra.mxu0 0.0
  %1533 = vmatprep.subr.mxu0 0.0
  %1534 = vmatpush1.msra.mxu0 0.0
  %1535 = vmatprep.subr.mxu0 0.0
  %1536 = vmatpush1.msra.mxu0 0.0
  %1537 = vmatprep.subr.mxu0 0.0
  %1538 = vmatpush1.msra.mxu0 0.0
  %1539 = vmatprep.subr.mxu0 0.0
  %1540 = vmatpush1.msra.mxu0 0.0
  %1541 = vmatprep.subr.mxu0 0.0
  %1542 = vmatpush1.msra.mxu0 0.0
  %1543 = vmatprep.subr.mxu0 0.0
  %1544 = vmatpush1.msra.mxu0 0.0
  %1545 = vmatprep.subr.mxu0 0.0
  %1546 = vmatpush1.msra.mxu0 0.0
  %1547 = vmatprep.subr.mxu0 0.0
  %1548 = vmatpush1.msra.mxu0 0.0
  %1549 = vmatprep.subr.mxu0 0.0
  %1550 = vmatpush1.msra.mxu0 0.0
  %1551 = vmatprep.subr.mxu0 0.0
  %1552 = vmatpush1.msra.mxu0 0.0
  %1553 = vmatprep.mubr.f32.mxu0 0.0
  %1554 = vmatmul.mubr.f32.gmra.mrb[0].mxu0 %v1481
  %v1555 = vpop.f32.mrb[0].mxu0
  %v1556 = vadd.f32 %v1472, %v1555
  %v1557 = vpop.f32.mrb[0].mxu0
  %1558 = vmatprep.mubr.f32.mxu0 0.0
  %1559 = vmatmul.mubr.f32.gmra.mrb[0].mxu0 %v1484
  %v1560 = vpop.f32.mrb[0].mxu0
  %v1561 = vadd.f32 %v1477, %v1560
  %v1562 = vpop.f32.mrb[0].mxu0
  %1563 = vdwg.mxu0
  %1564 = vrot.lane.b32.xlu0 %v1364, 126
  %v1565 = vpop.permute.xlu0 %1564
  %1566 = vrot.lane.b32.xlu0 %v1365, 126
  %v1567 = vpop.permute.xlu0 %1566
  %1570 = vrot.lane.b32.xlu0 %v1364, 120
  %v1571 = vpop.permute.xlu0 %1570
  %1572 = vrot.lane.b32.xlu0 %v1365, 120
  %v1573 = vpop.permute.xlu0 %1572
  %v1576 = vsel %vm1374, %v1565, %v1571
  %v1577 = vsel %vm1374, %v1567, %v1573
  %s1578 = scalar_lea.vmem %s11, 32
  %v1579 = vld [vmem:[%s1578] sm:$0xff]
  %v1580 = vld [vmem:[%s1578 + $0x8] sm:$0x3f]
  %v1582 = vsel %vm235, %v1579, 0
  %v1585 = vsel %vm235, %v1580, 0
  %v1588 = vsel %vm242, %v1577, 0
  %1590 = vmatprep.subr.mxu0 0.0
  %1591 = vmatpush1.msra.mxu0 %v1576
  %1592 = vmatprep.subr.mxu0 0.0
  %1593 = vmatpush1.msra.mxu0 %v1588
  %1594 = vmatprep.subr.mxu0 0.0
  %1595 = vmatpush1.msra.mxu0 0.0
  %1596 = vmatprep.subr.mxu0 0.0
  %1597 = vmatpush1.msra.mxu0 0.0
  %1598 = vmatprep.subr.mxu0 0.0
  %1599 = vmatpush1.msra.mxu0 0.0
  %1600 = vmatprep.subr.mxu0 0.0
  %1601 = vmatpush1.msra.mxu0 0.0
  %1602 = vmatprep.subr.mxu0 0.0
  %1603 = vmatpush1.msra.mxu0 0.0
  %1604 = vmatprep.subr.mxu0 0.0
  %1605 = vmatpush1.msra.mxu0 0.0
  %1606 = vmatprep.subr.mxu0 0.0
  %1607 = vmatpush1.msra.mxu0 0.0
  %1608 = vmatprep.subr.mxu0 0.0
  %1609 = vmatpush1.msra.mxu0 0.0
  %1610 = vmatprep.subr.mxu0 0.0
  %1611 = vmatpush1.msra.mxu0 0.0
  %1612 = vmatprep.subr.mxu0 0.0
  %1613 = vmatpush1.msra.mxu0 0.0
  %1614 = vmatprep.subr.mxu0 0.0
  %1615 = vmatpush1.msra.mxu0 0.0
  %1616 = vmatprep.subr.mxu0 0.0
  %1617 = vmatpush1.msra.mxu0 0.0
  %1618 = vmatprep.subr.mxu0 0.0
  %1619 = vmatpush1.msra.mxu0 0.0
  %1620 = vmatprep.subr.mxu0 0.0
  %1621 = vmatpush1.msra.mxu0 0.0
  %1622 = vmatprep.subr.mxu0 0.0
  %1623 = vmatpush1.msra.mxu0 0.0
  %1624 = vmatprep.subr.mxu0 0.0
  %1625 = vmatpush1.msra.mxu0 0.0
  %1626 = vmatprep.subr.mxu0 0.0
  %1627 = vmatpush1.msra.mxu0 0.0
  %1628 = vmatprep.subr.mxu0 0.0
  %1629 = vmatpush1.msra.mxu0 0.0
  %1630 = vmatprep.subr.mxu0 0.0
  %1631 = vmatpush1.msra.mxu0 0.0
  %1632 = vmatprep.subr.mxu0 0.0
  %1633 = vmatpush1.msra.mxu0 0.0
  %1634 = vmatprep.subr.mxu0 0.0
  %1635 = vmatpush1.msra.mxu0 0.0
  %1636 = vmatprep.subr.mxu0 0.0
  %1637 = vmatpush1.msra.mxu0 0.0
  %1638 = vmatprep.subr.mxu0 0.0
  %1639 = vmatpush1.msra.mxu0 0.0
  %1640 = vmatprep.subr.mxu0 0.0
  %1641 = vmatpush1.msra.mxu0 0.0
  %1642 = vmatprep.subr.mxu0 0.0
  %1643 = vmatpush1.msra.mxu0 0.0
  %1644 = vmatprep.subr.mxu0 0.0
  %1645 = vmatpush1.msra.mxu0 0.0
  %1646 = vmatprep.subr.mxu0 0.0
  %1647 = vmatpush1.msra.mxu0 0.0
  %1648 = vmatprep.subr.mxu0 0.0
  %1649 = vmatpush1.msra.mxu0 0.0
  %1650 = vmatprep.subr.mxu0 0.0
  %1651 = vmatpush1.msra.mxu0 0.0
  %1652 = vmatprep.subr.mxu0 0.0
  %1653 = vmatpush1.msra.mxu0 0.0
  %1654 = vmatprep.mubr.f32.mxu0 0.0
  %1655 = vmatmul.mubr.f32.gmra.mrb[0].mxu0 %v1582
  %v1656 = vpop.f32.mrb[0].mxu0
  %v1657 = vadd.f32 0.0, %v1656
  %v1658 = vpop.f32.mrb[0].mxu0
  %1659 = vmatprep.mubr.f32.mxu0 0.0
  %1660 = vmatmul.mubr.f32.gmra.mrb[0].mxu0 %v1585
  %v1661 = vpop.f32.mrb[0].mxu0
  %v1662 = vadd.f32 0.0, %v1661
  %v1663 = vpop.f32.mrb[0].mxu0
  %1664 = vdwg.mxu0
  %v1665 = vadd.f32 %v1556, %v1657
  %v1666 = vadd.f32 %v1561, %v1662
  %1667 = vrot.lane.b32.xlu0 %v1364, 125
  %v1668 = vpop.permute.xlu0 %1667
  %1669 = vrot.lane.b32.xlu0 %v1365, 125
  %v1670 = vpop.permute.xlu0 %1669
  %1673 = vrot.lane.b32.xlu0 %v1364, 119
  %v1674 = vpop.permute.xlu0 %1673
  %1675 = vrot.lane.b32.xlu0 %v1365, 119
  %v1676 = vpop.permute.xlu0 %1675
  %v1679 = vsel %vm1374, %v1668, %v1674
  %v1680 = vsel %vm1374, %v1670, %v1676
  %s1681 = scalar_lea.vmem %s11, 48
  %v1682 = vld [vmem:[%s1681] sm:$0xff]
  %v1683 = vld [vmem:[%s1681 + $0x8] sm:$0x3f]
  %v1685 = vsel %vm235, %v1682, 0
  %v1688 = vsel %vm235, %v1683, 0
  %v1691 = vsel %vm242, %v1680, 0
  %1693 = vmatprep.subr.mxu0 0.0
  %1694 = vmatpush1.msra.mxu0 %v1679
  %1695 = vmatprep.subr.mxu0 0.0
  %1696 = vmatpush1.msra.mxu0 %v1691
  %1697 = vmatprep.subr.mxu0 0.0
  %1698 = vmatpush1.msra.mxu0 0.0
  %1699 = vmatprep.subr.mxu0 0.0
  %1700 = vmatpush1.msra.mxu0 0.0
  %1701 = vmatprep.subr.mxu0 0.0
  %1702 = vmatpush1.msra.mxu0 0.0
  %1703 = vmatprep.subr.mxu0 0.0
  %1704 = vmatpush1.msra.mxu0 0.0
  %1705 = vmatprep.subr.mxu0 0.0
  %1706 = vmatpush1.msra.mxu0 0.0
  %1707 = vmatprep.subr.mxu0 0.0
  %1708 = vmatpush1.msra.mxu0 0.0
  %1709 = vmatprep.subr.mxu0 0.0
  %1710 = vmatpush1.msra.mxu0 0.0
  %1711 = vmatprep.subr.mxu0 0.0
  %1712 = vmatpush1.msra.mxu0 0.0
  %1713 = vmatprep.subr.mxu0 0.0
  %1714 = vmatpush1.msra.mxu0 0.0
  %1715 = vmatprep.subr.mxu0 0.0
  %1716 = vmatpush1.msra.mxu0 0.0
  %1717 = vmatprep.subr.mxu0 0.0
  %1718 = vmatpush1.msra.mxu0 0.0
  %1719 = vmatprep.subr.mxu0 0.0
  %1720 = vmatpush1.msra.mxu0 0.0
  %1721 = vmatprep.subr.mxu0 0.0
  %1722 = vmatpush1.msra.mxu0 0.0
  %1723 = vmatprep.subr.mxu0 0.0
  %1724 = vmatpush1.msra.mxu0 0.0
  %1725 = vmatprep.subr.mxu0 0.0
  %1726 = vmatpush1.msra.mxu0 0.0
  %1727 = vmatprep.subr.mxu0 0.0
  %1728 = vmatpush1.msra.mxu0 0.0
  %1729 = vmatprep.subr.mxu0 0.0
  %1730 = vmatpush1.msra.mxu0 0.0
  %1731 = vmatprep.subr.mxu0 0.0
  %1732 = vmatpush1.msra.mxu0 0.0
  %1733 = vmatprep.subr.mxu0 0.0
  %1734 = vmatpush1.msra.mxu0 0.0
  %1735 = vmatprep.subr.mxu0 0.0
  %1736 = vmatpush1.msra.mxu0 0.0
  %1737 = vmatprep.subr.mxu0 0.0
  %1738 = vmatpush1.msra.mxu0 0.0
  %1739 = vmatprep.subr.mxu0 0.0
  %1740 = vmatpush1.msra.mxu0 0.0
  %1741 = vmatprep.subr.mxu0 0.0
  %1742 = vmatpush1.msra.mxu0 0.0
  %1743 = vmatprep.subr.mxu0 0.0
  %1744 = vmatpush1.msra.mxu0 0.0
  %1745 = vmatprep.subr.mxu0 0.0
  %1746 = vmatpush1.msra.mxu0 0.0
  %1747 = vmatprep.subr.mxu0 0.0
  %1748 = vmatpush1.msra.mxu0 0.0
  %1749 = vmatprep.subr.mxu0 0.0
  %1750 = vmatpush1.msra.mxu0 0.0
  %1751 = vmatprep.subr.mxu0 0.0
  %1752 = vmatpush1.msra.mxu0 0.0
  %1753 = vmatprep.subr.mxu0 0.0
  %1754 = vmatpush1.msra.mxu0 0.0
  %1755 = vmatprep.subr.mxu0 0.0
  %1756 = vmatpush1.msra.mxu0 0.0
  %1757 = vmatprep.mubr.f32.mxu0 0.0
  %1758 = vmatmul.mubr.f32.gmra.mrb[0].mxu0 %v1685
  %v1759 = vpop.f32.mrb[0].mxu0
  %v1760 = vadd.f32 0.0, %v1759
  %v1761 = vpop.f32.mrb[0].mxu0
  %1762 = vmatprep.mubr.f32.mxu0 0.0
  %1763 = vmatmul.mubr.f32.gmra.mrb[0].mxu0 %v1688
  %v1764 = vpop.f32.mrb[0].mxu0
  %v1765 = vadd.f32 0.0, %v1764
  %v1766 = vpop.f32.mrb[0].mxu0
  %1767 = vdwg.mxu0
  %v1768 = vadd.f32 %v1665, %v1760
  %v1769 = vadd.f32 %v1666, %v1765
  %1770 = vrot.lane.b32.xlu0 %v1364, 124
  %v1771 = vpop.permute.xlu0 %1770
  %1772 = vrot.lane.b32.xlu0 %v1365, 124
  %v1773 = vpop.permute.xlu0 %1772
  %1776 = vrot.lane.b32.xlu0 %v1364, 118
  %v1777 = vpop.permute.xlu0 %1776
  %1778 = vrot.lane.b32.xlu0 %v1365, 118
  %v1779 = vpop.permute.xlu0 %1778
  %v1782 = vsel %vm1374, %v1771, %v1777
  %v1783 = vsel %vm1374, %v1773, %v1779
  %s1784 = scalar_lea.vmem %s11, 64
  %v1785 = vld [vmem:[%s1784] sm:$0xff]
  %v1786 = vld [vmem:[%s1784 + $0x8] sm:$0x3f]
  %v1788 = vsel %vm235, %v1785, 0
  %v1791 = vsel %vm235, %v1786, 0
  %v1794 = vsel %vm242, %v1783, 0
  %1796 = vmatprep.subr.mxu0 0.0
  %1797 = vmatpush1.msra.mxu0 %v1782
  %1798 = vmatprep.subr.mxu0 0.0
  %1799 = vmatpush1.msra.mxu0 %v1794
  %1800 = vmatprep.subr.mxu0 0.0
  %1801 = vmatpush1.msra.mxu0 0.0
  %1802 = vmatprep.subr.mxu0 0.0
  %1803 = vmatpush1.msra.mxu0 0.0
  %1804 = vmatprep.subr.mxu0 0.0
  %1805 = vmatpush1.msra.mxu0 0.0
  %1806 = vmatprep.subr.mxu0 0.0
  %1807 = vmatpush1.msra.mxu0 0.0
  %1808 = vmatprep.subr.mxu0 0.0
  %1809 = vmatpush1.msra.mxu0 0.0
  %1810 = vmatprep.subr.mxu0 0.0
  %1811 = vmatpush1.msra.mxu0 0.0
  %1812 = vmatprep.subr.mxu0 0.0
  %1813 = vmatpush1.msra.mxu0 0.0
  %1814 = vmatprep.subr.mxu0 0.0
  %1815 = vmatpush1.msra.mxu0 0.0
  %1816 = vmatprep.subr.mxu0 0.0
  %1817 = vmatpush1.msra.mxu0 0.0
  %1818 = vmatprep.subr.mxu0 0.0
  %1819 = vmatpush1.msra.mxu0 0.0
  %1820 = vmatprep.subr.mxu0 0.0
  %1821 = vmatpush1.msra.mxu0 0.0
  %1822 = vmatprep.subr.mxu0 0.0
  %1823 = vmatpush1.msra.mxu0 0.0
  %1824 = vmatprep.subr.mxu0 0.0
  %1825 = vmatpush1.msra.mxu0 0.0
  %1826 = vmatprep.subr.mxu0 0.0
  %1827 = vmatpush1.msra.mxu0 0.0
  %1828 = vmatprep.subr.mxu0 0.0
  %1829 = vmatpush1.msra.mxu0 0.0
  %1830 = vmatprep.subr.mxu0 0.0
  %1831 = vmatpush1.msra.mxu0 0.0
  %1832 = vmatprep.subr.mxu0 0.0
  %1833 = vmatpush1.msra.mxu0 0.0
  %1834 = vmatprep.subr.mxu0 0.0
  %1835 = vmatpush1.msra.mxu0 0.0
  %1836 = vmatprep.subr.mxu0 0.0
  %1837 = vmatpush1.msra.mxu0 0.0
  %1838 = vmatprep.subr.mxu0 0.0
  %1839 = vmatpush1.msra.mxu0 0.0
  %1840 = vmatprep.subr.mxu0 0.0
  %1841 = vmatpush1.msra.mxu0 0.0
  %1842 = vmatprep.subr.mxu0 0.0
  %1843 = vmatpush1.msra.mxu0 0.0
  %1844 = vmatprep.subr.mxu0 0.0
  %1845 = vmatpush1.msra.mxu0 0.0
  %1846 = vmatprep.subr.mxu0 0.0
  %1847 = vmatpush1.msra.mxu0 0.0
  %1848 = vmatprep.subr.mxu0 0.0
  %1849 = vmatpush1.msra.mxu0 0.0
  %1850 = vmatprep.subr.mxu0 0.0
  %1851 = vmatpush1.msra.mxu0 0.0
  %1852 = vmatprep.subr.mxu0 0.0
  %1853 = vmatpush1.msra.mxu0 0.0
  %1854 = vmatprep.subr.mxu0 0.0
  %1855 = vmatpush1.msra.mxu0 0.0
  %1856 = vmatprep.subr.mxu0 0.0
  %1857 = vmatpush1.msra.mxu0 0.0
  %1858 = vmatprep.subr.mxu0 0.0
  %1859 = vmatpush1.msra.mxu0 0.0
  %1860 = vmatprep.mubr.f32.mxu0 0.0
  %1861 = vmatmul.mubr.f32.gmra.mrb[0].mxu0 %v1788
  %v1862 = vpop.f32.mrb[0].mxu0
  %v1863 = vadd.f32 0.0, %v1862
  %v1864 = vpop.f32.mrb[0].mxu0
  %1865 = vmatprep.mubr.f32.mxu0 0.0
  %1866 = vmatmul.mubr.f32.gmra.mrb[0].mxu0 %v1791
  %v1867 = vpop.f32.mrb[0].mxu0
  %v1868 = vadd.f32 0.0, %v1867
  %v1869 = vpop.f32.mrb[0].mxu0
  %1870 = vdwg.mxu0
  %v1871 = vadd.f32 %v1768, %v1863
  %v1872 = vadd.f32 %v1769, %v1868
  %1873 = vrot.lane.b32.xlu0 %v1364, 123
  %v1874 = vpop.permute.xlu0 %1873
  %1875 = vrot.lane.b32.xlu0 %v1365, 123
  %v1876 = vpop.permute.xlu0 %1875
  %1879 = vrot.lane.b32.xlu0 %v1364, 117
  %v1880 = vpop.permute.xlu0 %1879
  %1881 = vrot.lane.b32.xlu0 %v1365, 117
  %v1882 = vpop.permute.xlu0 %1881
  %v1885 = vsel %vm1374, %v1874, %v1880
  %v1886 = vsel %vm1374, %v1876, %v1882
  %s1887 = scalar_lea.vmem %s11, 80
  %v1888 = vld [vmem:[%s1887] sm:$0xff]
  %v1889 = vld [vmem:[%s1887 + $0x8] sm:$0x3f]
  %v1891 = vsel %vm235, %v1888, 0
  %v1894 = vsel %vm235, %v1889, 0
  %v1897 = vsel %vm242, %v1886, 0
  %1899 = vmatprep.subr.mxu0 0.0
  %1900 = vmatpush1.msra.mxu0 %v1885
  %1901 = vmatprep.subr.mxu0 0.0
  %1902 = vmatpush1.msra.mxu0 %v1897
  %1903 = vmatprep.subr.mxu0 0.0
  %1904 = vmatpush1.msra.mxu0 0.0
  %1905 = vmatprep.subr.mxu0 0.0
  %1906 = vmatpush1.msra.mxu0 0.0
  %1907 = vmatprep.subr.mxu0 0.0
  %1908 = vmatpush1.msra.mxu0 0.0
  %1909 = vmatprep.subr.mxu0 0.0
  %1910 = vmatpush1.msra.mxu0 0.0
  %1911 = vmatprep.subr.mxu0 0.0
  %1912 = vmatpush1.msra.mxu0 0.0
  %1913 = vmatprep.subr.mxu0 0.0
  %1914 = vmatpush1.msra.mxu0 0.0
  %1915 = vmatprep.subr.mxu0 0.0
  %1916 = vmatpush1.msra.mxu0 0.0
  %1917 = vmatprep.subr.mxu0 0.0
  %1918 = vmatpush1.msra.mxu0 0.0
  %1919 = vmatprep.subr.mxu0 0.0
  %1920 = vmatpush1.msra.mxu0 0.0
  %1921 = vmatprep.subr.mxu0 0.0
  %1922 = vmatpush1.msra.mxu0 0.0
  %1923 = vmatprep.subr.mxu0 0.0
  %1924 = vmatpush1.msra.mxu0 0.0
  %1925 = vmatprep.subr.mxu0 0.0
  %1926 = vmatpush1.msra.mxu0 0.0
  %1927 = vmatprep.subr.mxu0 0.0
  %1928 = vmatpush1.msra.mxu0 0.0
  %1929 = vmatprep.subr.mxu0 0.0
  %1930 = vmatpush1.msra.mxu0 0.0
  %1931 = vmatprep.subr.mxu0 0.0
  %1932 = vmatpush1.msra.mxu0 0.0
  %1933 = vmatprep.subr.mxu0 0.0
  %1934 = vmatpush1.msra.mxu0 0.0
  %1935 = vmatprep.subr.mxu0 0.0
  %1936 = vmatpush1.msra.mxu0 0.0
  %1937 = vmatprep.subr.mxu0 0.0
  %1938 = vmatpush1.msra.mxu0 0.0
  %1939 = vmatprep.subr.mxu0 0.0
  %1940 = vmatpush1.msra.mxu0 0.0
  %1941 = vmatprep.subr.mxu0 0.0
  %1942 = vmatpush1.msra.mxu0 0.0
  %1943 = vmatprep.subr.mxu0 0.0
  %1944 = vmatpush1.msra.mxu0 0.0
  %1945 = vmatprep.subr.mxu0 0.0
  %1946 = vmatpush1.msra.mxu0 0.0
  %1947 = vmatprep.subr.mxu0 0.0
  %1948 = vmatpush1.msra.mxu0 0.0
  %1949 = vmatprep.subr.mxu0 0.0
  %1950 = vmatpush1.msra.mxu0 0.0
  %1951 = vmatprep.subr.mxu0 0.0
  %1952 = vmatpush1.msra.mxu0 0.0
  %1953 = vmatprep.subr.mxu0 0.0
  %1954 = vmatpush1.msra.mxu0 0.0
  %1955 = vmatprep.subr.mxu0 0.0
  %1956 = vmatpush1.msra.mxu0 0.0
  %1957 = vmatprep.subr.mxu0 0.0
  %1958 = vmatpush1.msra.mxu0 0.0
  %1959 = vmatprep.subr.mxu0 0.0
  %1960 = vmatpush1.msra.mxu0 0.0
  %1961 = vmatprep.subr.mxu0 0.0
  %1962 = vmatpush1.msra.mxu0 0.0
  %1963 = vmatprep.mubr.f32.mxu0 0.0
  %1964 = vmatmul.mubr.f32.gmra.mrb[0].mxu0 %v1891
  %v1965 = vpop.f32.mrb[0].mxu0
  %v1966 = vadd.f32 0.0, %v1965
  %v1967 = vpop.f32.mrb[0].mxu0
  %1968 = vmatprep.mubr.f32.mxu0 0.0
  %1969 = vmatmul.mubr.f32.gmra.mrb[0].mxu0 %v1894
  %v1970 = vpop.f32.mrb[0].mxu0
  %v1971 = vadd.f32 0.0, %v1970
  %v1972 = vpop.f32.mrb[0].mxu0
  %1973 = vdwg.mxu0
  %v1974 = vadd.f32 %v1871, %v1966
  %v1975 = vadd.f32 %v1872, %v1971
  %1976 = vrot.lane.b32.xlu0 %v1364, 116
  %v1977 = vpop.permute.xlu0 %1976
  %1978 = vrot.lane.b32.xlu0 %v1365, 116
  %v1979 = vpop.permute.xlu0 %1978
  %v1982 = vsel %vm1374, %v1369, %v1977
  %v1983 = vsel %vm1374, %v1371, %v1979
  %s1984 = scalar_lea.vmem %s11, 96
  %v1985 = vld [vmem:[%s1984] sm:$0xff]
  %v1986 = vld [vmem:[%s1984 + $0x8] sm:$0x3f]
  %v1988 = vsel %vm235, %v1985, 0
  %v1991 = vsel %vm235, %v1986, 0
  %v1994 = vsel %vm242, %v1983, 0
  %1996 = vmatprep.subr.mxu0 0.0
  %1997 = vmatpush1.msra.mxu0 %v1982
  %1998 = vmatprep.subr.mxu0 0.0
  %1999 = vmatpush1.msra.mxu0 %v1994
  %2000 = vmatprep.subr.mxu0 0.0
  %2001 = vmatpush1.msra.mxu0 0.0
  %2002 = vmatprep.subr.mxu0 0.0
  %2003 = vmatpush1.msra.mxu0 0.0
  %2004 = vmatprep.subr.mxu0 0.0
  %2005 = vmatpush1.msra.mxu0 0.0
  %2006 = vmatprep.subr.mxu0 0.0
  %2007 = vmatpush1.msra.mxu0 0.0
  %2008 = vmatprep.subr.mxu0 0.0
  %2009 = vmatpush1.msra.mxu0 0.0
  %2010 = vmatprep.subr.mxu0 0.0
  %2011 = vmatpush1.msra.mxu0 0.0
  %2012 = vmatprep.subr.mxu0 0.0
  %2013 = vmatpush1.msra.mxu0 0.0
  %2014 = vmatprep.subr.mxu0 0.0
  %2015 = vmatpush1.msra.mxu0 0.0
  %2016 = vmatprep.subr.mxu0 0.0
  %2017 = vmatpush1.msra.mxu0 0.0
  %2018 = vmatprep.subr.mxu0 0.0
  %2019 = vmatpush1.msra.mxu0 0.0
  %2020 = vmatprep.subr.mxu0 0.0
  %2021 = vmatpush1.msra.mxu0 0.0
  %2022 = vmatprep.subr.mxu0 0.0
  %2023 = vmatpush1.msra.mxu0 0.0
  %2024 = vmatprep.subr.mxu0 0.0
  %2025 = vmatpush1.msra.mxu0 0.0
  %2026 = vmatprep.subr.mxu0 0.0
  %2027 = vmatpush1.msra.mxu0 0.0
  %2028 = vmatprep.subr.mxu0 0.0
  %2029 = vmatpush1.msra.mxu0 0.0
  %2030 = vmatprep.subr.mxu0 0.0
  %2031 = vmatpush1.msra.mxu0 0.0
  %2032 = vmatprep.subr.mxu0 0.0
  %2033 = vmatpush1.msra.mxu0 0.0
  %2034 = vmatprep.subr.mxu0 0.0
  %2035 = vmatpush1.msra.mxu0 0.0
  %2036 = vmatprep.subr.mxu0 0.0
  %2037 = vmatpush1.msra.mxu0 0.0
  %2038 = vmatprep.subr.mxu0 0.0
  %2039 = vmatpush1.msra.mxu0 0.0
  %2040 = vmatprep.subr.mxu0 0.0
  %2041 = vmatpush1.msra.mxu0 0.0
  %2042 = vmatprep.subr.mxu0 0.0
  %2043 = vmatpush1.msra.mxu0 0.0
  %2044 = vmatprep.subr.mxu0 0.0
  %2045 = vmatpush1.msra.mxu0 0.0
  %2046 = vmatprep.subr.mxu0 0.0
  %2047 = vmatpush1.msra.mxu0 0.0
  %2048 = vmatprep.subr.mxu0 0.0
  %2049 = vmatpush1.msra.mxu0 0.0
  %2050 = vmatprep.subr.mxu0 0.0
  %2051 = vmatpush1.msra.mxu0 0.0
  %2052 = vmatprep.subr.mxu0 0.0
  %2053 = vmatpush1.msra.mxu0 0.0
  %2054 = vmatprep.subr.mxu0 0.0
  %2055 = vmatpush1.msra.mxu0 0.0
  %2056 = vmatprep.subr.mxu0 0.0
  %2057 = vmatpush1.msra.mxu0 0.0
  %2058 = vmatprep.subr.mxu0 0.0
  %2059 = vmatpush1.msra.mxu0 0.0
  %2060 = vmatprep.mubr.f32.mxu0 0.0
  %2061 = vmatmul.mubr.f32.gmra.mrb[0].mxu0 %v1988
  %v2062 = vpop.f32.mrb[0].mxu0
  %v2063 = vadd.f32 0.0, %v2062
  %v2064 = vpop.f32.mrb[0].mxu0
  %2065 = vmatprep.mubr.f32.mxu0 0.0
  %2066 = vmatmul.mubr.f32.gmra.mrb[0].mxu0 %v1991
  %v2067 = vpop.f32.mrb[0].mxu0
  %v2068 = vadd.f32 0.0, %v2067
  %v2069 = vpop.f32.mrb[0].mxu0
  %2070 = vdwg.mxu0
  %v2071 = vadd.f32 %v1974, %v2063
  %v2072 = vadd.f32 %v1975, %v2068
  %vm2073 = vcmp.lt.s32.totalorder %v503, 11
  %vm2074 = vmand %vm504, %vm2073
  %vm2075 = vmand %vm2074, %vm519
  %v2076 = vsel %vm2075, %v2071, -inf
  %v2077 = vsel %vm2075, %v2072, -inf
  %vm2078 = vcmask 179200
  %v2079 = vsel %vm2078, %v2076, -inf
  %2080 = vmax.xlane.f32.xlu0 %v2079
  %v2081 = vpop.xlane.xlu0 %2080
  %vm2082 = vcmask 177152
  %v2083 = vsel %vm2082, %v2077, -inf
  %2084 = vmax.xlane.f32.xlu0 %v2083
  %v2085 = vpop.xlane.xlu0 %2084
  %v2086 = vsub.s32 %v503, 11
  %vm2087 = vcmp.ge.s32.totalorder %v2086, 0
  %vm2088 = vcmp.lt.s32.totalorder %v2086, 11
  %vm2089 = vmand %vm2087, %vm2088
  %vm2090 = vcmp.lt.s32.totalorder %v2086, 0
  %v2091 = vsub.s32 0, %v2086
  %v2092 = vsel %vm2090, %v2091, %v2086
  %v2093 = vshrl.u32 %v2092, 1
  %v2094 = vand.u32 %v2092, 1
  %v2095 = vsub.s32 0, %v2094
  %v2096 = vsel %vm2090, %v2095, %v2094
  %vm2097 = vcmp.ne.s32.totalorder %v2096, 0
  %vm2098 = vcmp.lt.s32.totalorder %v2096, 0
  %vm2099 = vmand %vm2098, %vm2097
  %v2100 = vadd.s32 %v2096, 2
  %v2101 = vsel %vm2099, %v2100, %v2096
  %vm2102 = vcmp.eq.s32.totalorder %v2101, 0
  %vm2103 = vmand %vm2089, %vm2102
  %v2104 = vsel %vm2103, %v2071, -inf
  %v2105 = vsel %vm2103, %v2072, -inf
  %v2106 = vsel %vm2078, %v2104, -inf
  %2107 = vmax.xlane.f32.xlu0 %v2106
  %v2108 = vpop.xlane.xlu0 %2107
  %v2109 = vsel %vm2082, %v2105, -inf
  %2110 = vmax.xlane.f32.xlu0 %v2109
  %v2111 = vpop.xlane.xlu0 %2110
  %v2112 = vsel %vm190, %v2081, %v2108
  %v2113 = vsel %vm190, %v2085, %v2111
  %v2114 = vld [vmem:[%s12] sm:$0xff]
  %v2115 = vld [vmem:[%s12 + $0x8] sm:$0x3f]
  %2117 = vset.pattern.permute.xlu0 0
  %2118 = vperm.xlu0 %2117, %v2114
  %v2119 = vpop.permute.xlu0 %2118
  %2122 = vset.pattern.permute.xlu0 0
  %2123 = vperm.xlu0 %2122, %v2115
  %v2124 = vpop.permute.xlu0 %2123
  %v2126 = vadd.f32 %v2112, %v2119
  %v2127 = vadd.f32 %v2113, %v2124
  %vm2128 = vcmp.ge.f32.partialorder %v2126, 0.0
  %vm2129 = vcmp.ge.f32.partialorder %v2127, 0.0
  %v2130 = vmul.f32 %v2126, 0.01
  %v2131 = vmul.f32 %v2127, 0.01
  %v2132 = vsel %vm2128, %v2126, %v2130
  %v2133 = vsel %vm2129, %v2127, %v2131
  %v2134 = vld [vmem:[%s13] sm:$0xff]
  %v2135 = vld [vmem:[%s13 + $0x8] sm:$0xff]
  %v2136 = vld [vmem:[%s13 + $0x10] sm:$0xff]
  %v2137 = vld [vmem:[%s13 + $0x18] sm:$0xff]
  %v2138 = vld [vmem:[%s13 + $0x20] sm:$0xff]
  %v2139 = vld [vmem:[%s13 + $0x28] sm:$0xff]
  %v2140 = vld [vmem:[%s13 + $0x30] sm:$0xff]
  %v2141 = vld [vmem:[%s13 + $0x38] sm:$0xff]
  %s2142 = scalar_lea.vmem %s13, 64
  %v2143 = vld [vmem:[%s2142] sm:$0xff]
  %v2144 = vld [vmem:[%s2142 + $0x8] sm:$0xff]
  %v2145 = vld [vmem:[%s2142 + $0x10] sm:$0xff]
  %v2146 = vld [vmem:[%s2142 + $0x18] sm:$0xff]
  %v2147 = vld [vmem:[%s2142 + $0x20] sm:$0xff]
  %v2148 = vld [vmem:[%s2142 + $0x28] sm:$0xff]
  %v2149 = vld [vmem:[%s2142 + $0x30] sm:$0xff]
  %v2150 = vld [vmem:[%s2142 + $0x38] sm:$0xff]
  %v2152 = vsel %vm235, %v2143, 0
  %v2155 = vsel %vm235, %v2144, 0
  %v2158 = vsel %vm235, %v2145, 0
  %v2161 = vsel %vm235, %v2146, 0
  %v2164 = vsel %vm235, %v2147, 0
  %v2167 = vsel %vm235, %v2148, 0
  %v2170 = vsel %vm235, %v2149, 0
  %v2173 = vsel %vm235, %v2150, 0
  %v2176 = vsel %vm242, %v1240, 0
  %2178 = vmatprep.subr.mxu0 0.0
  %2179 = vmatpush1.msra.mxu0 %v1239
  %2180 = vmatprep.subr.mxu0 0.0
  %2181 = vmatpush1.msra.mxu0 %v2176
  %2182 = vmatprep.subr.mxu0 0.0
  %2183 = vmatpush1.msra.mxu0 0.0
  %2184 = vmatprep.subr.mxu0 0.0
  %2185 = vmatpush1.msra.mxu0 0.0
  %2186 = vmatprep.subr.mxu0 0.0
  %2187 = vmatpush1.msra.mxu0 0.0
  %2188 = vmatprep.subr.mxu0 0.0
  %2189 = vmatpush1.msra.mxu0 0.0
  %2190 = vmatprep.subr.mxu0 0.0
  %2191 = vmatpush1.msra.mxu0 0.0
  %2192 = vmatprep.subr.mxu0 0.0
  %2193 = vmatpush1.msra.mxu0 0.0
  %2194 = vmatprep.subr.mxu0 0.0
  %2195 = vmatpush1.msra.mxu0 0.0
  %2196 = vmatprep.subr.mxu0 0.0
  %2197 = vmatpush1.msra.mxu0 0.0
  %2198 = vmatprep.subr.mxu0 0.0
  %2199 = vmatpush1.msra.mxu0 0.0
  %2200 = vmatprep.subr.mxu0 0.0
  %2201 = vmatpush1.msra.mxu0 0.0
  %2202 = vmatprep.subr.mxu0 0.0
  %2203 = vmatpush1.msra.mxu0 0.0
  %2204 = vmatprep.subr.mxu0 0.0
  %2205 = vmatpush1.msra.mxu0 0.0
  %2206 = vmatprep.subr.mxu0 0.0
  %2207 = vmatpush1.msra.mxu0 0.0
  %2208 = vmatprep.subr.mxu0 0.0
  %2209 = vmatpush1.msra.mxu0 0.0
  %2210 = vmatprep.subr.mxu0 0.0
  %2211 = vmatpush1.msra.mxu0 0.0
  %2212 = vmatprep.subr.mxu0 0.0
  %2213 = vmatpush1.msra.mxu0 0.0
  %2214 = vmatprep.subr.mxu0 0.0
  %2215 = vmatpush1.msra.mxu0 0.0
  %2216 = vmatprep.subr.mxu0 0.0
  %2217 = vmatpush1.msra.mxu0 0.0
  %2218 = vmatprep.subr.mxu0 0.0
  %2219 = vmatpush1.msra.mxu0 0.0
  %2220 = vmatprep.subr.mxu0 0.0
  %2221 = vmatpush1.msra.mxu0 0.0
  %2222 = vmatprep.subr.mxu0 0.0
  %2223 = vmatpush1.msra.mxu0 0.0
  %2224 = vmatprep.subr.mxu0 0.0
  %2225 = vmatpush1.msra.mxu0 0.0
  %2226 = vmatprep.subr.mxu0 0.0
  %2227 = vmatpush1.msra.mxu0 0.0
  %2228 = vmatprep.subr.mxu0 0.0
  %2229 = vmatpush1.msra.mxu0 0.0
  %2230 = vmatprep.subr.mxu0 0.0
  %2231 = vmatpush1.msra.mxu0 0.0
  %2232 = vmatprep.subr.mxu0 0.0
  %2233 = vmatpush1.msra.mxu0 0.0
  %2234 = vmatprep.subr.mxu0 0.0
  %2235 = vmatpush1.msra.mxu0 0.0
  %2236 = vmatprep.subr.mxu0 0.0
  %2237 = vmatpush1.msra.mxu0 0.0
  %2238 = vmatprep.subr.mxu0 0.0
  %2239 = vmatpush1.msra.mxu0 0.0
  %2240 = vmatprep.subr.mxu0 0.0
  %2241 = vmatpush1.msra.mxu0 0.0
  %2242 = vmatprep.mubr.f32.mxu0 0.0
  %2243 = vmatmul.mubr.f32.gmra.mrb[0].mxu0 %v2152
  %v2244 = vpop.f32.mrb[0].mxu0
  %v2245 = vadd.f32 0.0, %v2244
  %v2246 = vpop.f32.mrb[0].mxu0
  %2247 = vmatprep.mubr.f32.mxu0 0.0
  %2248 = vmatmul.mubr.f32.gmra.mrb[0].mxu0 %v2155
  %v2249 = vpop.f32.mrb[0].mxu0
  %v2250 = vadd.f32 0.0, %v2249
  %v2251 = vpop.f32.mrb[0].mxu0
  %2252 = vmatprep.mubr.f32.mxu0 0.0
  %2253 = vmatmul.mubr.f32.gmra.mrb[0].mxu0 %v2158
  %v2254 = vpop.f32.mrb[0].mxu0
  %v2255 = vadd.f32 0.0, %v2254
  %v2256 = vpop.f32.mrb[0].mxu0
  %2257 = vmatprep.mubr.f32.mxu0 0.0
  %2258 = vmatmul.mubr.f32.gmra.mrb[0].mxu0 %v2161
  %v2259 = vpop.f32.mrb[0].mxu0
  %v2260 = vadd.f32 0.0, %v2259
  %v2261 = vpop.f32.mrb[0].mxu0
  %2262 = vmatprep.mubr.f32.mxu0 0.0
  %2263 = vmatmul.mubr.f32.gmra.mrb[0].mxu0 %v2164
  %v2264 = vpop.f32.mrb[0].mxu0
  %v2265 = vadd.f32 0.0, %v2264
  %v2266 = vpop.f32.mrb[0].mxu0
  %2267 = vmatprep.mubr.f32.mxu0 0.0
  %2268 = vmatmul.mubr.f32.gmra.mrb[0].mxu0 %v2167
  %v2269 = vpop.f32.mrb[0].mxu0
  %v2270 = vadd.f32 0.0, %v2269
  %v2271 = vpop.f32.mrb[0].mxu0
  %2272 = vmatprep.mubr.f32.mxu0 0.0
  %2273 = vmatmul.mubr.f32.gmra.mrb[0].mxu0 %v2170
  %v2274 = vpop.f32.mrb[0].mxu0
  %v2275 = vadd.f32 0.0, %v2274
  %v2276 = vpop.f32.mrb[0].mxu0
  %2277 = vmatprep.mubr.f32.mxu0 0.0
  %2278 = vmatmul.mubr.f32.gmra.mrb[0].mxu0 %v2173
  %v2279 = vpop.f32.mrb[0].mxu0
  %v2280 = vadd.f32 0.0, %v2279
  %v2281 = vpop.f32.mrb[0].mxu0
  %2282 = vdwg.mxu0
  %v2284 = vsel %vm235, %v2134, 0
  %v2287 = vsel %vm235, %v2135, 0
  %v2290 = vsel %vm235, %v2136, 0
  %v2293 = vsel %vm235, %v2137, 0
  %v2296 = vsel %vm235, %v2138, 0
  %v2299 = vsel %vm235, %v2139, 0
  %v2302 = vsel %vm235, %v2140, 0
  %v2305 = vsel %vm235, %v2141, 0
  %v2308 = vsel %vm242, %v577, 0
  %2310 = vmatprep.subr.mxu0 0.0
  %2311 = vmatpush1.msra.mxu0 %v576
  %2312 = vmatprep.subr.mxu0 0.0
  %2313 = vmatpush1.msra.mxu0 %v2308
  %2314 = vmatprep.subr.mxu0 0.0
  %2315 = vmatpush1.msra.mxu0 0.0
  %2316 = vmatprep.subr.mxu0 0.0
  %2317 = vmatpush1.msra.mxu0 0.0
  %2318 = vmatprep.subr.mxu0 0.0
  %2319 = vmatpush1.msra.mxu0 0.0
  %2320 = vmatprep.subr.mxu0 0.0
  %2321 = vmatpush1.msra.mxu0 0.0
  %2322 = vmatprep.subr.mxu0 0.0
  %2323 = vmatpush1.msra.mxu0 0.0
  %2324 = vmatprep.subr.mxu0 0.0
  %2325 = vmatpush1.msra.mxu0 0.0
  %2326 = vmatprep.subr.mxu0 0.0
  %2327 = vmatpush1.msra.mxu0 0.0
  %2328 = vmatprep.subr.mxu0 0.0
  %2329 = vmatpush1.msra.mxu0 0.0
  %2330 = vmatprep.subr.mxu0 0.0
  %2331 = vmatpush1.msra.mxu0 0.0
  %2332 = vmatprep.subr.mxu0 0.0
  %2333 = vmatpush1.msra.mxu0 0.0
  %2334 = vmatprep.subr.mxu0 0.0
  %2335 = vmatpush1.msra.mxu0 0.0
  %2336 = vmatprep.subr.mxu0 0.0
  %2337 = vmatpush1.msra.mxu0 0.0
  %2338 = vmatprep.subr.mxu0 0.0
  %2339 = vmatpush1.msra.mxu0 0.0
  %2340 = vmatprep.subr.mxu0 0.0
  %2341 = vmatpush1.msra.mxu0 0.0
  %2342 = vmatprep.subr.mxu0 0.0
  %2343 = vmatpush1.msra.mxu0 0.0
  %2344 = vmatprep.subr.mxu0 0.0
  %2345 = vmatpush1.msra.mxu0 0.0
  %2346 = vmatprep.subr.mxu0 0.0
  %2347 = vmatpush1.msra.mxu0 0.0
  %2348 = vmatprep.subr.mxu0 0.0
  %2349 = vmatpush1.msra.mxu0 0.0
  %2350 = vmatprep.subr.mxu0 0.0
  %2351 = vmatpush1.msra.mxu0 0.0
  %2352 = vmatprep.subr.mxu0 0.0
  %2353 = vmatpush1.msra.mxu0 0.0
  %2354 = vmatprep.subr.mxu0 0.0
  %2355 = vmatpush1.msra.mxu0 0.0
  %2356 = vmatprep.subr.mxu0 0.0
  %2357 = vmatpush1.msra.mxu0 0.0
  %2358 = vmatprep.subr.mxu0 0.0
  %2359 = vmatpush1.msra.mxu0 0.0
  %2360 = vmatprep.subr.mxu0 0.0
  %2361 = vmatpush1.msra.mxu0 0.0
  %2362 = vmatprep.subr.mxu0 0.0
  %2363 = vmatpush1.msra.mxu0 0.0
  %2364 = vmatprep.subr.mxu0 0.0
  %2365 = vmatpush1.msra.mxu0 0.0
  %2366 = vmatprep.subr.mxu0 0.0
  %2367 = vmatpush1.msra.mxu0 0.0
  %2368 = vmatprep.subr.mxu0 0.0
  %2369 = vmatpush1.msra.mxu0 0.0
  %2370 = vmatprep.subr.mxu0 0.0
  %2371 = vmatpush1.msra.mxu0 0.0
  %2372 = vmatprep.subr.mxu0 0.0
  %2373 = vmatpush1.msra.mxu0 0.0
  %2374 = vmatprep.mubr.f32.mxu0 0.0
  %2375 = vmatmul.mubr.f32.gmra.mrb[0].mxu0 %v2284
  %v2376 = vpop.f32.mrb[0].mxu0
  %v2377 = vadd.f32 %v2245, %v2376
  %v2378 = vpop.f32.mrb[0].mxu0
  %2379 = vmatprep.mubr.f32.mxu0 0.0
  %2380 = vmatmul.mubr.f32.gmra.mrb[0].mxu0 %v2287
  %v2381 = vpop.f32.mrb[0].mxu0
  %v2382 = vadd.f32 %v2250, %v2381
  %v2383 = vpop.f32.mrb[0].mxu0
  %2384 = vmatprep.mubr.f32.mxu0 0.0
  %2385 = vmatmul.mubr.f32.gmra.mrb[0].mxu0 %v2290
  %v2386 = vpop.f32.mrb[0].mxu0
  %v2387 = vadd.f32 %v2255, %v2386
  %v2388 = vpop.f32.mrb[0].mxu0
  %2389 = vmatprep.mubr.f32.mxu0 0.0
  %2390 = vmatmul.mubr.f32.gmra.mrb[0].mxu0 %v2293
  %v2391 = vpop.f32.mrb[0].mxu0
  %v2392 = vadd.f32 %v2260, %v2391
  %v2393 = vpop.f32.mrb[0].mxu0
  %2394 = vmatprep.mubr.f32.mxu0 0.0
  %2395 = vmatmul.mubr.f32.gmra.mrb[0].mxu0 %v2296
  %v2396 = vpop.f32.mrb[0].mxu0
  %v2397 = vadd.f32 %v2265, %v2396
  %v2398 = vpop.f32.mrb[0].mxu0
  %2399 = vmatprep.mubr.f32.mxu0 0.0
  %2400 = vmatmul.mubr.f32.gmra.mrb[0].mxu0 %v2299
  %v2401 = vpop.f32.mrb[0].mxu0
  %v2402 = vadd.f32 %v2270, %v2401
  %v2403 = vpop.f32.mrb[0].mxu0
  %2404 = vmatprep.mubr.f32.mxu0 0.0
  %2405 = vmatmul.mubr.f32.gmra.mrb[0].mxu0 %v2302
  %v2406 = vpop.f32.mrb[0].mxu0
  %v2407 = vadd.f32 %v2275, %v2406
  %v2408 = vpop.f32.mrb[0].mxu0
  %2409 = vmatprep.mubr.f32.mxu0 0.0
  %2410 = vmatmul.mubr.f32.gmra.mrb[0].mxu0 %v2305
  %v2411 = vpop.f32.mrb[0].mxu0
  %v2412 = vadd.f32 %v2280, %v2411
  %v2413 = vpop.f32.mrb[0].mxu0
  %2414 = vdwg.mxu0
  %s2415 = scalar_lea.vmem %s13, 128
  %v2416 = vld [vmem:[%s2415] sm:$0xff]
  %v2417 = vld [vmem:[%s2415 + $0x8] sm:$0xff]
  %v2418 = vld [vmem:[%s2415 + $0x10] sm:$0xff]
  %v2419 = vld [vmem:[%s2415 + $0x18] sm:$0xff]
  %v2420 = vld [vmem:[%s2415 + $0x20] sm:$0xff]
  %v2421 = vld [vmem:[%s2415 + $0x28] sm:$0xff]
  %v2422 = vld [vmem:[%s2415 + $0x30] sm:$0xff]
  %v2423 = vld [vmem:[%s2415 + $0x38] sm:$0xff]
  %v2425 = vsel %vm235, %v2416, 0
  %v2428 = vsel %vm235, %v2417, 0
  %v2431 = vsel %vm235, %v2418, 0
  %v2434 = vsel %vm235, %v2419, 0
  %v2437 = vsel %vm235, %v2420, 0
  %v2440 = vsel %vm235, %v2421, 0
  %v2443 = vsel %vm235, %v2422, 0
  %v2446 = vsel %vm235, %v2423, 0
  %v2449 = vsel %vm242, %v2133, 0
  %2451 = vmatprep.subr.mxu0 0.0
  %2452 = vmatpush1.msra.mxu0 %v2132
  %2453 = vmatprep.subr.mxu0 0.0
  %2454 = vmatpush1.msra.mxu0 %v2449
  %2455 = vmatprep.subr.mxu0 0.0
  %2456 = vmatpush1.msra.mxu0 0.0
  %2457 = vmatprep.subr.mxu0 0.0
  %2458 = vmatpush1.msra.mxu0 0.0
  %2459 = vmatprep.subr.mxu0 0.0
  %2460 = vmatpush1.msra.mxu0 0.0
  %2461 = vmatprep.subr.mxu0 0.0
  %2462 = vmatpush1.msra.mxu0 0.0
  %2463 = vmatprep.subr.mxu0 0.0
  %2464 = vmatpush1.msra.mxu0 0.0
  %2465 = vmatprep.subr.mxu0 0.0
  %2466 = vmatpush1.msra.mxu0 0.0
  %2467 = vmatprep.subr.mxu0 0.0
  %2468 = vmatpush1.msra.mxu0 0.0
  %2469 = vmatprep.subr.mxu0 0.0
  %2470 = vmatpush1.msra.mxu0 0.0
  %2471 = vmatprep.subr.mxu0 0.0
  %2472 = vmatpush1.msra.mxu0 0.0
  %2473 = vmatprep.subr.mxu0 0.0
  %2474 = vmatpush1.msra.mxu0 0.0
  %2475 = vmatprep.subr.mxu0 0.0
  %2476 = vmatpush1.msra.mxu0 0.0
  %2477 = vmatprep.subr.mxu0 0.0
  %2478 = vmatpush1.msra.mxu0 0.0
  %2479 = vmatprep.subr.mxu0 0.0
  %2480 = vmatpush1.msra.mxu0 0.0
  %2481 = vmatprep.subr.mxu0 0.0
  %2482 = vmatpush1.msra.mxu0 0.0
  %2483 = vmatprep.subr.mxu0 0.0
  %2484 = vmatpush1.msra.mxu0 0.0
  %2485 = vmatprep.subr.mxu0 0.0
  %2486 = vmatpush1.msra.mxu0 0.0
  %2487 = vmatprep.subr.mxu0 0.0
  %2488 = vmatpush1.msra.mxu0 0.0
  %2489 = vmatprep.subr.mxu0 0.0
  %2490 = vmatpush1.msra.mxu0 0.0
  %2491 = vmatprep.subr.mxu0 0.0
  %2492 = vmatpush1.msra.mxu0 0.0
  %2493 = vmatprep.subr.mxu0 0.0
  %2494 = vmatpush1.msra.mxu0 0.0
  %2495 = vmatprep.subr.mxu0 0.0
  %2496 = vmatpush1.msra.mxu0 0.0
  %2497 = vmatprep.subr.mxu0 0.0
  %2498 = vmatpush1.msra.mxu0 0.0
  %2499 = vmatprep.subr.mxu0 0.0
  %2500 = vmatpush1.msra.mxu0 0.0
  %2501 = vmatprep.subr.mxu0 0.0
  %2502 = vmatpush1.msra.mxu0 0.0
  %2503 = vmatprep.subr.mxu0 0.0
  %2504 = vmatpush1.msra.mxu0 0.0
  %2505 = vmatprep.subr.mxu0 0.0
  %2506 = vmatpush1.msra.mxu0 0.0
  %2507 = vmatprep.subr.mxu0 0.0
  %2508 = vmatpush1.msra.mxu0 0.0
  %2509 = vmatprep.subr.mxu0 0.0
  %2510 = vmatpush1.msra.mxu0 0.0
  %2511 = vmatprep.subr.mxu0 0.0
  %2512 = vmatpush1.msra.mxu0 0.0
  %2513 = vmatprep.subr.mxu0 0.0
  %2514 = vmatpush1.msra.mxu0 0.0
  %2515 = vmatprep.mubr.f32.mxu0 0.0
  %2516 = vmatmul.mubr.f32.gmra.mrb[0].mxu0 %v2425
  %v2517 = vpop.f32.mrb[0].mxu0
  %v2518 = vadd.f32 0.0, %v2517
  %v2519 = vpop.f32.mrb[0].mxu0
  %2520 = vmatprep.mubr.f32.mxu0 0.0
  %2521 = vmatmul.mubr.f32.gmra.mrb[0].mxu0 %v2428
  %v2522 = vpop.f32.mrb[0].mxu0
  %v2523 = vadd.f32 0.0, %v2522
  %v2524 = vpop.f32.mrb[0].mxu0
  %2525 = vmatprep.mubr.f32.mxu0 0.0
  %2526 = vmatmul.mubr.f32.gmra.mrb[0].mxu0 %v2431
  %v2527 = vpop.f32.mrb[0].mxu0
  %v2528 = vadd.f32 0.0, %v2527
  %v2529 = vpop.f32.mrb[0].mxu0
  %2530 = vmatprep.mubr.f32.mxu0 0.0
  %2531 = vmatmul.mubr.f32.gmra.mrb[0].mxu0 %v2434
  %v2532 = vpop.f32.mrb[0].mxu0
  %v2533 = vadd.f32 0.0, %v2532
  %v2534 = vpop.f32.mrb[0].mxu0
  %2535 = vmatprep.mubr.f32.mxu0 0.0
  %2536 = vmatmul.mubr.f32.gmra.mrb[0].mxu0 %v2437
  %v2537 = vpop.f32.mrb[0].mxu0
  %v2538 = vadd.f32 0.0, %v2537
  %v2539 = vpop.f32.mrb[0].mxu0
  %2540 = vmatprep.mubr.f32.mxu0 0.0
  %2541 = vmatmul.mubr.f32.gmra.mrb[0].mxu0 %v2440
  %v2542 = vpop.f32.mrb[0].mxu0
  %v2543 = vadd.f32 0.0, %v2542
  %v2544 = vpop.f32.mrb[0].mxu0
  %2545 = vmatprep.mubr.f32.mxu0 0.0
  %2546 = vmatmul.mubr.f32.gmra.mrb[0].mxu0 %v2443
  %v2547 = vpop.f32.mrb[0].mxu0
  %v2548 = vadd.f32 0.0, %v2547
  %v2549 = vpop.f32.mrb[0].mxu0
  %2550 = vmatprep.mubr.f32.mxu0 0.0
  %2551 = vmatmul.mubr.f32.gmra.mrb[0].mxu0 %v2446
  %v2552 = vpop.f32.mrb[0].mxu0
  %v2553 = vadd.f32 0.0, %v2552
  %v2554 = vpop.f32.mrb[0].mxu0
  %2555 = vdwg.mxu0
  %v2556 = vadd.f32 %v2377, %v2518
  %v2557 = vadd.f32 %v2382, %v2523
  %v2558 = vadd.f32 %v2387, %v2528
  %v2559 = vadd.f32 %v2392, %v2533
  %v2560 = vadd.f32 %v2397, %v2538
  %v2561 = vadd.f32 %v2402, %v2543
  %v2562 = vadd.f32 %v2407, %v2548
  %v2563 = vadd.f32 %v2412, %v2553
  %v2564 = vld [vmem:[%s14] sm:$0xff]
  %v2565 = vld [vmem:[%s14 + $0x8] sm:$0xff]
  %v2566 = vld [vmem:[%s14 + $0x10] sm:$0xff]
  %v2567 = vld [vmem:[%s14 + $0x18] sm:$0xff]
  %v2568 = vld [vmem:[%s14 + $0x20] sm:$0xff]
  %v2569 = vld [vmem:[%s14 + $0x28] sm:$0xff]
  %v2570 = vld [vmem:[%s14 + $0x30] sm:$0xff]
  %v2571 = vld [vmem:[%s14 + $0x38] sm:$0xff]
  %2573 = vset.pattern.permute.xlu0 0
  %2574 = vperm.xlu0 %2573, %v2564
  %v2575 = vpop.permute.xlu0 %2574
  %2578 = vset.pattern.permute.xlu0 0
  %2579 = vperm.xlu0 %2578, %v2565
  %v2580 = vpop.permute.xlu0 %2579
  %2583 = vset.pattern.permute.xlu0 0
  %2584 = vperm.xlu0 %2583, %v2566
  %v2585 = vpop.permute.xlu0 %2584
  %2588 = vset.pattern.permute.xlu0 0
  %2589 = vperm.xlu0 %2588, %v2567
  %v2590 = vpop.permute.xlu0 %2589
  %2593 = vset.pattern.permute.xlu0 0
  %2594 = vperm.xlu0 %2593, %v2568
  %v2595 = vpop.permute.xlu0 %2594
  %2598 = vset.pattern.permute.xlu0 0
  %2599 = vperm.xlu0 %2598, %v2569
  %v2600 = vpop.permute.xlu0 %2599
  %2603 = vset.pattern.permute.xlu0 0
  %2604 = vperm.xlu0 %2603, %v2570
  %v2605 = vpop.permute.xlu0 %2604
  %2608 = vset.pattern.permute.xlu0 0
  %2609 = vperm.xlu0 %2608, %v2571
  %v2610 = vpop.permute.xlu0 %2609
  %v2612 = vadd.f32 %v2556, %v2575
  %v2613 = vadd.f32 %v2557, %v2580
  %v2614 = vadd.f32 %v2558, %v2585
  %v2615 = vadd.f32 %v2559, %v2590
  %v2616 = vadd.f32 %v2560, %v2595
  %v2617 = vadd.f32 %v2561, %v2600
  %v2618 = vadd.f32 %v2562, %v2605
  %v2619 = vadd.f32 %v2563, %v2610
  %v2620 = vld [vmem:[%s15] sm:$0xff]
  %v2621 = vld [vmem:[%s15 + $0x8] sm:$0xff]
  %v2622 = vld [vmem:[%s15 + $0x10] sm:$0xff]
  %v2623 = vld [vmem:[%s15 + $0x18] sm:$0xff]
  %v2624 = vld [vmem:[%s16] sm:$0xff]
  %v2625 = vld [vmem:[%s16 + $0x8] sm:$0xff]
  %v2626 = vld [vmem:[%s16 + $0x10] sm:$0xff]
  %v2627 = vld [vmem:[%s16 + $0x18] sm:$0xff]
  %2629 = vset.pattern.permute.xlu0 0
  %2630 = vperm.xlu0 %2629, %v2624
  %v2631 = vpop.permute.xlu0 %2630
  %2634 = vset.pattern.permute.xlu0 0
  %2635 = vperm.xlu0 %2634, %v2625
  %v2636 = vpop.permute.xlu0 %2635
  %2639 = vset.pattern.permute.xlu0 0
  %2640 = vperm.xlu0 %2639, %v2626
  %v2641 = vpop.permute.xlu0 %2640
  %2644 = vset.pattern.permute.xlu0 0
  %2645 = vperm.xlu0 %2644, %v2627
  %v2646 = vpop.permute.xlu0 %2645
  %vm2648 = vcmask 523264
  %v2650 = vsel %vm2648, %v2620, 0
  %v2653 = vsel %vm2648, %v2621, 0
  %v2656 = vsel %vm2648, %v2622, 0
  %v2659 = vsel %vm2648, %v2623, 0
  %2661 = vmatprep.subr.mxu0 0.0
  %2662 = vmatpush1.msra.mxu0 %v2612
  %2663 = vmatprep.subr.mxu0 0.0
  %2664 = vmatpush1.msra.mxu0 %v2613
  %2665 = vmatprep.subr.mxu0 0.0
  %2666 = vmatpush1.msra.mxu0 %v2614
  %2667 = vmatprep.subr.mxu0 0.0
  %2668 = vmatpush1.msra.mxu0 %v2615
  %2669 = vmatprep.subr.mxu0 0.0
  %2670 = vmatpush1.msra.mxu0 %v2616
  %2671 = vmatprep.subr.mxu0 0.0
  %2672 = vmatpush1.msra.mxu0 %v2617
  %2673 = vmatprep.subr.mxu0 0.0
  %2674 = vmatpush1.msra.mxu0 %v2618
  %2675 = vmatprep.subr.mxu0 0.0
  %2676 = vmatpush1.msra.mxu0 %v2619
  %2677 = vmatprep.subr.mxu0 0.0
  %2678 = vmatpush1.msra.mxu0 0.0
  %2679 = vmatprep.subr.mxu0 0.0
  %2680 = vmatpush1.msra.mxu0 0.0
  %2681 = vmatprep.subr.mxu0 0.0
  %2682 = vmatpush1.msra.mxu0 0.0
  %2683 = vmatprep.subr.mxu0 0.0
  %2684 = vmatpush1.msra.mxu0 0.0
  %2685 = vmatprep.subr.mxu0 0.0
  %2686 = vmatpush1.msra.mxu0 0.0
  %2687 = vmatprep.subr.mxu0 0.0
  %2688 = vmatpush1.msra.mxu0 0.0
  %2689 = vmatprep.subr.mxu0 0.0
  %2690 = vmatpush1.msra.mxu0 0.0
  %2691 = vmatprep.subr.mxu0 0.0
  %2692 = vmatpush1.msra.mxu0 0.0
  %2693 = vmatprep.subr.mxu0 0.0
  %2694 = vmatpush1.msra.mxu0 0.0
  %2695 = vmatprep.subr.mxu0 0.0
  %2696 = vmatpush1.msra.mxu0 0.0
  %2697 = vmatprep.subr.mxu0 0.0
  %2698 = vmatpush1.msra.mxu0 0.0
  %2699 = vmatprep.subr.mxu0 0.0
  %2700 = vmatpush1.msra.mxu0 0.0
  %2701 = vmatprep.subr.mxu0 0.0
  %2702 = vmatpush1.msra.mxu0 0.0
  %2703 = vmatprep.subr.mxu0 0.0
  %2704 = vmatpush1.msra.mxu0 0.0
  %2705 = vmatprep.subr.mxu0 0.0
  %2706 = vmatpush1.msra.mxu0 0.0
  %2707 = vmatprep.subr.mxu0 0.0
  %2708 = vmatpush1.msra.mxu0 0.0
  %2709 = vmatprep.subr.mxu0 0.0
  %2710 = vmatpush1.msra.mxu0 0.0
  %2711 = vmatprep.subr.mxu0 0.0
  %2712 = vmatpush1.msra.mxu0 0.0
  %2713 = vmatprep.subr.mxu0 0.0
  %2714 = vmatpush1.msra.mxu0 0.0
  %2715 = vmatprep.subr.mxu0 0.0
  %2716 = vmatpush1.msra.mxu0 0.0
  %2717 = vmatprep.subr.mxu0 0.0
  %2718 = vmatpush1.msra.mxu0 0.0
  %2719 = vmatprep.subr.mxu0 0.0
  %2720 = vmatpush1.msra.mxu0 0.0
  %2721 = vmatprep.subr.mxu0 0.0
  %2722 = vmatpush1.msra.mxu0 0.0
  %2723 = vmatprep.subr.mxu0 0.0
  %2724 = vmatpush1.msra.mxu0 0.0
  %2725 = vmatprep.mubr.f32.mxu0 0.0
  %2726 = vmatmul.mubr.f32.gmra.mrb[0].mxu0 %v2650
  %v2727 = vpop.f32.mrb[0].mxu0
  %v2728 = vadd.f32 %v2631, %v2727
  %v2729 = vpop.f32.mrb[0].mxu0
  %2730 = vmatprep.mubr.f32.mxu0 0.0
  %2731 = vmatmul.mubr.f32.gmra.mrb[0].mxu0 %v2653
  %v2732 = vpop.f32.mrb[0].mxu0
  %v2733 = vadd.f32 %v2636, %v2732
  %v2734 = vpop.f32.mrb[0].mxu0
  %2735 = vmatprep.mubr.f32.mxu0 0.0
  %2736 = vmatmul.mubr.f32.gmra.mrb[0].mxu0 %v2656
  %v2737 = vpop.f32.mrb[0].mxu0
  %v2738 = vadd.f32 %v2641, %v2737
  %v2739 = vpop.f32.mrb[0].mxu0
  %2740 = vmatprep.mubr.f32.mxu0 0.0
  %2741 = vmatmul.mubr.f32.gmra.mrb[0].mxu0 %v2659
  %v2742 = vpop.f32.mrb[0].mxu0
  %v2743 = vadd.f32 %v2646, %v2742
  %v2744 = vpop.f32.mrb[0].mxu0
  %2745 = vdwg.mxu0
  %vm2746 = vcmp.ge.f32.partialorder %v2728, 0.0
  %vm2747 = vcmp.ge.f32.partialorder %v2733, 0.0
  %vm2748 = vcmp.ge.f32.partialorder %v2738, 0.0
  %vm2749 = vcmp.ge.f32.partialorder %v2743, 0.0
  %v2750 = vmul.f32 %v2728, 0.01
  %v2751 = vmul.f32 %v2733, 0.01
  %v2752 = vmul.f32 %v2738, 0.01
  %v2753 = vmul.f32 %v2743, 0.01
  %v2754 = vsel %vm2746, %v2728, %v2750
  %v2755 = vsel %vm2747, %v2733, %v2751
  %v2756 = vsel %vm2748, %v2738, %v2752
  %v2757 = vsel %vm2749, %v2743, %v2753
  %v2758 = vld [vmem:[%s17] sm:$0x1]
  %v2759 = vld [vmem:[#allocation2] sm:$0x1]
  %2761 = vset.pattern.permute.xlu0 0
  %2762 = vperm.xlu0 %2761, %v2759
  %v2763 = vpop.permute.xlu0 %2762
  %v2765 = vlaneseq
  %v2766 = vshrl.u32 %v2765, 7
  %v2767 = vsub.s32 0, %v2766
  %v2768 = vrot.slane %v2763, %v2767
  %vm2769 = vcmask 261120
  %v2771 = vsel %vm2769, %v2758, 0
  %2773 = vmatprep.subr.mxu0 0.0
  %2774 = vmatpush1.msra.mxu0 %v2754
  %2775 = vmatprep.subr.mxu0 0.0
  %2776 = vmatpush1.msra.mxu0 %v2755
  %2777 = vmatprep.subr.mxu0 0.0
  %2778 = vmatpush1.msra.mxu0 %v2756
  %2779 = vmatprep.subr.mxu0 0.0
  %2780 = vmatpush1.msra.mxu0 %v2757
  %2781 = vmatprep.subr.mxu0 0.0
  %2782 = vmatpush1.msra.mxu0 0.0
  %2783 = vmatprep.subr.mxu0 0.0
  %2784 = vmatpush1.msra.mxu0 0.0
  %2785 = vmatprep.subr.mxu0 0.0
  %2786 = vmatpush1.msra.mxu0 0.0
  %2787 = vmatprep.subr.mxu0 0.0
  %2788 = vmatpush1.msra.mxu0 0.0
  %2789 = vmatprep.subr.mxu0 0.0
  %2790 = vmatpush1.msra.mxu0 0.0
  %2791 = vmatprep.subr.mxu0 0.0
  %2792 = vmatpush1.msra.mxu0 0.0
  %2793 = vmatprep.subr.mxu0 0.0
  %2794 = vmatpush1.msra.mxu0 0.0
  %2795 = vmatprep.subr.mxu0 0.0
  %2796 = vmatpush1.msra.mxu0 0.0
  %2797 = vmatprep.subr.mxu0 0.0
  %2798 = vmatpush1.msra.mxu0 0.0
  %2799 = vmatprep.subr.mxu0 0.0
  %2800 = vmatpush1.msra.mxu0 0.0
  %2801 = vmatprep.subr.mxu0 0.0
  %2802 = vmatpush1.msra.mxu0 0.0
  %2803 = vmatprep.subr.mxu0 0.0
  %2804 = vmatpush1.msra.mxu0 0.0
  %2805 = vmatprep.subr.mxu0 0.0
  %2806 = vmatpush1.msra.mxu0 0.0
  %2807 = vmatprep.subr.mxu0 0.0
  %2808 = vmatpush1.msra.mxu0 0.0
  %2809 = vmatprep.subr.mxu0 0.0
  %2810 = vmatpush1.msra.mxu0 0.0
  %2811 = vmatprep.subr.mxu0 0.0
  %2812 = vmatpush1.msra.mxu0 0.0
  %2813 = vmatprep.subr.mxu0 0.0
  %2814 = vmatpush1.msra.mxu0 0.0
  %2815 = vmatprep.subr.mxu0 0.0
  %2816 = vmatpush1.msra.mxu0 0.0
  %2817 = vmatprep.subr.mxu0 0.0
  %2818 = vmatpush1.msra.mxu0 0.0
  %2819 = vmatprep.subr.mxu0 0.0
  %2820 = vmatpush1.msra.mxu0 0.0
  %2821 = vmatprep.subr.mxu0 0.0
  %2822 = vmatpush1.msra.mxu0 0.0
  %2823 = vmatprep.subr.mxu0 0.0
  %2824 = vmatpush1.msra.mxu0 0.0
  %2825 = vmatprep.subr.mxu0 0.0
  %2826 = vmatpush1.msra.mxu0 0.0
  %2827 = vmatprep.subr.mxu0 0.0
  %2828 = vmatpush1.msra.mxu0 0.0
  %2829 = vmatprep.subr.mxu0 0.0
  %2830 = vmatpush1.msra.mxu0 0.0
  %2831 = vmatprep.subr.mxu0 0.0
  %2832 = vmatpush1.msra.mxu0 0.0
  %2833 = vmatprep.subr.mxu0 0.0
  %2834 = vmatpush1.msra.mxu0 0.0
  %2835 = vmatprep.subr.mxu0 0.0
  %2836 = vmatpush1.msra.mxu0 0.0
  %2837 = vmatprep.mubr.f32.mxu0 0.0
  %2838 = vmatmul.mubr.f32.gmra.mrb[0].mxu0 %v2771
  %v2839 = vpop.f32.mrb[0].mxu0
  %v2840 = vadd.f32 %v2768, %v2839
  %v2841 = vpop.f32.mrb[0].mxu0
  %2842 = vdwg.mxu0
  %vm2843 = vcmask 15360
  %2844 = vst.msk [vmem:[%s19] sm:$0xff] %vm2843, %v576
  %vm2845 = vcmask 13312
  %2846 = vst.msk [vmem:[%s19 + $0x8] sm:$0x3f] %vm2845, %v577
  %2847 = vst.msk [vmem:[%s19 + $0x10] sm:$0xff] %vm2843, %v1239
  %2848 = vst.msk [vmem:[%s19 + $0x18] sm:$0x3f] %vm2845, %v1240
  %2849 = vst.msk [vmem:[%s19 + $0x20] sm:$0xff] %vm2843, %v2132
  %2850 = vst.msk [vmem:[%s19 + $0x28] sm:$0x3f] %vm2845, %v2133
  %2851 = vst.msk [vmem:[%s19 + $0x30] sm:$0xff] %vm2843, %v2612
  %2852 = vst.msk [vmem:[%s19 + $0x38] sm:$0xff] %vm2843, %v2613
  %2853 = vst.msk [vmem:[%s19 + $0x40] sm:$0xff] %vm2843, %v2614
  %2854 = vst.msk [vmem:[%s19 + $0x48] sm:$0xff] %vm2843, %v2615
  %2855 = vst.msk [vmem:[%s19 + $0x50] sm:$0xff] %vm2843, %v2616
  %2856 = vst.msk [vmem:[%s19 + $0x58] sm:$0xff] %vm2843, %v2617
  %2857 = vst.msk [vmem:[%s19 + $0x60] sm:$0xff] %vm2843, %v2618
  %2858 = vst.msk [vmem:[%s19 + $0x68] sm:$0xff] %vm2843, %v2619
  %vm2859 = vcmask 8192
  %2860 = vst.msk [vmem:[%s19 + $0x70] sm:$0x1] %vm2859, %v2840
  // Predicated region
  $region78: #{forward_pallas.1} parent=0 // pred_check
    _
  $region79: #{forward_pallas.1} parent=0 // pred_check_branch
    %2862 = sbr.rel (0) target = $region81
  $region80: #{forward_pallas.1} parent=0 // pred_region
    _
  $region81: #{forward_pallas.1} parent=0 // pred_fallthru
    _
  // Predicated region
  $region82: #{forward_pallas.1} parent=0 // pred_check
    _
  $region83: #{forward_pallas.1} parent=0 // pred_check_branch
    %2864 = sbr.rel (0) target = $region85
  $region84: #{forward_pallas.1} parent=0 // pred_region
    _
  $region85: #{forward_pallas.1} parent=0 // pred_fallthru
    _

</llo_original>
